<compile_context>
chip_gen: v6e
topology: v6e:2x2x1
jax: 0.10.0
libtpu: 0.0.40
codegen_flags: <defaults>
</compile_context>

<pallas_src>
import jax
import jax.numpy as jnp
from jax import lax
from jax.experimental import pallas as pl
from jax.experimental.pallas import tpu as pltpu


# ----------------------------------------------------------------------------
# Small-config analogue of ModelArgs: encoder_ch_mult=[1,1,2,2,4] -> 16x
# downsampling, codebook_embed_dim=8, l2-normalized codebook, beta=0.25.
# ----------------------------------------------------------------------------
PATCH = 16            # 2 ** (len(encoder_ch_mult) - 1)
Z_CHANNELS = 64       # (256 in the reference config; shrunk for the demo)
EMBED_DIM = 8         # codebook_embed_dim
CODEBOOK_SIZE = 1024  # (16384 in the reference config; shrunk for the demo)
K_CHUNK = 256         # codebook chunk for the running-argmax loop
BETA = 0.25           # commit_loss_beta
IN_CH = 3
P_IN = IN_CH * PATCH * PATCH   # 768 features per patch row
TILE_N = 256          # row tile: fills the v6e/v7x 256x256 MXU; use 128 on v5e


# ----------------------------------------------------------------------------
# Fused Pallas kernel: encoder+quant_conv -> VQ (running argmax over K chunks)
# -> folded (post_quant_conv+decoder) gather, all for one tile of rows.
# ----------------------------------------------------------------------------
def fused_vq_kernel(rows_ref, we_ref, be_ref, cbt_ref, dcb_ref, bd_ref,
                    out_ref, idx_ref, dmin_ref):
    """rows_ref : (tn, P_IN)            bf16  patchified input rows (streamed)
    we_ref   : (P_IN, D)              bf16  folded encoder @ quant_conv weight
    be_ref   : (1, D)                 f32   folded encoder bias
    cbt_ref  : (NCHUNK, D, KC)        bf16  L2-normalized codebook, transposed per chunk
    dcb_ref  : (NCHUNK, KC, P_IN)     bf16  decoded codebook  cb_n @ (pqc_w @ dec_w)
    bd_ref   : (1, P_IN)              f32   folded decoder bias
    out_ref  : (tn, P_IN)             bf16  reconstructed patch rows
    idx_ref  : (tn, 1)                i32   winning code index per row
    dmin_ref : (tn, 1)                f32   per-row ||z_q - z_n||^2  (= 2 - 2*max<z_n,e>)
    """
    tn = rows_ref.shape[0]
    num_chunks, _, kc = cbt_ref.shape

    # --- encoder + quant_conv (1x1 conv), folded into one bf16 matmul ---
    z = jnp.dot(rows_ref[...], we_ref[...], preferred_element_type=jnp.float32)
    z = z + be_ref[...]                                            # (tn, D) f32

    # --- VectorQuantizer (codebook_l2_norm=True) ---
    z_n = z * lax.rsqrt(jnp.sum(z * z, axis=1, keepdims=True) + 1e-12)
    z_nb = z_n.astype(jnp.bfloat16)                                # bf16 MXU operand

    bd = bd_ref[...]                                               # hoisted (1, P_IN)
    iota_kc = lax.broadcasted_iota(jnp.int32, (tn, kc), 1)

    def chunk_body(c, carry):
        run_max, run_idx = carry
        # After L2 norm, argmin ||z-e||^2 == argmax <z,e>.
        cross = jnp.dot(z_nb, cbt_ref[c], preferred_element_type=jnp.float32)  # (tn, kc)
        cmax = jnp.max(cross, axis=1, keepdims=True)                           # (tn, 1)
        # first index on ties inside the chunk (matches torch.argmin)
        local = jnp.min(jnp.where(cross >= cmax, iota_kc, kc),
                        axis=1, keepdims=True)                                 # (tn, 1) i32
        # decode candidate for this chunk's winner: one full-width bf16 matmul
        # against the folded (KC, P_IN) decoded-codebook chunk.
        onehot = (iota_kc == local).astype(jnp.bfloat16)                       # (tn, kc)
        cand = jnp.dot(onehot, dcb_ref[c], preferred_element_type=jnp.float32)
        cand = (cand + bd).astype(out_ref.dtype)                               # (tn, P_IN) bf16
        # strict '>' keeps the earlier chunk on exact cross-chunk ties
        better = cmax > run_max                                                # (tn, 1) bool
        out_ref[...] = jnp.where(better, cand, out_ref[...])
        run_idx = jnp.where(better, local + c * kc, run_idx)
        run_max = jnp.maximum(run_max, cmax)
        return run_max, run_idx

    init = (jnp.full((tn, 1), -jnp.inf, dtype=jnp.float32),   # chunk 0 always wins,
            jnp.zeros((tn, 1), dtype=jnp.int32))              # so out_ref needs no init
    run_max, run_idx = lax.fori_loop(0, num_chunks, chunk_body, init)

    idx_ref[...] = run_idx
    # per-row squared distance of the winner (both vectors unit-norm)
    dmin_ref[...] = jnp.maximum(2.0 - 2.0 * run_max, 0.0)


def fused_forward_rows(rows_bf16, we, be, cbt_chunks, dcb_chunks, bd, tn=TILE_N):
    """Run the fused kernel over all patch rows.

    Returns (dec_rows_bf16 (N, P_IN), indices (N,), per_row_sqdist (N,))."""
    n, p_in = rows_bf16.shape
    nchunk, emb, kc = cbt_chunks.shape
    assert n % tn == 0, f"N={n} must be a multiple of the row tile {tn}"
    num_tiles = n // tn

    dec_rows, idx_col, dmin_col = pl.pallas_call(
        fused_vq_kernel,
        out_shape=(
            jax.ShapeDtypeStruct((n, p_in), jnp.bfloat16),   # bf16 writeback stream
            jax.ShapeDtypeStruct((n, 1), jnp.int32),
            jax.ShapeDtypeStruct((n, 1), jnp.float32),
        ),
        grid=(num_tiles,),
        in_specs=[
            pl.BlockSpec((tn, p_in), lambda i: (i, 0)),          # streamed rows
            pl.BlockSpec((p_in, emb), lambda i: (0, 0)),         # resident weights
            pl.BlockSpec((1, emb), lambda i: (0, 0)),
            pl.BlockSpec((nchunk, emb, kc), lambda i: (0, 0, 0)),
            pl.BlockSpec((nchunk, kc, p_in), lambda i: (0, 0, 0)),
            pl.BlockSpec((1, p_in), lambda i: (0, 0)),
        ],
        out_specs=(
            pl.BlockSpec((tn, p_in), lambda i: (i, 0)),
            pl.BlockSpec((tn, 1), lambda i: (i, 0)),
            pl.BlockSpec((tn, 1), lambda i: (i, 0)),
        ),
        compiler_params=pltpu.CompilerParams(
            dimension_semantics=("parallel",)),
    )(rows_bf16, we, be, cbt_chunks, dcb_chunks, bd)

    return dec_rows, idx_col[:, 0], dmin_col[:, 0]


# ----------------------------------------------------------------------------
# Parameters & layout helpers (plain JAX, outside the kernel)
# ----------------------------------------------------------------------------
def init_params(key):
    ks = jax.random.split(key, 6)

    def lin(k, fan_in, fan_out):
        return jax.random.normal(k, (fan_in, fan_out), jnp.float32) * (fan_in ** -0.5)

    return {
        # TODO(synk): stand-in for the llamagen CNN Encoder (source not given).
        "enc_w": lin(ks[0], P_IN, Z_CHANNELS),
        "enc_b": jnp.zeros((Z_CHANNELS,), jnp.float32),
        # quant_conv = Conv2d(z_channels, codebook_embed_dim, 1)
        "qc_w": lin(ks[1], Z_CHANNELS, EMBED_DIM),
        "qc_b": jnp.zeros((EMBED_DIM,), jnp.float32),
        # VectorQuantizer embedding, uniform(-1/n_e, 1/n_e)
        "codebook": jax.random.uniform(
            ks[2], (CODEBOOK_SIZE, EMBED_DIM), jnp.float32,
            minval=-1.0 / CODEBOOK_SIZE, maxval=1.0 / CODEBOOK_SIZE),
        # post_quant_conv = Conv2d(codebook_embed_dim, z_channels, 1)
        "pqc_w": lin(ks[3], EMBED_DIM, Z_CHANNELS),
        "pqc_b": jnp.zeros((Z_CHANNELS,), jnp.float32),
        # TODO(synk): stand-in for the llamagen CNN Decoder (source not given).
        "dec_w": lin(ks[4], Z_CHANNELS, P_IN),
        "dec_b": jnp.zeros((P_IN,), jnp.float32),
    }


def patchify(x_nchw):
    """(B, C, H, W) -> (B*hh*ww, C*P*P) rows (per-patch HWC-flattened)."""
    B, C, H, W = x_nchw.shape
    hh, ww = H // PATCH, W // PATCH
    x = jnp.transpose(x_nchw, (0, 2, 3, 1))                   # NHWC
    x = x.reshape(B, hh, PATCH, ww, PATCH, C)
    x = jnp.transpose(x, (0, 1, 3, 2, 4, 5))                  # B hh ww P P C
    return x.reshape(B * hh * ww, PATCH * PATCH * C), (B, hh, ww, H, W)


def unpatchify(rows, meta):
    B, hh, ww, H, W = meta
    x = rows.reshape(B, hh, ww, PATCH, PATCH, IN_CH)
    x = jnp.transpose(x, (0, 5, 1, 3, 2, 4))                  # B C hh P ww P
    return x.reshape(B, IN_CH, H, W)


# ----------------------------------------------------------------------------
# VQModel forward
# ----------------------------------------------------------------------------
@jax.jit
def vq_model_forward(params, x):
    """Mirrors VQModel.forward: returns (dec, diff, indices)."""
    rows, meta = patchify(x)                                   # (N, 768) f32
    n = rows.shape[0]

    # Fold encoder@quant_conv and codebook@post_quant_conv@decoder offline.
    # (Valid only while the CNN stand-ins are pure linears.)
    we = jnp.dot(params["enc_w"], params["qc_w"])                          # (768, 8)
    be = (params["enc_b"] @ params["qc_w"] + params["qc_b"]).reshape(1, -1)
    wd = jnp.dot(params["pqc_w"], params["dec_w"])                         # (8, 768)
    bd = (params["pqc_b"] @ params["dec_w"] + params["dec_b"]).reshape(1, -1)

    # L2-normalize the codebook ONCE; chunk it over K for the running argmax.
    cb = params["codebook"]
    cb_n = cb * lax.rsqrt(jnp.sum(cb * cb, axis=1, keepdims=True) + 1e-12)
    nchunk = CODEBOOK_SIZE // K_CHUNK
    cbt_chunks = cb_n.reshape(nchunk, K_CHUNK, EMBED_DIM).transpose(0, 2, 1)  # (nc, D, KC)
    dcb_chunks = jnp.dot(cb_n, wd).reshape(nchunk, K_CHUNK, P_IN)             # decoded codebook

    dec_rows, indices, dmin = fused_forward_rows(
        rows.astype(jnp.bfloat16),             # bf16 MXU operands, f32 accumulation
        we.astype(jnp.bfloat16),
        be.astype(jnp.float32),
        cbt_chunks.astype(jnp.bfloat16),
        dcb_chunks.astype(jnp.bfloat16),
        bd.astype(jnp.float32),
    )

    # --- losses: mean((z_q - z_n)^2) over (N, D) elements, beta-scaled commit ---
    mse = jnp.sum(dmin) / jnp.float32(n * EMBED_DIM)
    vq_loss = mse                              # vq_loss_ratio = 1.0
    commit_loss = BETA * mse
    entropy_loss = jnp.float32(0.0)            # entropy_loss_ratio = 0.0
    codebook_usage = jnp.float32(0.0)

    dec = unpatchify(dec_rows.astype(jnp.float32), meta)       # back to NCHW, f32
    diff = (vq_loss, commit_loss, entropy_loss, codebook_usage)
    return dec, diff, indices


if __name__ == "__main__":
    key = jax.random.PRNGKey(0)
    k_param, k_x = jax.random.split(key)
    params = init_params(k_param)

    # 256x256 (the reference image_size) -> N = 2 * 16 * 16 = 512 patch rows,
    # i.e. 2 grid steps of 256 rows each.
    B, H, W = 2, 256, 256
    x = jax.random.normal(k_x, (B, IN_CH, H, W), jnp.float32)  # NCHW like PyTorch

    dec, diff, indices = vq_model_forward(params, x)
    jax.block_until_ready(dec)
    jax.block_until_ready(diff)
    jax.block_until_ready(indices)

    assert dec.shape == (B, IN_CH, H, W)
    assert indices.shape == (B * (H // PATCH) * (W // PATCH),)
    assert indices.dtype == jnp.int32
    assert bool(jnp.all(indices >= 0)) and bool(jnp.all(indices < CODEBOOK_SIZE))
    assert bool(jnp.isfinite(diff[0])) and bool(jnp.isfinite(jnp.sum(dec)))
    print("KERNEL_OK")
</pallas_src>

<mosaic_0001>
module attributes {stable_mosaic.version = 11 : i64} {
  func.func @fused_vq_kernel(%arg0: i32, %arg1: memref<256x768xbf16, #tpu.memory_space<vmem>>, %arg2: memref<768x8xbf16, #tpu.memory_space<vmem>>, %arg3: memref<1x8xf32, #tpu.memory_space<vmem>>, %arg4: memref<4x8x256xbf16, #tpu.memory_space<vmem>>, %arg5: memref<4x256x768xbf16, #tpu.memory_space<vmem>>, %arg6: memref<1x768xf32, #tpu.memory_space<vmem>>, %arg7: memref<256x768xbf16, #tpu.memory_space<vmem>>, %arg8: memref<256x1xi32, #tpu.memory_space<vmem>>, %arg9: memref<256x1xf32, #tpu.memory_space<vmem>>) attributes {dimension_semantics = [#tpu.dimension_semantics<parallel>], iteration_bounds = array<i64: 2>, scalar_prefetch = 0 : i64, scratch_operands = 0 : i64, tpu.core_type = #tpu.core_type<tc>, window_params = [{transform_indices = @transform_0, window_bounds = array<i64: 256, 768>}, {pipeline_mode = #tpu.pipeline_mode<synchronous>, transform_indices = @transform_1, window_bounds = array<i64: 768, 8>}, {pipeline_mode = #tpu.pipeline_mode<synchronous>, transform_indices = @transform_2, window_bounds = array<i64: 1, 8>}, {pipeline_mode = #tpu.pipeline_mode<synchronous>, transform_indices = @transform_3, window_bounds = array<i64: 4, 8, 256>}, {pipeline_mode = #tpu.pipeline_mode<synchronous>, transform_indices = @transform_4, window_bounds = array<i64: 4, 256, 768>}, {pipeline_mode = #tpu.pipeline_mode<synchronous>, transform_indices = @transform_5, window_bounds = array<i64: 1, 768>}, {transform_indices = @transform_6, window_bounds = array<i64: 256, 768>}, {transform_indices = @transform_7, window_bounds = array<i64: 256, 1>}, {transform_indices = @transform_8, window_bounds = array<i64: 256, 1>}]} {
    %c0 = arith.constant 0 : index
    %c0_0 = arith.constant 0 : index
    %0 = vector.load %arg1[%c0, %c0_0] : memref<256x768xbf16, #tpu.memory_space<vmem>>, vector<256x768xbf16>
    %c0_1 = arith.constant 0 : index
    %c0_2 = arith.constant 0 : index
    %1 = vector.load %arg2[%c0_1, %c0_2] : memref<768x8xbf16, #tpu.memory_space<vmem>>, vector<768x8xbf16>
    %cst = arith.constant dense<0.000000e+00> : vector<256x8xf32>
    %2 = tpu.matmul %0, %1, %cst {dimension_numbers = #tpu.dot_dimension_numbers<[1], [0], [0], [1], [0, 0, 1, 1], [], []>} : vector<256x768xbf16>, vector<768x8xbf16>, vector<256x8xf32> -> vector<256x8xf32>
    %c0_3 = arith.constant 0 : index
    %c0_4 = arith.constant 0 : index
    %3 = vector.load %arg3[%c0_3, %c0_4] : memref<1x8xf32, #tpu.memory_space<vmem>>, vector<1x8xf32>
    %4 = vector.broadcast %3 : vector<1x8xf32> to vector<256x8xf32>
    %5 = arith.addf %2, %4 : vector<256x8xf32>
    %6 = arith.mulf %5, %5 : vector<256x8xf32>
    %cst_5 = arith.constant dense<0.000000e+00> : vector<256xf32>
    %7 = vector.multi_reduction <add>, %6, %cst_5 [1] : vector<256x8xf32> to vector<256xf32>
    %8 = vector.shape_cast %7 : vector<256xf32> to vector<256x1xf32>
    %cst_6 = arith.constant 9.99999996E-13 : f32
    %9 = vector.broadcast %cst_6 : f32 to vector<256x1xf32>
    %10 = arith.addf %8, %9 : vector<256x1xf32>
    %11 = math.rsqrt %10 : vector<256x1xf32>
    %12 = vector.broadcast %11 : vector<256x1xf32> to vector<256x8xf32>
    %13 = arith.mulf %5, %12 : vector<256x8xf32>
    %14 = arith.truncf %13 : vector<256x8xf32> to vector<256x8xbf16>
    %c0_7 = arith.constant 0 : index
    %c0_8 = arith.constant 0 : index
    %15 = vector.load %arg6[%c0_7, %c0_8] : memref<1x768xf32, #tpu.memory_space<vmem>>, vector<1x768xf32>
    %16 = tpu.iota {dimensions = array<i32: 1>} : vector<256x256xi32>
    %cst_9 = arith.constant 0xFF800000 : f32
    %17 = vector.broadcast %cst_9 : f32 to vector<256x1xf32>
    %c0_i32 = arith.constant 0 : i32
    %18 = vector.broadcast %c0_i32 : i32 to vector<256x1xi32>
    %c0_i32_10 = arith.constant 0 : i32
    %c4_i32 = arith.constant 4 : i32
    %19 = arith.addi %c0_i32_10, %c4_i32 : i32
    %c1_i32 = arith.constant 1 : i32
    %20:2 = scf.for %arg10 = %c0_i32_10 to %19 step %c1_i32 iter_args(%arg11 = %17, %arg12 = %18) -> (vector<256x1xf32>, vector<256x1xi32>)  : i32 {
      %29 = arith.index_cast %arg10 : i32 to index
      %c0_19 = arith.constant 0 : index
      %c0_20 = arith.constant 0 : index
      %30 = vector.load %arg4[%29, %c0_19, %c0_20] : memref<4x8x256xbf16, #tpu.memory_space<vmem>>, vector<1x8x256xbf16>
      %31 = vector.shape_cast %30 : vector<1x8x256xbf16> to vector<8x256xbf16>
      %cst_21 = arith.constant dense<0.000000e+00> : vector<256x256xf32>
      %32 = tpu.matmul %14, %31, %cst_21 {dimension_numbers = #tpu.dot_dimension_numbers<[1], [0], [0], [1], [0, 0, 1, 1], [], []>} : vector<256x8xbf16>, vector<8x256xbf16>, vector<256x256xf32> -> vector<256x256xf32>
      %cst_22 = arith.constant dense<0xFF800000> : vector<256xf32>
      %33 = vector.multi_reduction <maximumf>, %32, %cst_22 [1] : vector<256x256xf32> to vector<256xf32>
      %34 = vector.shape_cast %33 : vector<256xf32> to vector<256x1xf32>
      %35 = vector.broadcast %34 : vector<256x1xf32> to vector<256x256xf32>
      %36 = arith.cmpf oge, %32, %35 : vector<256x256xf32>
      %c256_i32 = arith.constant 256 : i32
      %37 = vector.broadcast %c256_i32 : i32 to vector<256x256xi32>
      %38 = arith.select %36, %16, %37 : vector<256x256xi1>, vector<256x256xi32>
      %cst_23 = arith.constant dense<2147483647> : vector<256xi32>
      %39 = vector.multi_reduction <minsi>, %38, %cst_23 [1] : vector<256x256xi32> to vector<256xi32>
      %40 = vector.shape_cast %39 : vector<256xi32> to vector<256x1xi32>
      %41 = vector.broadcast %40 : vector<256x1xi32> to vector<256x256xi32>
      %42 = arith.cmpi eq, %16, %41 : vector<256x256xi32>
      %43 = arith.extui %42 : vector<256x256xi1> to vector<256x256xi32>
      %44 = arith.sitofp %43 : vector<256x256xi32> to vector<256x256xf32>
      %45 = arith.truncf %44 : vector<256x256xf32> to vector<256x256xbf16>
      %46 = arith.index_cast %arg10 : i32 to index
      %c0_24 = arith.constant 0 : index
      %c0_25 = arith.constant 0 : index
      %47 = vector.load %arg5[%46, %c0_24, %c0_25] : memref<4x256x768xbf16, #tpu.memory_space<vmem>>, vector<1x256x768xbf16>
      %48 = vector.shape_cast %47 : vector<1x256x768xbf16> to vector<256x768xbf16>
      %cst_26 = arith.constant dense<0.000000e+00> : vector<256x768xf32>
      %49 = tpu.matmul %45, %48, %cst_26 {dimension_numbers = #tpu.dot_dimension_numbers<[1], [0], [0], [1], [0, 0, 1, 1], [], []>} : vector<256x256xbf16>, vector<256x768xbf16>, vector<256x768xf32> -> vector<256x768xf32>
      %50 = vector.broadcast %15 : vector<1x768xf32> to vector<256x768xf32>
      %51 = arith.addf %49, %50 : vector<256x768xf32>
      %52 = arith.truncf %51 : vector<256x768xf32> to vector<256x768xbf16>
      %53 = arith.cmpf ogt, %34, %arg11 : vector<256x1xf32>
      %c0_27 = arith.constant 0 : index
      %c0_28 = arith.constant 0 : index
      %54 = vector.load %arg7[%c0_27, %c0_28] : memref<256x768xbf16, #tpu.memory_space<vmem>>, vector<256x768xbf16>
      %55 = vector.shape_cast %53 : vector<256x1xi1> to vector<256x1xi1>
      %56 = vector.broadcast %55 : vector<256x1xi1> to vector<256x768xi1>
      %57 = arith.select %56, %52, %54 : vector<256x768xi1>, vector<256x768xbf16>
      %c0_29 = arith.constant 0 : index
      %c0_30 = arith.constant 0 : index
      %58 = vector.load %arg7[%c0_29, %c0_30] : memref<256x768xbf16, #tpu.memory_space<vmem>>, vector<256x768xbf16>
      tpu.vector_store %arg7[%c0_29, %c0_30], %57 {strides = array<i32>} : memref<256x768xbf16, #tpu.memory_space<vmem>>, vector<256x768xbf16>,
      %c256_i32_31 = arith.constant 256 : i32
      %59 = arith.muli %arg10, %c256_i32_31 : i32
      %60 = vector.broadcast %59 : i32 to vector<256x1xi32>
      %61 = arith.addi %40, %60 : vector<256x1xi32>
      %62 = arith.select %53, %61, %arg12 : vector<256x1xi1>, vector<256x1xi32>
      %63 = arith.maximumf %arg11, %34 : vector<256x1xf32>
      scf.yield %63, %62 : vector<256x1xf32>, vector<256x1xi32>
    }
    %c4_i32_11 = arith.constant 4 : i32
    %c0_12 = arith.constant 0 : index
    %c0_13 = arith.constant 0 : index
    %21 = vector.load %arg8[%c0_12, %c0_13] : memref<256x1xi32, #tpu.memory_space<vmem>>, vector<256x1xi32>
    tpu.vector_store %arg8[%c0_12, %c0_13], %20#1 {strides = array<i32>} : memref<256x1xi32, #tpu.memory_space<vmem>>, vector<256x1xi32>,
    %cst_14 = arith.constant 2.000000e+00 : f32
    %22 = vector.broadcast %cst_14 : f32 to vector<256x1xf32>
    %23 = arith.mulf %22, %20#0 : vector<256x1xf32>
    %cst_15 = arith.constant 2.000000e+00 : f32
    %24 = vector.broadcast %cst_15 : f32 to vector<256x1xf32>
    %25 = arith.subf %24, %23 : vector<256x1xf32>
    %cst_16 = arith.constant 0.000000e+00 : f32
    %26 = vector.broadcast %cst_16 : f32 to vector<256x1xf32>
    %27 = arith.maximumf %25, %26 : vector<256x1xf32>
    %c0_17 = arith.constant 0 : index
    %c0_18 = arith.constant 0 : index
    %28 = vector.load %arg9[%c0_17, %c0_18] : memref<256x1xf32, #tpu.memory_space<vmem>>, vector<256x1xf32>
    tpu.vector_store %arg9[%c0_17, %c0_18], %27 {strides = array<i32>} : memref<256x1xf32, #tpu.memory_space<vmem>>, vector<256x1xf32>,
    return
  }
  func.func @transform_0(%arg0: i32) -> (i32, i32) {
    %c0_i32 = arith.constant 0 : i32
    %c0_i32_0 = arith.constant 0 : i32
    return %arg0, %c0_i32 : i32, i32
  }
  func.func @transform_1(%arg0: i32) -> (i32, i32) {
    %c0_i32 = arith.constant 0 : i32
    %c0_i32_0 = arith.constant 0 : i32
    %c0_i32_1 = arith.constant 0 : i32
    return %c0_i32, %c0_i32_0 : i32, i32
  }
  func.func @transform_2(%arg0: i32) -> (i32, i32) {
    %c0_i32 = arith.constant 0 : i32
    %c0_i32_0 = arith.constant 0 : i32
    %c0_i32_1 = arith.constant 0 : i32
    return %c0_i32, %c0_i32_0 : i32, i32
  }
  func.func @transform_3(%arg0: i32) -> (i32, i32, i32) {
    %c0_i32 = arith.constant 0 : i32
    %c0_i32_0 = arith.constant 0 : i32
    %c0_i32_1 = arith.constant 0 : i32
    %c0_i32_2 = arith.constant 0 : i32
    return %c0_i32, %c0_i32_0, %c0_i32_1 : i32, i32, i32
  }
  func.func @transform_4(%arg0: i32) -> (i32, i32, i32) {
    %c0_i32 = arith.constant 0 : i32
    %c0_i32_0 = arith.constant 0 : i32
    %c0_i32_1 = arith.constant 0 : i32
    %c0_i32_2 = arith.constant 0 : i32
    return %c0_i32, %c0_i32_0, %c0_i32_1 : i32, i32, i32
  }
  func.func @transform_5(%arg0: i32) -> (i32, i32) {
    %c0_i32 = arith.constant 0 : i32
    %c0_i32_0 = arith.constant 0 : i32
    %c0_i32_1 = arith.constant 0 : i32
    return %c0_i32, %c0_i32_0 : i32, i32
  }
  func.func @transform_6(%arg0: i32) -> (i32, i32) {
    %c0_i32 = arith.constant 0 : i32
    %c0_i32_0 = arith.constant 0 : i32
    return %arg0, %c0_i32 : i32, i32
  }
  func.func @transform_7(%arg0: i32) -> (i32, i32) {
    %c0_i32 = arith.constant 0 : i32
    %c0_i32_0 = arith.constant 0 : i32
    return %arg0, %c0_i32 : i32, i32
  }
  func.func @transform_8(%arg0: i32) -> (i32, i32) {
    %c0_i32 = arith.constant 0 : i32
    %c0_i32_0 = arith.constant 0 : i32
    return %arg0, %c0_i32 : i32, i32
  }
}

</mosaic_0001>

<llo_original>
// kernel: vq_model_forward.1
$region0: #{vq_model_forward.1}
  #allocation0 [shape = 'u32[]', space=smem, size = 0x4, offset = 0x4, fixed_abs, tag = 'smem constant byte address 0x4 - core index']
  #allocation1 [shape = 'u32[144,128]{1,0:T(1,128)}', space=vmem, size = 0x12000, scoped, tag = 'internal scratch']
  %s0 = inlined_call_operand.vmem [shape: bf16[512,768], index: 0, kind: input, shape index: {}]
  %s1 = inlined_call_operand.vmem [shape: bf16[768,8], index: 1, kind: input, shape index: {}]
  %s2 = inlined_call_operand.vmem [shape: f32[1,8], index: 2, kind: input, shape index: {}]
  %s3 = inlined_call_operand.vmem [shape: bf16[4,8,256], index: 3, kind: input, shape index: {}]
  %s4 = inlined_call_operand.vmem [shape: bf16[4,256,768], index: 4, kind: input, shape index: {}]
  %s5 = inlined_call_operand.vmem [shape: f32[1,768], index: 5, kind: input, shape index: {}]
  %s6 = inlined_call_operand.vmem [shape: bf16[512,768], index: 6, kind: output, shape index: {0}]
  %s7 = inlined_call_operand.vmem [shape: s32[512,1], index: 7, kind: output, shape index: {1}]
  %s8 = inlined_call_operand.vmem [shape: f32[512,1], index: 8, kind: output, shape index: {2}]
  %9 = xla_tuple %s6, %s7, %s8
  %s10 = sld [smem:[#allocation0]]
  $region80: #{vq_model_forward.1} parent=0
    _
  %s12 = ssub.s32 1, %s10
  %s13 = scalar_select 0, %s12, %s10
  loop: start=0, step=1, limit=4
  $region2: #{vq_model_forward.1} parent=0 // loop_pre_header
    _
  $region3: #{vq_model_forward.1} parent=0 // loop_header
    %s15 = sphi 0, %s19
    %p16 = scmp.ge.s32.totalorder %s15, 4
    %s25 = sphi 0, %s27
    %s28 = sphi 0, %s25
    %s29 = sphi 0, %s28
    %s45 = sphi 0, %s29
    %s49 = sphi 0, %s49
    %s51 = sphi 0, %s49
    %s52 = sphi 0, %s51
    %s66 = sphi 0, %s52
    %s70 = sphi 0, %s70
    %s72 = sphi 0, %s70
    %s73 = sphi 0, %s72
    %s87 = sphi 0, %s73
    %s91 = sphi 0, %s91
    %s93 = sphi 0, %s91
    %s94 = sphi 0, %s93
    %s108 = sphi 0, %s94
    %s112 = sphi 0, %s112
    %s114 = sphi 0, %s112
    %s115 = sphi 0, %s114
    %s129 = sphi 0, %s115
    %s133 = sphi 0, %s133
    %s135 = sphi 0, %s133
    %s136 = sphi 0, %s135
    %s150 = sphi 0, %s136
    %s156 = sphi 0, %s158
    %s159 = sphi 0, %s156
    %s160 = sphi 0, %s159
    %s176 = sphi 0, %s160
    %s182 = sphi 0, %s184
    %s185 = sphi 0, %s182
    %s186 = sphi 0, %s185
    %s202 = sphi 0, %s186
    %s208 = sphi 0, %s210
    %s211 = sphi 0, %s208
    %s212 = sphi 0, %s211
    %s228 = sphi 0, %s212
  $region4: #{vq_model_forward.1} parent=0 // loop_header_branch
    %18 = sbr.rel (%p16) target = $region8
  $region5: #{vq_model_forward.1} parent=0 // loop_body
    %s20 = ssub.s32 %s15, 1
    %s21 = ssub.s32 %s15, 2
    %s22 = sadd.s32 %s15, 1
    %s23 = ssub.s32 %s15, %s22
    %p24 = scmp.eq.s32.totalorder %s23, 0
    %s26 = sadd.s32 %s25, 1
    %s27 = scalar_select %p24, %s25, %s26
    %p30 = pneg %p24
    %p31 = scmp.eq.s32.totalorder %s15, 1
    %p32 = por %p30, %p31
    %p33 = scmp.ne.s32.totalorder %s25, %s28
    %p34 = scmp.eq.s32.totalorder %s15, 0
    %p35 = por %p33, %p34
    %p36 = scmp.ne.s32.totalorder %s25, %s28
    %p37 = scmp.eq.s32.totalorder %s20, 1
    %p38 = por %p36, %p37
    %p39 = scmp.ne.s32.totalorder %s28, %s29
    %p40 = scmp.eq.s32.totalorder %s20, 0
    %p41 = por %p39, %p40
    %p42 = scmp.ne.s32.totalorder %s28, %s29
    %p43 = scmp.eq.s32.totalorder %s21, 1
    %p44 = por %p42, %p43
    %p46 = scmp.ne.s32.totalorder %s29, %s45
    %p47 = scmp.eq.s32.totalorder %s21, 0
    %p48 = por %p46, %p47
    %s50 = sadd.s32 %s49, 1
    %p53 = scmp.eq.s32.totalorder %s15, 1
    %p54 = scmp.ne.s32.totalorder %s49, %s51
    %p55 = scmp.eq.s32.totalorder %s15, 0
    %p56 = por %p54, %p55
    %p57 = scmp.ne.s32.totalorder %s49, %s51
    %p58 = scmp.eq.s32.totalorder %s20, 1
    %p59 = por %p57, %p58
    %p60 = scmp.ne.s32.totalorder %s51, %s52
    %p61 = scmp.eq.s32.totalorder %s20, 0
    %p62 = por %p60, %p61
    %p63 = scmp.ne.s32.totalorder %s51, %s52
    %p64 = scmp.eq.s32.totalorder %s21, 1
    %p65 = por %p63, %p64
    %p67 = scmp.ne.s32.totalorder %s52, %s66
    %p68 = scmp.eq.s32.totalorder %s21, 0
    %p69 = por %p67, %p68
    %s71 = sadd.s32 %s70, 1
    %p74 = scmp.eq.s32.totalorder %s15, 1
    %p75 = scmp.ne.s32.totalorder %s70, %s72
    %p76 = scmp.eq.s32.totalorder %s15, 0
    %p77 = por %p75, %p76
    %p78 = scmp.ne.s32.totalorder %s70, %s72
    %p79 = scmp.eq.s32.totalorder %s20, 1
    %p80 = por %p78, %p79
    %p81 = scmp.ne.s32.totalorder %s72, %s73
    %p82 = scmp.eq.s32.totalorder %s20, 0
    %p83 = por %p81, %p82
    %p84 = scmp.ne.s32.totalorder %s72, %s73
    %p85 = scmp.eq.s32.totalorder %s21, 1
    %p86 = por %p84, %p85
    %p88 = scmp.ne.s32.totalorder %s73, %s87
    %p89 = scmp.eq.s32.totalorder %s21, 0
    %p90 = por %p88, %p89
    %s92 = sadd.s32 %s91, 1
    %p95 = scmp.eq.s32.totalorder %s15, 1
    %p96 = scmp.ne.s32.totalorder %s91, %s93
    %p97 = scmp.eq.s32.totalorder %s15, 0
    %p98 = por %p96, %p97
    %p99 = scmp.ne.s32.totalorder %s91, %s93
    %p100 = scmp.eq.s32.totalorder %s20, 1
    %p101 = por %p99, %p100
    %p102 = scmp.ne.s32.totalorder %s93, %s94
    %p103 = scmp.eq.s32.totalorder %s20, 0
    %p104 = por %p102, %p103
    %p105 = scmp.ne.s32.totalorder %s93, %s94
    %p106 = scmp.eq.s32.totalorder %s21, 1
    %p107 = por %p105, %p106
    %p109 = scmp.ne.s32.totalorder %s94, %s108
    %p110 = scmp.eq.s32.totalorder %s21, 0
    %p111 = por %p109, %p110
    %s113 = sadd.s32 %s112, 1
    %p116 = scmp.eq.s32.totalorder %s15, 1
    %p117 = scmp.ne.s32.totalorder %s112, %s114
    %p118 = scmp.eq.s32.totalorder %s15, 0
    %p119 = por %p117, %p118
    %p120 = scmp.ne.s32.totalorder %s112, %s114
    %p121 = scmp.eq.s32.totalorder %s20, 1
    %p122 = por %p120, %p121
    %p123 = scmp.ne.s32.totalorder %s114, %s115
    %p124 = scmp.eq.s32.totalorder %s20, 0
    %p125 = por %p123, %p124
    %p126 = scmp.ne.s32.totalorder %s114, %s115
    %p127 = scmp.eq.s32.totalorder %s21, 1
    %p128 = por %p126, %p127
    %p130 = scmp.ne.s32.totalorder %s115, %s129
    %p131 = scmp.eq.s32.totalorder %s21, 0
    %p132 = por %p130, %p131
    %s134 = sadd.s32 %s133, 1
    %p137 = scmp.eq.s32.totalorder %s15, 1
    %p138 = scmp.ne.s32.totalorder %s133, %s135
    %p139 = scmp.eq.s32.totalorder %s15, 0
    %p140 = por %p138, %p139
    %p141 = scmp.ne.s32.totalorder %s133, %s135
    %p142 = scmp.eq.s32.totalorder %s20, 1
    %p143 = por %p141, %p142
    %p144 = scmp.ne.s32.totalorder %s135, %s136
    %p145 = scmp.eq.s32.totalorder %s20, 0
    %p146 = por %p144, %p145
    %p147 = scmp.ne.s32.totalorder %s135, %s136
    %p148 = scmp.eq.s32.totalorder %s21, 1
    %p149 = por %p147, %p148
    %p151 = scmp.ne.s32.totalorder %s136, %s150
    %p152 = scmp.eq.s32.totalorder %s21, 0
    %p153 = por %p151, %p152
    %s154 = ssub.s32 %s15, %s22
    %p155 = scmp.eq.s32.totalorder %s154, 0
    %s157 = sadd.s32 %s156, 1
    %s158 = scalar_select %p155, %s156, %s157
    %p161 = pneg %p155
    %p162 = scmp.eq.s32.totalorder %s15, 1
    %p163 = por %p161, %p162
    %p164 = scmp.ne.s32.totalorder %s156, %s159
    %p165 = scmp.eq.s32.totalorder %s15, 0
    %p166 = por %p164, %p165
    %p167 = scmp.ne.s32.totalorder %s156, %s159
    %p168 = scmp.eq.s32.totalorder %s20, 1
    %p169 = por %p167, %p168
    %p170 = scmp.ne.s32.totalorder %s159, %s160
    %p171 = scmp.eq.s32.totalorder %s20, 0
    %p172 = por %p170, %p171
    %p173 = scmp.ne.s32.totalorder %s159, %s160
    %p174 = scmp.eq.s32.totalorder %s21, 1
    %p175 = por %p173, %p174
    %p177 = scmp.ne.s32.totalorder %s160, %s176
    %p178 = scmp.eq.s32.totalorder %s21, 0
    %p179 = por %p177, %p178
    %s180 = ssub.s32 %s15, %s22
    %p181 = scmp.eq.s32.totalorder %s180, 0
    %s183 = sadd.s32 %s182, 1
    %s184 = scalar_select %p181, %s182, %s183
    %p187 = pneg %p181
    %p188 = scmp.eq.s32.totalorder %s15, 1
    %p189 = por %p187, %p188
    %p190 = scmp.ne.s32.totalorder %s182, %s185
    %p191 = scmp.eq.s32.totalorder %s15, 0
    %p192 = por %p190, %p191
    %p193 = scmp.ne.s32.totalorder %s182, %s185
    %p194 = scmp.eq.s32.totalorder %s20, 1
    %p195 = por %p193, %p194
    %p196 = scmp.ne.s32.totalorder %s185, %s186
    %p197 = scmp.eq.s32.totalorder %s20, 0
    %p198 = por %p196, %p197
    %p199 = scmp.ne.s32.totalorder %s185, %s186
    %p200 = scmp.eq.s32.totalorder %s21, 1
    %p201 = por %p199, %p200
    %p203 = scmp.ne.s32.totalorder %s186, %s202
    %p204 = scmp.eq.s32.totalorder %s21, 0
    %p205 = por %p203, %p204
    %s206 = ssub.s32 %s15, %s22
    %p207 = scmp.eq.s32.totalorder %s206, 0
    %s209 = sadd.s32 %s208, 1
    %s210 = scalar_select %p207, %s208, %s209
    %p213 = pneg %p207
    %p214 = scmp.eq.s32.totalorder %s15, 1
    %p215 = por %p213, %p214
    %p216 = scmp.ne.s32.totalorder %s208, %s211
    %p217 = scmp.eq.s32.totalorder %s15, 0
    %p218 = por %p216, %p217
    %p219 = scmp.ne.s32.totalorder %s208, %s211
    %p220 = scmp.eq.s32.totalorder %s20, 1
    %p221 = por %p219, %p220
    %p222 = scmp.ne.s32.totalorder %s211, %s212
    %p223 = scmp.eq.s32.totalorder %s20, 0
    %p224 = por %p222, %p223
    %p225 = scmp.ne.s32.totalorder %s211, %s212
    %p226 = scmp.eq.s32.totalorder %s21, 1
    %p227 = por %p225, %p226
    %p229 = scmp.ne.s32.totalorder %s212, %s228
    %p230 = scmp.eq.s32.totalorder %s21, 0
    %p231 = por %p229, %p230
    %p232 = scmp.le.s32.totalorder 1, %s15
    %p233 = scmp.lt.s32.totalorder %s15, 3
    %p234 = pnand %p232, %p233
    %p235 = pneg %p234
    // Predicated region
    $region9: #{vq_model_forward.1} parent=5 // pred_check
      _
    $region10: #{vq_model_forward.1} parent=5 // pred_check_branch
      %237 = sbr.rel (%p234) target = $region12
    $region11: #{vq_model_forward.1} parent=5 // pred_region
      %s238 = ssub.s32 %s15, 1
      // Predicated region
      $region13: #{vq_model_forward.1} parent=11 // pred_check
        %p239 = pneg %p62
      $region14: #{vq_model_forward.1} parent=11 // pred_check_branch
        %241 = sbr.rel (%p239) target = $region16
      $region15: #{vq_model_forward.1} parent=11 // pred_region
        _
      $region16: #{vq_model_forward.1} parent=11 // pred_fallthru
        _
      // Predicated region
      $region17: #{vq_model_forward.1} parent=11 // pred_check
        %p242 = pneg %p83
      $region18: #{vq_model_forward.1} parent=11 // pred_check_branch
        %244 = sbr.rel (%p242) target = $region20
      $region19: #{vq_model_forward.1} parent=11 // pred_region
        _
      $region20: #{vq_model_forward.1} parent=11 // pred_fallthru
        _
      // Predicated region
      $region21: #{vq_model_forward.1} parent=11 // pred_check
        %p245 = pneg %p104
      $region22: #{vq_model_forward.1} parent=11 // pred_check_branch
        %247 = sbr.rel (%p245) target = $region24
      $region23: #{vq_model_forward.1} parent=11 // pred_region
        _
      $region24: #{vq_model_forward.1} parent=11 // pred_fallthru
        _
      // Predicated region
      $region25: #{vq_model_forward.1} parent=11 // pred_check
        %p248 = pneg %p125
      $region26: #{vq_model_forward.1} parent=11 // pred_check_branch
        %250 = sbr.rel (%p248) target = $region28
      $region27: #{vq_model_forward.1} parent=11 // pred_region
        _
      $region28: #{vq_model_forward.1} parent=11 // pred_fallthru
        _
      // Predicated region
      $region29: #{vq_model_forward.1} parent=11 // pred_check
        %p251 = pneg %p146
      $region30: #{vq_model_forward.1} parent=11 // pred_check_branch
        %253 = sbr.rel (%p251) target = $region32
      $region31: #{vq_model_forward.1} parent=11 // pred_region
        _
      $region32: #{vq_model_forward.1} parent=11 // pred_fallthru
        _
    $region12: #{vq_model_forward.1} parent=5 // pred_fallthru
      _
    %p254 = scmp.lt.s32.totalorder %s15, 2
    // Predicated region
    $region33: #{vq_model_forward.1} parent=5 // pred_check
      %p255 = pneg %p254
    $region34: #{vq_model_forward.1} parent=5 // pred_check_branch
      %257 = sbr.rel (%p255) target = $region36
    $region35: #{vq_model_forward.1} parent=5 // pred_region
      // Predicated region
      $region37: #{vq_model_forward.1} parent=35 // pred_check
        %p258 = pneg %p35
      $region38: #{vq_model_forward.1} parent=35 // pred_check_branch
        %260 = sbr.rel (%p258) target = $region40
      $region39: #{vq_model_forward.1} parent=35 // pred_region
        %s261 = smul.u32 32, %s15
        %p262 = scmp.lt.s32.totalorder %s261, 63
        %s263 = scalar_select %p262, %s261, 63
        %s264 = smul.addr %s263, 6
        %s265 = smul.addr %s264, 4
        %s266 = scalar_lea.vmem %s0, %s265
        %s267 = smul.u32 32, %s15
      $region40: #{vq_model_forward.1} parent=35 // pred_fallthru
        _
    $region36: #{vq_model_forward.1} parent=5 // pred_fallthru
      _
    %p268 = scmp.le.s32.totalorder 1, %s15
    %p269 = scmp.lt.s32.totalorder %s15, 3
    %p270 = pnand %p268, %p269
    %p271 = pneg %p270
    // Predicated region
    $region41: #{vq_model_forward.1} parent=5 // pred_check
      _
    $region42: #{vq_model_forward.1} parent=5 // pred_check_branch
      %273 = sbr.rel (%p270) target = $region44
    $region43: #{vq_model_forward.1} parent=5 // pred_region
      %s274 = ssub.s32 %s15, 1
      %s275 = smul.u32 32, %s20
      %p276 = scmp.lt.s32.totalorder %s275, 63
      %s277 = scalar_select %p276, %s275, 63
      %s278 = smul.addr %s277, 6
      %s279 = smul.addr %s278, 4
      %s280 = scalar_lea.vmem %s0, %s279
      %p281 = pneg %p41
      %p282 = pneg %p38
      %p283 = pneg %p62
      %p284 = pneg %p59
      %p285 = pneg %p83
      %p286 = pneg %p80
      %p287 = pneg %p104
      %p288 = pneg %p101
      %p289 = pneg %p125
      %p290 = pneg %p122
      %p291 = pneg %p146
      %p292 = pneg %p143
      %p293 = pneg %p172
      %p294 = pneg %p169
      %s295 = smul.u32 32, %s20
      %p296 = scmp.lt.s32.totalorder %s295, 63
      %s297 = scalar_select %p296, %s295, 63
      %s298 = smul.addr %s297, 6
      %s299 = smul.addr %s298, 4
      %s300 = scalar_lea.vmem %s6, %s299
      %p301 = pneg %p198
      %p302 = pneg %p195
      %s303 = smul.u32 32, %s20
      %p304 = scmp.lt.s32.totalorder %s303, 63
      %s305 = scalar_select %p304, %s303, 63
      %s306 = smul.addr %s305, 8
      %s307 = scalar_lea.vmem %s7, %s306
      %p308 = pneg %p224
      %p309 = pneg %p221
      %s310 = smul.u32 32, %s20
      %p311 = scmp.lt.s32.totalorder %s310, 63
      %s312 = scalar_select %p311, %s310, 63
      %s313 = smul.addr %s312, 8
      %s314 = scalar_lea.vmem %s8, %s313
      %s315 = smul.u32 32, %s20
      %p316 = scmp.lt.s32.totalorder %s315, 63
      %s317 = scalar_select %p316, %s315, 63
      %s318 = smul.addr %s317, 6
      %s319 = smul.addr %s318, 4
      %s320 = scalar_lea.vmem %s0, %s319
      %s321 = smul.u32 32, %s20
      %s322 = smul.u32 32, %s20
      %p323 = scmp.lt.s32.totalorder %s322, 63
      %s324 = scalar_select %p323, %s322, 63
      %s325 = smul.addr %s324, 6
      %s326 = smul.addr %s325, 4
      %s327 = scalar_lea.vmem %s6, %s326
      %s328 = smul.u32 32, %s20
      %s329 = smul.u32 32, %s20
      %p330 = scmp.lt.s32.totalorder %s329, 63
      %s331 = scalar_select %p330, %s329, 63
      %s332 = smul.addr %s331, 8
      %s333 = scalar_lea.vmem %s7, %s332
      %s334 = smul.u32 32, %s20
      %s335 = smul.u32 32, %s20
      %p336 = scmp.lt.s32.totalorder %s335, 63
      %s337 = scalar_select %p336, %s335, 63
      %s338 = smul.addr %s337, 8
      %s339 = scalar_lea.vmem %s8, %s338
      %s340 = smul.u32 32, %s20
      %v344 = vld [vmem:[%s320] sm:$0xff]
      %v345 = vld [vmem:[%s320 + $0x8] sm:$0xff]
      %v346 = vld [vmem:[%s320 + $0x10] sm:$0xff]
      %v347 = vld [vmem:[%s320 + $0x18] sm:$0xff]
      %v348 = vld [vmem:[%s320 + $0x20] sm:$0xff]
      %v349 = vld [vmem:[%s320 + $0x28] sm:$0xff]
      %v350 = vld [vmem:[%s320 + $0x30] sm:$0xff]
      %v351 = vld [vmem:[%s320 + $0x38] sm:$0xff]
      %v352 = vld [vmem:[%s320 + $0x40] sm:$0xff]
      %v353 = vld [vmem:[%s320 + $0x48] sm:$0xff]
      %v354 = vld [vmem:[%s320 + $0x50] sm:$0xff]
      %v355 = vld [vmem:[%s320 + $0x58] sm:$0xff]
      %v356 = vld [vmem:[%s320 + $0x60] sm:$0xff]
      %v357 = vld [vmem:[%s320 + $0x68] sm:$0xff]
      %v358 = vld [vmem:[%s320 + $0x70] sm:$0xff]
      %v359 = vld [vmem:[%s320 + $0x78] sm:$0xff]
      %v360 = vld [vmem:[%s320 + $0x80] sm:$0xff]
      %v361 = vld [vmem:[%s320 + $0x88] sm:$0xff]
      %v362 = vld [vmem:[%s320 + $0x90] sm:$0xff]
      %v363 = vld [vmem:[%s320 + $0x98] sm:$0xff]
      %v364 = vld [vmem:[%s320 + $0xa0] sm:$0xff]
      %v365 = vld [vmem:[%s320 + $0xa8] sm:$0xff]
      %v366 = vld [vmem:[%s320 + $0xb0] sm:$0xff]
      %v367 = vld [vmem:[%s320 + $0xb8] sm:$0xff]
      %v368 = vld [vmem:[%s320 + $0xc0] sm:$0xff]
      %v369 = vld [vmem:[%s320 + $0xc8] sm:$0xff]
      %v370 = vld [vmem:[%s320 + $0xd0] sm:$0xff]
      %v371 = vld [vmem:[%s320 + $0xd8] sm:$0xff]
      %v372 = vld [vmem:[%s320 + $0xe0] sm:$0xff]
      %v373 = vld [vmem:[%s320 + $0xe8] sm:$0xff]
      %v374 = vld [vmem:[%s320 + $0xf0] sm:$0xff]
      %v375 = vld [vmem:[%s320 + $0xf8] sm:$0xff]
      %v376 = vld [vmem:[%s320 + $0x100] sm:$0xff]
      %v377 = vld [vmem:[%s320 + $0x108] sm:$0xff]
      %v378 = vld [vmem:[%s320 + $0x110] sm:$0xff]
      %v379 = vld [vmem:[%s320 + $0x118] sm:$0xff]
      %v380 = vld [vmem:[%s320 + $0x120] sm:$0xff]
      %v381 = vld [vmem:[%s320 + $0x128] sm:$0xff]
      %v382 = vld [vmem:[%s320 + $0x130] sm:$0xff]
      %v383 = vld [vmem:[%s320 + $0x138] sm:$0xff]
      %v384 = vld [vmem:[%s320 + $0x140] sm:$0xff]
      %v385 = vld [vmem:[%s320 + $0x148] sm:$0xff]
      %v386 = vld [vmem:[%s320 + $0x150] sm:$0xff]
      %v387 = vld [vmem:[%s320 + $0x158] sm:$0xff]
      %v388 = vld [vmem:[%s320 + $0x160] sm:$0xff]
      %v389 = vld [vmem:[%s320 + $0x168] sm:$0xff]
      %v390 = vld [vmem:[%s320 + $0x170] sm:$0xff]
      %v391 = vld [vmem:[%s320 + $0x178] sm:$0xff]
      %v392 = vld [vmem:[%s320 + $0x180] sm:$0xff]
      %v393 = vld [vmem:[%s320 + $0x188] sm:$0xff]
      %v394 = vld [vmem:[%s320 + $0x190] sm:$0xff]
      %v395 = vld [vmem:[%s320 + $0x198] sm:$0xff]
      %v396 = vld [vmem:[%s320 + $0x1a0] sm:$0xff]
      %v397 = vld [vmem:[%s320 + $0x1a8] sm:$0xff]
      %v398 = vld [vmem:[%s320 + $0x1b0] sm:$0xff]
      %v399 = vld [vmem:[%s320 + $0x1b8] sm:$0xff]
      %v400 = vld [vmem:[%s320 + $0x1c0] sm:$0xff]
      %v401 = vld [vmem:[%s320 + $0x1c8] sm:$0xff]
      %v402 = vld [vmem:[%s320 + $0x1d0] sm:$0xff]
      %v403 = vld [vmem:[%s320 + $0x1d8] sm:$0xff]
      %v404 = vld [vmem:[%s320 + $0x1e0] sm:$0xff]
      %v405 = vld [vmem:[%s320 + $0x1e8] sm:$0xff]
      %v406 = vld [vmem:[%s320 + $0x1f0] sm:$0xff]
      %v407 = vld [vmem:[%s320 + $0x1f8] sm:$0xff]
      %v408 = vld [vmem:[%s320 + $0x200] sm:$0xff]
      %v409 = vld [vmem:[%s320 + $0x208] sm:$0xff]
      %v410 = vld [vmem:[%s320 + $0x210] sm:$0xff]
      %v411 = vld [vmem:[%s320 + $0x218] sm:$0xff]
      %v412 = vld [vmem:[%s320 + $0x220] sm:$0xff]
      %v413 = vld [vmem:[%s320 + $0x228] sm:$0xff]
      %v414 = vld [vmem:[%s320 + $0x230] sm:$0xff]
      %v415 = vld [vmem:[%s320 + $0x238] sm:$0xff]
      %v416 = vld [vmem:[%s320 + $0x240] sm:$0xff]
      %v417 = vld [vmem:[%s320 + $0x248] sm:$0xff]
      %v418 = vld [vmem:[%s320 + $0x250] sm:$0xff]
      %v419 = vld [vmem:[%s320 + $0x258] sm:$0xff]
      %v420 = vld [vmem:[%s320 + $0x260] sm:$0xff]
      %v421 = vld [vmem:[%s320 + $0x268] sm:$0xff]
      %v422 = vld [vmem:[%s320 + $0x270] sm:$0xff]
      %v423 = vld [vmem:[%s320 + $0x278] sm:$0xff]
      %v424 = vld [vmem:[%s320 + $0x280] sm:$0xff]
      %v425 = vld [vmem:[%s320 + $0x288] sm:$0xff]
      %v426 = vld [vmem:[%s320 + $0x290] sm:$0xff]
      %v427 = vld [vmem:[%s320 + $0x298] sm:$0xff]
      %v428 = vld [vmem:[%s320 + $0x2a0] sm:$0xff]
      %v429 = vld [vmem:[%s320 + $0x2a8] sm:$0xff]
      %v430 = vld [vmem:[%s320 + $0x2b0] sm:$0xff]
      %v431 = vld [vmem:[%s320 + $0x2b8] sm:$0xff]
      %v432 = vld [vmem:[%s320 + $0x2c0] sm:$0xff]
      %v433 = vld [vmem:[%s320 + $0x2c8] sm:$0xff]
      %v434 = vld [vmem:[%s320 + $0x2d0] sm:$0xff]
      %v435 = vld [vmem:[%s320 + $0x2d8] sm:$0xff]
      %v436 = vld [vmem:[%s320 + $0x2e0] sm:$0xff]
      %v437 = vld [vmem:[%s320 + $0x2e8] sm:$0xff]
      %v438 = vld [vmem:[%s320 + $0x2f0] sm:$0xff]
      %v439 = vld [vmem:[%s320 + $0x2f8] sm:$0xff]
      %v440 = vld [vmem:[%s1] sm:$0xf]
      %v441 = vld [vmem:[%s1 + $0x4] sm:$0xf]
      %v442 = vld [vmem:[%s1 + $0x8] sm:$0xf]
      %v443 = vld [vmem:[%s1 + $0xc] sm:$0xf]
      %v444 = vld [vmem:[%s1 + $0x10] sm:$0xf]
      %v445 = vld [vmem:[%s1 + $0x14] sm:$0xf]
      %v446 = vld [vmem:[%s1 + $0x18] sm:$0xf]
      %v447 = vld [vmem:[%s1 + $0x1c] sm:$0xf]
      %v448 = vld [vmem:[%s1 + $0x20] sm:$0xf]
      %v449 = vld [vmem:[%s1 + $0x24] sm:$0xf]
      %v450 = vld [vmem:[%s1 + $0x28] sm:$0xf]
      %v451 = vld [vmem:[%s1 + $0x2c] sm:$0xf]
      %v452 = vld [vmem:[%s1 + $0x30] sm:$0xf]
      %v453 = vld [vmem:[%s1 + $0x34] sm:$0xf]
      %v454 = vld [vmem:[%s1 + $0x38] sm:$0xf]
      %v455 = vld [vmem:[%s1 + $0x3c] sm:$0xf]
      %v456 = vld [vmem:[%s1 + $0x40] sm:$0xf]
      %v457 = vld [vmem:[%s1 + $0x44] sm:$0xf]
      %v458 = vld [vmem:[%s1 + $0x48] sm:$0xf]
      %v459 = vld [vmem:[%s1 + $0x4c] sm:$0xf]
      %v460 = vld [vmem:[%s1 + $0x50] sm:$0xf]
      %v461 = vld [vmem:[%s1 + $0x54] sm:$0xf]
      %v462 = vld [vmem:[%s1 + $0x58] sm:$0xf]
      %v463 = vld [vmem:[%s1 + $0x5c] sm:$0xf]
      %v464 = vld [vmem:[%s1 + $0x60] sm:$0xf]
      %v465 = vld [vmem:[%s1 + $0x64] sm:$0xf]
      %v466 = vld [vmem:[%s1 + $0x68] sm:$0xf]
      %v467 = vld [vmem:[%s1 + $0x6c] sm:$0xf]
      %v468 = vld [vmem:[%s1 + $0x70] sm:$0xf]
      %v469 = vld [vmem:[%s1 + $0x74] sm:$0xf]
      %v470 = vld [vmem:[%s1 + $0x78] sm:$0xf]
      %v471 = vld [vmem:[%s1 + $0x7c] sm:$0xf]
      %v472 = vld [vmem:[%s1 + $0x80] sm:$0xf]
      %v473 = vld [vmem:[%s1 + $0x84] sm:$0xf]
      %v474 = vld [vmem:[%s1 + $0x88] sm:$0xf]
      %v475 = vld [vmem:[%s1 + $0x8c] sm:$0xf]
      %v476 = vld [vmem:[%s1 + $0x90] sm:$0xf]
      %v477 = vld [vmem:[%s1 + $0x94] sm:$0xf]
      %v478 = vld [vmem:[%s1 + $0x98] sm:$0xf]
      %v479 = vld [vmem:[%s1 + $0x9c] sm:$0xf]
      %v480 = vld [vmem:[%s1 + $0xa0] sm:$0xf]
      %v481 = vld [vmem:[%s1 + $0xa4] sm:$0xf]
      %v482 = vld [vmem:[%s1 + $0xa8] sm:$0xf]
      %v483 = vld [vmem:[%s1 + $0xac] sm:$0xf]
      %v484 = vld [vmem:[%s1 + $0xb0] sm:$0xf]
      %v485 = vld [vmem:[%s1 + $0xb4] sm:$0xf]
      %v486 = vld [vmem:[%s1 + $0xb8] sm:$0xf]
      %v487 = vld [vmem:[%s1 + $0xbc] sm:$0xf]
      %v488 = vld [vmem:[%s1 + $0xc0] sm:$0xf]
      %v489 = vld [vmem:[%s1 + $0xc4] sm:$0xf]
      %v490 = vld [vmem:[%s1 + $0xc8] sm:$0xf]
      %v491 = vld [vmem:[%s1 + $0xcc] sm:$0xf]
      %v492 = vld [vmem:[%s1 + $0xd0] sm:$0xf]
      %v493 = vld [vmem:[%s1 + $0xd4] sm:$0xf]
      %v494 = vld [vmem:[%s1 + $0xd8] sm:$0xf]
      %v495 = vld [vmem:[%s1 + $0xdc] sm:$0xf]
      %v496 = vld [vmem:[%s1 + $0xe0] sm:$0xf]
      %v497 = vld [vmem:[%s1 + $0xe4] sm:$0xf]
      %v498 = vld [vmem:[%s1 + $0xe8] sm:$0xf]
      %v499 = vld [vmem:[%s1 + $0xec] sm:$0xf]
      %v500 = vld [vmem:[%s1 + $0xf0] sm:$0xf]
      %v501 = vld [vmem:[%s1 + $0xf4] sm:$0xf]
      %v502 = vld [vmem:[%s1 + $0xf8] sm:$0xf]
      %v503 = vld [vmem:[%s1 + $0xfc] sm:$0xf]
      %v504 = vld [vmem:[%s1 + $0x100] sm:$0xf]
      %v505 = vld [vmem:[%s1 + $0x104] sm:$0xf]
      %v506 = vld [vmem:[%s1 + $0x108] sm:$0xf]
      %v507 = vld [vmem:[%s1 + $0x10c] sm:$0xf]
      %v508 = vld [vmem:[%s1 + $0x110] sm:$0xf]
      %v509 = vld [vmem:[%s1 + $0x114] sm:$0xf]
      %v510 = vld [vmem:[%s1 + $0x118] sm:$0xf]
      %v511 = vld [vmem:[%s1 + $0x11c] sm:$0xf]
      %v512 = vld [vmem:[%s1 + $0x120] sm:$0xf]
      %v513 = vld [vmem:[%s1 + $0x124] sm:$0xf]
      %v514 = vld [vmem:[%s1 + $0x128] sm:$0xf]
      %v515 = vld [vmem:[%s1 + $0x12c] sm:$0xf]
      %v516 = vld [vmem:[%s1 + $0x130] sm:$0xf]
      %v517 = vld [vmem:[%s1 + $0x134] sm:$0xf]
      %v518 = vld [vmem:[%s1 + $0x138] sm:$0xf]
      %v519 = vld [vmem:[%s1 + $0x13c] sm:$0xf]
      %v520 = vld [vmem:[%s1 + $0x140] sm:$0xf]
      %v521 = vld [vmem:[%s1 + $0x144] sm:$0xf]
      %v522 = vld [vmem:[%s1 + $0x148] sm:$0xf]
      %v523 = vld [vmem:[%s1 + $0x14c] sm:$0xf]
      %v524 = vld [vmem:[%s1 + $0x150] sm:$0xf]
      %v525 = vld [vmem:[%s1 + $0x154] sm:$0xf]
      %v526 = vld [vmem:[%s1 + $0x158] sm:$0xf]
      %v527 = vld [vmem:[%s1 + $0x15c] sm:$0xf]
      %v528 = vld [vmem:[%s1 + $0x160] sm:$0xf]
      %v529 = vld [vmem:[%s1 + $0x164] sm:$0xf]
      %v530 = vld [vmem:[%s1 + $0x168] sm:$0xf]
      %v531 = vld [vmem:[%s1 + $0x16c] sm:$0xf]
      %v532 = vld [vmem:[%s1 + $0x170] sm:$0xf]
      %v533 = vld [vmem:[%s1 + $0x174] sm:$0xf]
      %v534 = vld [vmem:[%s1 + $0x178] sm:$0xf]
      %v535 = vld [vmem:[%s1 + $0x17c] sm:$0xf]
      %v536 = vld [vmem:[%s2] sm:$0x1]
      %v538 = vlaneseq
      %v539 = vshrl.u32 %v538, 7
      %v540 = vsub.s32 0, %v539
      %v541 = vrot.slane %v536, %v540
      %v639 = vunpack.c.l.b16 %v344
      %v640 = vunpack.c.h.b16 %v344
      %v641 = vunpack.c.l.b16 %v345
      %v642 = vunpack.c.h.b16 %v345
      %v643 = vunpack.c.l.b16 %v346
      %v644 = vunpack.c.h.b16 %v346
      %v645 = vunpack.c.l.b16 %v347
      %v646 = vunpack.c.h.b16 %v347
      %v647 = vunpack.c.l.b16 %v348
      %v648 = vunpack.c.h.b16 %v348
      %v649 = vunpack.c.l.b16 %v349
      %v650 = vunpack.c.h.b16 %v349
      %v651 = vunpack.c.l.b16 %v350
      %v652 = vunpack.c.h.b16 %v350
      %v653 = vunpack.c.l.b16 %v351
      %v654 = vunpack.c.h.b16 %v351
      %v655 = vunpack.c.l.b16 %v352
      %v656 = vunpack.c.h.b16 %v352
      %v657 = vunpack.c.l.b16 %v353
      %v658 = vunpack.c.h.b16 %v353
      %v659 = vunpack.c.l.b16 %v354
      %v660 = vunpack.c.h.b16 %v354
      %v661 = vunpack.c.l.b16 %v355
      %v662 = vunpack.c.h.b16 %v355
      %v663 = vunpack.c.l.b16 %v356
      %v664 = vunpack.c.h.b16 %v356
      %v665 = vunpack.c.l.b16 %v357
      %v666 = vunpack.c.h.b16 %v357
      %v667 = vunpack.c.l.b16 %v358
      %v668 = vunpack.c.h.b16 %v358
      %v669 = vunpack.c.l.b16 %v359
      %v670 = vunpack.c.h.b16 %v359
      %v671 = vunpack.c.l.b16 %v360
      %v672 = vunpack.c.h.b16 %v360
      %v673 = vunpack.c.l.b16 %v361
      %v674 = vunpack.c.h.b16 %v361
      %v675 = vunpack.c.l.b16 %v362
      %v676 = vunpack.c.h.b16 %v362
      %v677 = vunpack.c.l.b16 %v363
      %v678 = vunpack.c.h.b16 %v363
      %v679 = vunpack.c.l.b16 %v364
      %v680 = vunpack.c.h.b16 %v364
      %v681 = vunpack.c.l.b16 %v365
      %v682 = vunpack.c.h.b16 %v365
      %v683 = vunpack.c.l.b16 %v366
      %v684 = vunpack.c.h.b16 %v366
      %v685 = vunpack.c.l.b16 %v367
      %v686 = vunpack.c.h.b16 %v367
      %v687 = vunpack.c.l.b16 %v368
      %v688 = vunpack.c.h.b16 %v368
      %v689 = vunpack.c.l.b16 %v369
      %v690 = vunpack.c.h.b16 %v369
      %v691 = vunpack.c.l.b16 %v370
      %v692 = vunpack.c.h.b16 %v370
      %v693 = vunpack.c.l.b16 %v371
      %v694 = vunpack.c.h.b16 %v371
      %v695 = vunpack.c.l.b16 %v372
      %v696 = vunpack.c.h.b16 %v372
      %v697 = vunpack.c.l.b16 %v373
      %v698 = vunpack.c.h.b16 %v373
      %v699 = vunpack.c.l.b16 %v374
      %v700 = vunpack.c.h.b16 %v374
      %v701 = vunpack.c.l.b16 %v375
      %v702 = vunpack.c.h.b16 %v375
      %v703 = vunpack.c.l.b16 %v376
      %v704 = vunpack.c.h.b16 %v376
      %v705 = vunpack.c.l.b16 %v377
      %v706 = vunpack.c.h.b16 %v377
      %v707 = vunpack.c.l.b16 %v378
      %v708 = vunpack.c.h.b16 %v378
      %v709 = vunpack.c.l.b16 %v379
      %v710 = vunpack.c.h.b16 %v379
      %v711 = vunpack.c.l.b16 %v380
      %v712 = vunpack.c.h.b16 %v380
      %v713 = vunpack.c.l.b16 %v381
      %v714 = vunpack.c.h.b16 %v381
      %v715 = vunpack.c.l.b16 %v382
      %v716 = vunpack.c.h.b16 %v382
      %v717 = vunpack.c.l.b16 %v383
      %v718 = vunpack.c.h.b16 %v383
      %v719 = vunpack.c.l.b16 %v384
      %v720 = vunpack.c.h.b16 %v384
      %v721 = vunpack.c.l.b16 %v385
      %v722 = vunpack.c.h.b16 %v385
      %v723 = vunpack.c.l.b16 %v386
      %v724 = vunpack.c.h.b16 %v386
      %v725 = vunpack.c.l.b16 %v387
      %v726 = vunpack.c.h.b16 %v387
      %v727 = vunpack.c.l.b16 %v388
      %v728 = vunpack.c.h.b16 %v388
      %v729 = vunpack.c.l.b16 %v389
      %v730 = vunpack.c.h.b16 %v389
      %v731 = vunpack.c.l.b16 %v390
      %v732 = vunpack.c.h.b16 %v390
      %v733 = vunpack.c.l.b16 %v391
      %v734 = vunpack.c.h.b16 %v391
      %v735 = vunpack.c.l.b16 %v392
      %v736 = vunpack.c.h.b16 %v392
      %v737 = vunpack.c.l.b16 %v393
      %v738 = vunpack.c.h.b16 %v393
      %v739 = vunpack.c.l.b16 %v394
      %v740 = vunpack.c.h.b16 %v394
      %v741 = vunpack.c.l.b16 %v395
      %v742 = vunpack.c.h.b16 %v395
      %v743 = vunpack.c.l.b16 %v396
      %v744 = vunpack.c.h.b16 %v396
      %v745 = vunpack.c.l.b16 %v397
      %v746 = vunpack.c.h.b16 %v397
      %v747 = vunpack.c.l.b16 %v398
      %v748 = vunpack.c.h.b16 %v398
      %v749 = vunpack.c.l.b16 %v399
      %v750 = vunpack.c.h.b16 %v399
      %v751 = vunpack.c.l.b16 %v400
      %v752 = vunpack.c.h.b16 %v400
      %v753 = vunpack.c.l.b16 %v401
      %v754 = vunpack.c.h.b16 %v401
      %v755 = vunpack.c.l.b16 %v402
      %v756 = vunpack.c.h.b16 %v402
      %v757 = vunpack.c.l.b16 %v403
      %v758 = vunpack.c.h.b16 %v403
      %v759 = vunpack.c.l.b16 %v404
      %v760 = vunpack.c.h.b16 %v404
      %v761 = vunpack.c.l.b16 %v405
      %v762 = vunpack.c.h.b16 %v405
      %v763 = vunpack.c.l.b16 %v406
      %v764 = vunpack.c.h.b16 %v406
      %v765 = vunpack.c.l.b16 %v407
      %v766 = vunpack.c.h.b16 %v407
      %v767 = vunpack.c.l.b16 %v408
      %v768 = vunpack.c.h.b16 %v408
      %v769 = vunpack.c.l.b16 %v409
      %v770 = vunpack.c.h.b16 %v409
      %v771 = vunpack.c.l.b16 %v410
      %v772 = vunpack.c.h.b16 %v410
      %v773 = vunpack.c.l.b16 %v411
      %v774 = vunpack.c.h.b16 %v411
      %v775 = vunpack.c.l.b16 %v412
      %v776 = vunpack.c.h.b16 %v412
      %v777 = vunpack.c.l.b16 %v413
      %v778 = vunpack.c.h.b16 %v413
      %v779 = vunpack.c.l.b16 %v414
      %v780 = vunpack.c.h.b16 %v414
      %v781 = vunpack.c.l.b16 %v415
      %v782 = vunpack.c.h.b16 %v415
      %v783 = vunpack.c.l.b16 %v416
      %v784 = vunpack.c.h.b16 %v416
      %v785 = vunpack.c.l.b16 %v417
      %v786 = vunpack.c.h.b16 %v417
      %v787 = vunpack.c.l.b16 %v418
      %v788 = vunpack.c.h.b16 %v418
      %v789 = vunpack.c.l.b16 %v419
      %v790 = vunpack.c.h.b16 %v419
      %v791 = vunpack.c.l.b16 %v420
      %v792 = vunpack.c.h.b16 %v420
      %v793 = vunpack.c.l.b16 %v421
      %v794 = vunpack.c.h.b16 %v421
      %v795 = vunpack.c.l.b16 %v422
      %v796 = vunpack.c.h.b16 %v422
      %v797 = vunpack.c.l.b16 %v423
      %v798 = vunpack.c.h.b16 %v423
      %v799 = vunpack.c.l.b16 %v424
      %v800 = vunpack.c.h.b16 %v424
      %v801 = vunpack.c.l.b16 %v425
      %v802 = vunpack.c.h.b16 %v425
      %v803 = vunpack.c.l.b16 %v426
      %v804 = vunpack.c.h.b16 %v426
      %v805 = vunpack.c.l.b16 %v427
      %v806 = vunpack.c.h.b16 %v427
      %v807 = vunpack.c.l.b16 %v428
      %v808 = vunpack.c.h.b16 %v428
      %v809 = vunpack.c.l.b16 %v429
      %v810 = vunpack.c.h.b16 %v429
      %v811 = vunpack.c.l.b16 %v430
      %v812 = vunpack.c.h.b16 %v430
      %v813 = vunpack.c.l.b16 %v431
      %v814 = vunpack.c.h.b16 %v431
      %v815 = vunpack.c.l.b16 %v432
      %v816 = vunpack.c.h.b16 %v432
      %v817 = vunpack.c.l.b16 %v433
      %v818 = vunpack.c.h.b16 %v433
      %v819 = vunpack.c.l.b16 %v434
      %v820 = vunpack.c.h.b16 %v434
      %v821 = vunpack.c.l.b16 %v435
      %v822 = vunpack.c.h.b16 %v435
      %v823 = vunpack.c.l.b16 %v436
      %v824 = vunpack.c.h.b16 %v436
      %v825 = vunpack.c.l.b16 %v437
      %v826 = vunpack.c.h.b16 %v437
      %v827 = vunpack.c.l.b16 %v438
      %v828 = vunpack.c.h.b16 %v438
      %v829 = vunpack.c.l.b16 %v439
      %v830 = vunpack.c.h.b16 %v439
      %v831 = vpack.c.b16 %v645, %v639
      %v832 = vpack.c.b16 %v646, %v640
      %v833 = vpack.c.b16 %v647, %v641
      %v834 = vpack.c.b16 %v648, %v642
      %v835 = vpack.c.b16 %v649, %v643
      %v836 = vpack.c.b16 %v650, %v644
      %v837 = vpack.c.b16 %v657, %v651
      %v838 = vpack.c.b16 %v658, %v652
      %v839 = vpack.c.b16 %v659, %v653
      %v840 = vpack.c.b16 %v660, %v654
      %v841 = vpack.c.b16 %v661, %v655
      %v842 = vpack.c.b16 %v662, %v656
      %v843 = vpack.c.b16 %v669, %v663
      %v844 = vpack.c.b16 %v670, %v664
      %v845 = vpack.c.b16 %v671, %v665
      %v846 = vpack.c.b16 %v672, %v666
      %v847 = vpack.c.b16 %v673, %v667
      %v848 = vpack.c.b16 %v674, %v668
      %v849 = vpack.c.b16 %v681, %v675
      %v850 = vpack.c.b16 %v682, %v676
      %v851 = vpack.c.b16 %v683, %v677
      %v852 = vpack.c.b16 %v684, %v678
      %v853 = vpack.c.b16 %v685, %v679
      %v854 = vpack.c.b16 %v686, %v680
      %v855 = vpack.c.b16 %v693, %v687
      %v856 = vpack.c.b16 %v694, %v688
      %v857 = vpack.c.b16 %v695, %v689
      %v858 = vpack.c.b16 %v696, %v690
      %v859 = vpack.c.b16 %v697, %v691
      %v860 = vpack.c.b16 %v698, %v692
      %v861 = vpack.c.b16 %v705, %v699
      %v862 = vpack.c.b16 %v706, %v700
      %v863 = vpack.c.b16 %v707, %v701
      %v864 = vpack.c.b16 %v708, %v702
      %v865 = vpack.c.b16 %v709, %v703
      %v866 = vpack.c.b16 %v710, %v704
      %v867 = vpack.c.b16 %v717, %v711
      %v868 = vpack.c.b16 %v718, %v712
      %v869 = vpack.c.b16 %v719, %v713
      %v870 = vpack.c.b16 %v720, %v714
      %v871 = vpack.c.b16 %v721, %v715
      %v872 = vpack.c.b16 %v722, %v716
      %v873 = vpack.c.b16 %v729, %v723
      %v874 = vpack.c.b16 %v730, %v724
      %v875 = vpack.c.b16 %v731, %v725
      %v876 = vpack.c.b16 %v732, %v726
      %v877 = vpack.c.b16 %v733, %v727
      %v878 = vpack.c.b16 %v734, %v728
      %v879 = vpack.c.b16 %v741, %v735
      %v880 = vpack.c.b16 %v742, %v736
      %v881 = vpack.c.b16 %v743, %v737
      %v882 = vpack.c.b16 %v744, %v738
      %v883 = vpack.c.b16 %v745, %v739
      %v884 = vpack.c.b16 %v746, %v740
      %v885 = vpack.c.b16 %v753, %v747
      %v886 = vpack.c.b16 %v754, %v748
      %v887 = vpack.c.b16 %v755, %v749
      %v888 = vpack.c.b16 %v756, %v750
      %v889 = vpack.c.b16 %v757, %v751
      %v890 = vpack.c.b16 %v758, %v752
      %v891 = vpack.c.b16 %v765, %v759
      %v892 = vpack.c.b16 %v766, %v760
      %v893 = vpack.c.b16 %v767, %v761
      %v894 = vpack.c.b16 %v768, %v762
      %v895 = vpack.c.b16 %v769, %v763
      %v896 = vpack.c.b16 %v770, %v764
      %v897 = vpack.c.b16 %v777, %v771
      %v898 = vpack.c.b16 %v778, %v772
      %v899 = vpack.c.b16 %v779, %v773
      %v900 = vpack.c.b16 %v780, %v774
      %v901 = vpack.c.b16 %v781, %v775
      %v902 = vpack.c.b16 %v782, %v776
      %v903 = vpack.c.b16 %v789, %v783
      %v904 = vpack.c.b16 %v790, %v784
      %v905 = vpack.c.b16 %v791, %v785
      %v906 = vpack.c.b16 %v792, %v786
      %v907 = vpack.c.b16 %v793, %v787
      %v908 = vpack.c.b16 %v794, %v788
      %v909 = vpack.c.b16 %v801, %v795
      %v910 = vpack.c.b16 %v802, %v796
      %v911 = vpack.c.b16 %v803, %v797
      %v912 = vpack.c.b16 %v804, %v798
      %v913 = vpack.c.b16 %v805, %v799
      %v914 = vpack.c.b16 %v806, %v800
      %v915 = vpack.c.b16 %v813, %v807
      %v916 = vpack.c.b16 %v814, %v808
      %v917 = vpack.c.b16 %v815, %v809
      %v918 = vpack.c.b16 %v816, %v810
      %v919 = vpack.c.b16 %v817, %v811
      %v920 = vpack.c.b16 %v818, %v812
      %v921 = vpack.c.b16 %v825, %v819
      %v922 = vpack.c.b16 %v826, %v820
      %v923 = vpack.c.b16 %v827, %v821
      %v924 = vpack.c.b16 %v828, %v822
      %v925 = vpack.c.b16 %v829, %v823
      %v926 = vpack.c.b16 %v830, %v824
      %v1119 = vunpack.c.l.b16 %v440
      %v1120 = vunpack.c.l.b16 %v441
      %v1121 = vunpack.c.l.b16 %v442
      %v1122 = vunpack.c.l.b16 %v443
      %v1123 = vunpack.c.l.b16 %v444
      %v1124 = vunpack.c.l.b16 %v445
      %v1125 = vunpack.c.l.b16 %v446
      %v1126 = vunpack.c.l.b16 %v447
      %v1127 = vunpack.c.l.b16 %v448
      %v1128 = vunpack.c.l.b16 %v449
      %v1129 = vunpack.c.l.b16 %v450
      %v1130 = vunpack.c.l.b16 %v451
      %v1131 = vunpack.c.l.b16 %v452
      %v1132 = vunpack.c.l.b16 %v453
      %v1133 = vunpack.c.l.b16 %v454
      %v1134 = vunpack.c.l.b16 %v455
      %v1135 = vunpack.c.l.b16 %v456
      %v1136 = vunpack.c.l.b16 %v457
      %v1137 = vunpack.c.l.b16 %v458
      %v1138 = vunpack.c.l.b16 %v459
      %v1139 = vunpack.c.l.b16 %v460
      %v1140 = vunpack.c.l.b16 %v461
      %v1141 = vunpack.c.l.b16 %v462
      %v1142 = vunpack.c.l.b16 %v463
      %v1143 = vunpack.c.l.b16 %v464
      %v1144 = vunpack.c.l.b16 %v465
      %v1145 = vunpack.c.l.b16 %v466
      %v1146 = vunpack.c.l.b16 %v467
      %v1147 = vunpack.c.l.b16 %v468
      %v1148 = vunpack.c.l.b16 %v469
      %v1149 = vunpack.c.l.b16 %v470
      %v1150 = vunpack.c.l.b16 %v471
      %v1151 = vunpack.c.l.b16 %v472
      %v1152 = vunpack.c.l.b16 %v473
      %v1153 = vunpack.c.l.b16 %v474
      %v1154 = vunpack.c.l.b16 %v475
      %v1155 = vunpack.c.l.b16 %v476
      %v1156 = vunpack.c.l.b16 %v477
      %v1157 = vunpack.c.l.b16 %v478
      %v1158 = vunpack.c.l.b16 %v479
      %v1159 = vunpack.c.l.b16 %v480
      %v1160 = vunpack.c.l.b16 %v481
      %v1161 = vunpack.c.l.b16 %v482
      %v1162 = vunpack.c.l.b16 %v483
      %v1163 = vunpack.c.l.b16 %v484
      %v1164 = vunpack.c.l.b16 %v485
      %v1165 = vunpack.c.l.b16 %v486
      %v1166 = vunpack.c.l.b16 %v487
      %v1167 = vunpack.c.l.b16 %v488
      %v1168 = vunpack.c.l.b16 %v489
      %v1169 = vunpack.c.l.b16 %v490
      %v1170 = vunpack.c.l.b16 %v491
      %v1171 = vunpack.c.l.b16 %v492
      %v1172 = vunpack.c.l.b16 %v493
      %v1173 = vunpack.c.l.b16 %v494
      %v1174 = vunpack.c.l.b16 %v495
      %v1175 = vunpack.c.l.b16 %v496
      %v1176 = vunpack.c.l.b16 %v497
      %v1177 = vunpack.c.l.b16 %v498
      %v1178 = vunpack.c.l.b16 %v499
      %v1179 = vunpack.c.l.b16 %v500
      %v1180 = vunpack.c.l.b16 %v501
      %v1181 = vunpack.c.l.b16 %v502
      %v1182 = vunpack.c.l.b16 %v503
      %v1183 = vunpack.c.l.b16 %v504
      %v1184 = vunpack.c.l.b16 %v505
      %v1185 = vunpack.c.l.b16 %v506
      %v1186 = vunpack.c.l.b16 %v507
      %v1187 = vunpack.c.l.b16 %v508
      %v1188 = vunpack.c.l.b16 %v509
      %v1189 = vunpack.c.l.b16 %v510
      %v1190 = vunpack.c.l.b16 %v511
      %v1191 = vunpack.c.l.b16 %v512
      %v1192 = vunpack.c.l.b16 %v513
      %v1193 = vunpack.c.l.b16 %v514
      %v1194 = vunpack.c.l.b16 %v515
      %v1195 = vunpack.c.l.b16 %v516
      %v1196 = vunpack.c.l.b16 %v517
      %v1197 = vunpack.c.l.b16 %v518
      %v1198 = vunpack.c.l.b16 %v519
      %v1199 = vunpack.c.l.b16 %v520
      %v1200 = vunpack.c.l.b16 %v521
      %v1201 = vunpack.c.l.b16 %v522
      %v1202 = vunpack.c.l.b16 %v523
      %v1203 = vunpack.c.l.b16 %v524
      %v1204 = vunpack.c.l.b16 %v525
      %v1205 = vunpack.c.l.b16 %v526
      %v1206 = vunpack.c.l.b16 %v527
      %v1207 = vunpack.c.l.b16 %v528
      %v1208 = vunpack.c.l.b16 %v529
      %v1209 = vunpack.c.l.b16 %v530
      %v1210 = vunpack.c.l.b16 %v531
      %v1211 = vunpack.c.l.b16 %v532
      %v1212 = vunpack.c.l.b16 %v533
      %v1213 = vunpack.c.l.b16 %v534
      %v1214 = vunpack.c.l.b16 %v535
      %v1215 = vpack.c.b16 %v1120, %v1119
      %v1216 = vpack.c.b16 %v1122, %v1121
      %v1217 = vpack.c.b16 %v1124, %v1123
      %v1218 = vpack.c.b16 %v1126, %v1125
      %v1219 = vpack.c.b16 %v1128, %v1127
      %v1220 = vpack.c.b16 %v1130, %v1129
      %v1221 = vpack.c.b16 %v1132, %v1131
      %v1222 = vpack.c.b16 %v1134, %v1133
      %v1223 = vpack.c.b16 %v1136, %v1135
      %v1224 = vpack.c.b16 %v1138, %v1137
      %v1225 = vpack.c.b16 %v1140, %v1139
      %v1226 = vpack.c.b16 %v1142, %v1141
      %v1227 = vpack.c.b16 %v1144, %v1143
      %v1228 = vpack.c.b16 %v1146, %v1145
      %v1229 = vpack.c.b16 %v1148, %v1147
      %v1230 = vpack.c.b16 %v1150, %v1149
      %v1231 = vpack.c.b16 %v1152, %v1151
      %v1232 = vpack.c.b16 %v1154, %v1153
      %v1233 = vpack.c.b16 %v1156, %v1155
      %v1234 = vpack.c.b16 %v1158, %v1157
      %v1235 = vpack.c.b16 %v1160, %v1159
      %v1236 = vpack.c.b16 %v1162, %v1161
      %v1237 = vpack.c.b16 %v1164, %v1163
      %v1238 = vpack.c.b16 %v1166, %v1165
      %v1239 = vpack.c.b16 %v1168, %v1167
      %v1240 = vpack.c.b16 %v1170, %v1169
      %v1241 = vpack.c.b16 %v1172, %v1171
      %v1242 = vpack.c.b16 %v1174, %v1173
      %v1243 = vpack.c.b16 %v1176, %v1175
      %v1244 = vpack.c.b16 %v1178, %v1177
      %v1245 = vpack.c.b16 %v1180, %v1179
      %v1246 = vpack.c.b16 %v1182, %v1181
      %v1247 = vpack.c.b16 %v1184, %v1183
      %v1248 = vpack.c.b16 %v1186, %v1185
      %v1249 = vpack.c.b16 %v1188, %v1187
      %v1250 = vpack.c.b16 %v1190, %v1189
      %v1251 = vpack.c.b16 %v1192, %v1191
      %v1252 = vpack.c.b16 %v1194, %v1193
      %v1253 = vpack.c.b16 %v1196, %v1195
      %v1254 = vpack.c.b16 %v1198, %v1197
      %v1255 = vpack.c.b16 %v1200, %v1199
      %v1256 = vpack.c.b16 %v1202, %v1201
      %v1257 = vpack.c.b16 %v1204, %v1203
      %v1258 = vpack.c.b16 %v1206, %v1205
      %v1259 = vpack.c.b16 %v1208, %v1207
      %v1260 = vpack.c.b16 %v1210, %v1209
      %v1261 = vpack.c.b16 %v1212, %v1211
      %v1262 = vpack.c.b16 %v1214, %v1213
      %1311 = vmatprep.subr.bf16.mxu0 0
      %1312 = vmatpush1.bf16.msra.mxu0 %v1222
      %1313 = vmatprep.subr.bf16.mxu0 0
      %1314 = vmatpush1.bf16.msra.mxu0 %v1221
      %1315 = vmatprep.subr.bf16.mxu0 0
      %1316 = vmatpush1.bf16.msra.mxu0 %v1220
      %1317 = vmatprep.subr.bf16.mxu0 0
      %1318 = vmatpush1.bf16.msra.mxu0 %v1219
      %1319 = vmatprep.subr.bf16.mxu0 0
      %1320 = vmatpush1.bf16.msra.mxu0 %v1218
      %1321 = vmatprep.subr.bf16.mxu0 0
      %1322 = vmatpush1.bf16.msra.mxu0 %v1217
      %1323 = vmatprep.subr.bf16.mxu0 0
      %1324 = vmatpush1.bf16.msra.mxu0 %v1216
      %1325 = vmatprep.subr.bf16.mxu0 0
      %1326 = vmatpush1.bf16.msra.mxu0 %v1215
      %1327 = vmatprep.subr.bf16.mxu0 0
      %1328 = vmatpush2.bf16.msra.mxu0 %v1230
      %1329 = vmatprep.subr.bf16.mxu0 0
      %1330 = vmatpush2.bf16.msra.mxu0 %v1229
      %1331 = vmatprep.subr.bf16.mxu0 0
      %1332 = vmatpush2.bf16.msra.mxu0 %v1228
      %1333 = vmatprep.subr.bf16.mxu0 0
      %1334 = vmatpush2.bf16.msra.mxu0 %v1227
      %1335 = vmatprep.subr.bf16.mxu0 0
      %1336 = vmatpush2.bf16.msra.mxu0 %v1226
      %1337 = vmatprep.subr.bf16.mxu0 0
      %1338 = vmatpush2.bf16.msra.mxu0 %v1225
      %1339 = vmatprep.subr.bf16.mxu0 0
      %1340 = vmatpush2.bf16.msra.mxu0 %v1224
      %1341 = vmatprep.subr.bf16.mxu0 0
      %1342 = vmatpush2.bf16.msra.mxu0 %v1223
      %1343 = vmatprep.mubr.bf16.mxu0 %v832
      %1344 = vmatmul.mubr.bf16.gmra.mxu0 %v831
      %v1345 = vpop.f32.mrf.mxu0
      %v1346 = vadd.f32 %v541, %v1345
      %v1347 = vpop.f32.mrf.mxu0
      %v1348 = vpop.f32.mrf.mxu0
      %v1349 = vadd.f32 %v541, %v1348
      %v1350 = vpop.f32.mrf.mxu0
      %1351 = vmatprep.mubr.bf16.mxu0 %v838
      %1352 = vmatmul.mubr.bf16.gmra.mxu0 %v837
      %v1353 = vpop.f32.mrf.mxu0
      %v1354 = vadd.f32 %v541, %v1353
      %v1355 = vpop.f32.mrf.mxu0
      %v1356 = vpop.f32.mrf.mxu0
      %v1357 = vadd.f32 %v541, %v1356
      %v1358 = vpop.f32.mrf.mxu0
      %1359 = vmatprep.mubr.bf16.mxu0 %v844
      %1360 = vmatmul.mubr.bf16.gmra.mxu0 %v843
      %v1361 = vpop.f32.mrf.mxu0
      %v1362 = vadd.f32 %v541, %v1361
      %v1363 = vpop.f32.mrf.mxu0
      %v1364 = vpop.f32.mrf.mxu0
      %v1365 = vadd.f32 %v541, %v1364
      %v1366 = vpop.f32.mrf.mxu0
      %1367 = vmatprep.mubr.bf16.mxu0 %v850
      %1368 = vmatmul.mubr.bf16.gmra.mxu0 %v849
      %v1369 = vpop.f32.mrf.mxu0
      %v1370 = vadd.f32 %v541, %v1369
      %v1371 = vpop.f32.mrf.mxu0
      %v1372 = vpop.f32.mrf.mxu0
      %v1373 = vadd.f32 %v541, %v1372
      %v1374 = vpop.f32.mrf.mxu0
      %1375 = vmatprep.mubr.bf16.mxu0 %v856
      %1376 = vmatmul.mubr.bf16.gmra.mxu0 %v855
      %v1377 = vpop.f32.mrf.mxu0
      %v1378 = vadd.f32 %v541, %v1377
      %v1379 = vpop.f32.mrf.mxu0
      %v1380 = vpop.f32.mrf.mxu0
      %v1381 = vadd.f32 %v541, %v1380
      %v1382 = vpop.f32.mrf.mxu0
      %1383 = vmatprep.mubr.bf16.mxu0 %v862
      %1384 = vmatmul.mubr.bf16.gmra.mxu0 %v861
      %v1385 = vpop.f32.mrf.mxu0
      %v1386 = vadd.f32 %v541, %v1385
      %v1387 = vpop.f32.mrf.mxu0
      %v1388 = vpop.f32.mrf.mxu0
      %v1389 = vadd.f32 %v541, %v1388
      %v1390 = vpop.f32.mrf.mxu0
      %1391 = vmatprep.mubr.bf16.mxu0 %v868
      %1392 = vmatmul.mubr.bf16.gmra.mxu0 %v867
      %v1393 = vpop.f32.mrf.mxu0
      %v1394 = vadd.f32 %v541, %v1393
      %v1395 = vpop.f32.mrf.mxu0
      %v1396 = vpop.f32.mrf.mxu0
      %v1397 = vadd.f32 %v541, %v1396
      %v1398 = vpop.f32.mrf.mxu0
      %1399 = vmatprep.mubr.bf16.mxu0 %v874
      %1400 = vmatmul.mubr.bf16.gmra.mxu0 %v873
      %v1401 = vpop.f32.mrf.mxu0
      %v1402 = vadd.f32 %v541, %v1401
      %v1403 = vpop.f32.mrf.mxu0
      %v1404 = vpop.f32.mrf.mxu0
      %v1405 = vadd.f32 %v541, %v1404
      %v1406 = vpop.f32.mrf.mxu0
      %1407 = vmatprep.mubr.bf16.mxu0 %v880
      %1408 = vmatmul.mubr.bf16.gmra.mxu0 %v879
      %v1409 = vpop.f32.mrf.mxu0
      %v1410 = vadd.f32 %v541, %v1409
      %v1411 = vpop.f32.mrf.mxu0
      %v1412 = vpop.f32.mrf.mxu0
      %v1413 = vadd.f32 %v541, %v1412
      %v1414 = vpop.f32.mrf.mxu0
      %1415 = vmatprep.mubr.bf16.mxu0 %v886
      %1416 = vmatmul.mubr.bf16.gmra.mxu0 %v885
      %v1417 = vpop.f32.mrf.mxu0
      %v1418 = vadd.f32 %v541, %v1417
      %v1419 = vpop.f32.mrf.mxu0
      %v1420 = vpop.f32.mrf.mxu0
      %v1421 = vadd.f32 %v541, %v1420
      %v1422 = vpop.f32.mrf.mxu0
      %1423 = vmatprep.mubr.bf16.mxu0 %v892
      %1424 = vmatmul.mubr.bf16.gmra.mxu0 %v891
      %v1425 = vpop.f32.mrf.mxu0
      %v1426 = vadd.f32 %v541, %v1425
      %v1427 = vpop.f32.mrf.mxu0
      %v1428 = vpop.f32.mrf.mxu0
      %v1429 = vadd.f32 %v541, %v1428
      %v1430 = vpop.f32.mrf.mxu0
      %1431 = vmatprep.mubr.bf16.mxu0 %v898
      %1432 = vmatmul.mubr.bf16.gmra.mxu0 %v897
      %v1433 = vpop.f32.mrf.mxu0
      %v1434 = vadd.f32 %v541, %v1433
      %v1435 = vpop.f32.mrf.mxu0
      %v1436 = vpop.f32.mrf.mxu0
      %v1437 = vadd.f32 %v541, %v1436
      %v1438 = vpop.f32.mrf.mxu0
      %1439 = vmatprep.mubr.bf16.mxu0 %v904
      %1440 = vmatmul.mubr.bf16.gmra.mxu0 %v903
      %v1441 = vpop.f32.mrf.mxu0
      %v1442 = vadd.f32 %v541, %v1441
      %v1443 = vpop.f32.mrf.mxu0
      %v1444 = vpop.f32.mrf.mxu0
      %v1445 = vadd.f32 %v541, %v1444
      %v1446 = vpop.f32.mrf.mxu0
      %1447 = vmatprep.mubr.bf16.mxu0 %v910
      %1448 = vmatmul.mubr.bf16.gmra.mxu0 %v909
      %v1449 = vpop.f32.mrf.mxu0
      %v1450 = vadd.f32 %v541, %v1449
      %v1451 = vpop.f32.mrf.mxu0
      %v1452 = vpop.f32.mrf.mxu0
      %v1453 = vadd.f32 %v541, %v1452
      %v1454 = vpop.f32.mrf.mxu0
      %1455 = vmatprep.mubr.bf16.mxu0 %v916
      %1456 = vmatmul.mubr.bf16.gmra.mxu0 %v915
      %v1457 = vpop.f32.mrf.mxu0
      %v1458 = vadd.f32 %v541, %v1457
      %v1459 = vpop.f32.mrf.mxu0
      %v1460 = vpop.f32.mrf.mxu0
      %v1461 = vadd.f32 %v541, %v1460
      %v1462 = vpop.f32.mrf.mxu0
      %1463 = vmatprep.mubr.bf16.mxu0 %v922
      %1464 = vmatmul.mubr.bf16.gmra.mxu0 %v921
      %v1465 = vpop.f32.mrf.mxu0
      %v1466 = vadd.f32 %v541, %v1465
      %v1467 = vpop.f32.mrf.mxu0
      %v1468 = vpop.f32.mrf.mxu0
      %v1469 = vadd.f32 %v541, %v1468
      %v1470 = vpop.f32.mrf.mxu0
      %1471 = vdwg.mxu0
      %1472 = vmatprep.subr.bf16.mxu0 0
      %1473 = vmatpush1.bf16.msra.mxu0 %v1238
      %1474 = vmatprep.subr.bf16.mxu0 0
      %1475 = vmatpush1.bf16.msra.mxu0 %v1237
      %1476 = vmatprep.subr.bf16.mxu0 0
      %1477 = vmatpush1.bf16.msra.mxu0 %v1236
      %1478 = vmatprep.subr.bf16.mxu0 0
      %1479 = vmatpush1.bf16.msra.mxu0 %v1235
      %1480 = vmatprep.subr.bf16.mxu0 0
      %1481 = vmatpush1.bf16.msra.mxu0 %v1234
      %1482 = vmatprep.subr.bf16.mxu0 0
      %1483 = vmatpush1.bf16.msra.mxu0 %v1233
      %1484 = vmatprep.subr.bf16.mxu0 0
      %1485 = vmatpush1.bf16.msra.mxu0 %v1232
      %1486 = vmatprep.subr.bf16.mxu0 0
      %1487 = vmatpush1.bf16.msra.mxu0 %v1231
      %1488 = vmatprep.subr.bf16.mxu0 0
      %1489 = vmatpush2.bf16.msra.mxu0 %v1246
      %1490 = vmatprep.subr.bf16.mxu0 0
      %1491 = vmatpush2.bf16.msra.mxu0 %v1245
      %1492 = vmatprep.subr.bf16.mxu0 0
      %1493 = vmatpush2.bf16.msra.mxu0 %v1244
      %1494 = vmatprep.subr.bf16.mxu0 0
      %1495 = vmatpush2.bf16.msra.mxu0 %v1243
      %1496 = vmatprep.subr.bf16.mxu0 0
      %1497 = vmatpush2.bf16.msra.mxu0 %v1242
      %1498 = vmatprep.subr.bf16.mxu0 0
      %1499 = vmatpush2.bf16.msra.mxu0 %v1241
      %1500 = vmatprep.subr.bf16.mxu0 0
      %1501 = vmatpush2.bf16.msra.mxu0 %v1240
      %1502 = vmatprep.subr.bf16.mxu0 0
      %1503 = vmatpush2.bf16.msra.mxu0 %v1239
      %1504 = vmatprep.mubr.bf16.mxu0 %v834
      %1505 = vmatmul.mubr.bf16.gmra.mxu0 %v833
      %v1506 = vpop.f32.mrf.mxu0
      %v1507 = vadd.f32 %v1346, %v1506
      %v1508 = vpop.f32.mrf.mxu0
      %v1509 = vpop.f32.mrf.mxu0
      %v1510 = vadd.f32 %v1349, %v1509
      %v1511 = vpop.f32.mrf.mxu0
      %1512 = vmatprep.mubr.bf16.mxu0 %v840
      %1513 = vmatmul.mubr.bf16.gmra.mxu0 %v839
      %v1514 = vpop.f32.mrf.mxu0
      %v1515 = vadd.f32 %v1354, %v1514
      %v1516 = vpop.f32.mrf.mxu0
      %v1517 = vpop.f32.mrf.mxu0
      %v1518 = vadd.f32 %v1357, %v1517
      %v1519 = vpop.f32.mrf.mxu0
      %1520 = vmatprep.mubr.bf16.mxu0 %v846
      %1521 = vmatmul.mubr.bf16.gmra.mxu0 %v845
      %v1522 = vpop.f32.mrf.mxu0
      %v1523 = vadd.f32 %v1362, %v1522
      %v1524 = vpop.f32.mrf.mxu0
      %v1525 = vpop.f32.mrf.mxu0
      %v1526 = vadd.f32 %v1365, %v1525
      %v1527 = vpop.f32.mrf.mxu0
      %1528 = vmatprep.mubr.bf16.mxu0 %v852
      %1529 = vmatmul.mubr.bf16.gmra.mxu0 %v851
      %v1530 = vpop.f32.mrf.mxu0
      %v1531 = vadd.f32 %v1370, %v1530
      %v1532 = vpop.f32.mrf.mxu0
      %v1533 = vpop.f32.mrf.mxu0
      %v1534 = vadd.f32 %v1373, %v1533
      %v1535 = vpop.f32.mrf.mxu0
      %1536 = vmatprep.mubr.bf16.mxu0 %v858
      %1537 = vmatmul.mubr.bf16.gmra.mxu0 %v857
      %v1538 = vpop.f32.mrf.mxu0
      %v1539 = vadd.f32 %v1378, %v1538
      %v1540 = vpop.f32.mrf.mxu0
      %v1541 = vpop.f32.mrf.mxu0
      %v1542 = vadd.f32 %v1381, %v1541
      %v1543 = vpop.f32.mrf.mxu0
      %1544 = vmatprep.mubr.bf16.mxu0 %v864
      %1545 = vmatmul.mubr.bf16.gmra.mxu0 %v863
      %v1546 = vpop.f32.mrf.mxu0
      %v1547 = vadd.f32 %v1386, %v1546
      %v1548 = vpop.f32.mrf.mxu0
      %v1549 = vpop.f32.mrf.mxu0
      %v1550 = vadd.f32 %v1389, %v1549
      %v1551 = vpop.f32.mrf.mxu0
      %1552 = vmatprep.mubr.bf16.mxu0 %v870
      %1553 = vmatmul.mubr.bf16.gmra.mxu0 %v869
      %v1554 = vpop.f32.mrf.mxu0
      %v1555 = vadd.f32 %v1394, %v1554
      %v1556 = vpop.f32.mrf.mxu0
      %v1557 = vpop.f32.mrf.mxu0
      %v1558 = vadd.f32 %v1397, %v1557
      %v1559 = vpop.f32.mrf.mxu0
      %1560 = vmatprep.mubr.bf16.mxu0 %v876
      %1561 = vmatmul.mubr.bf16.gmra.mxu0 %v875
      %v1562 = vpop.f32.mrf.mxu0
      %v1563 = vadd.f32 %v1402, %v1562
      %v1564 = vpop.f32.mrf.mxu0
      %v1565 = vpop.f32.mrf.mxu0
      %v1566 = vadd.f32 %v1405, %v1565
      %v1567 = vpop.f32.mrf.mxu0
      %1568 = vmatprep.mubr.bf16.mxu0 %v882
      %1569 = vmatmul.mubr.bf16.gmra.mxu0 %v881
      %v1570 = vpop.f32.mrf.mxu0
      %v1571 = vadd.f32 %v1410, %v1570
      %v1572 = vpop.f32.mrf.mxu0
      %v1573 = vpop.f32.mrf.mxu0
      %v1574 = vadd.f32 %v1413, %v1573
      %v1575 = vpop.f32.mrf.mxu0
      %1576 = vmatprep.mubr.bf16.mxu0 %v888
      %1577 = vmatmul.mubr.bf16.gmra.mxu0 %v887
      %v1578 = vpop.f32.mrf.mxu0
      %v1579 = vadd.f32 %v1418, %v1578
      %v1580 = vpop.f32.mrf.mxu0
      %v1581 = vpop.f32.mrf.mxu0
      %v1582 = vadd.f32 %v1421, %v1581
      %v1583 = vpop.f32.mrf.mxu0
      %1584 = vmatprep.mubr.bf16.mxu0 %v894
      %1585 = vmatmul.mubr.bf16.gmra.mxu0 %v893
      %v1586 = vpop.f32.mrf.mxu0
      %v1587 = vadd.f32 %v1426, %v1586
      %v1588 = vpop.f32.mrf.mxu0
      %v1589 = vpop.f32.mrf.mxu0
      %v1590 = vadd.f32 %v1429, %v1589
      %v1591 = vpop.f32.mrf.mxu0
      %1592 = vmatprep.mubr.bf16.mxu0 %v900
      %1593 = vmatmul.mubr.bf16.gmra.mxu0 %v899
      %v1594 = vpop.f32.mrf.mxu0
      %v1595 = vadd.f32 %v1434, %v1594
      %v1596 = vpop.f32.mrf.mxu0
      %v1597 = vpop.f32.mrf.mxu0
      %v1598 = vadd.f32 %v1437, %v1597
      %v1599 = vpop.f32.mrf.mxu0
      %1600 = vmatprep.mubr.bf16.mxu0 %v906
      %1601 = vmatmul.mubr.bf16.gmra.mxu0 %v905
      %v1602 = vpop.f32.mrf.mxu0
      %v1603 = vadd.f32 %v1442, %v1602
      %v1604 = vpop.f32.mrf.mxu0
      %v1605 = vpop.f32.mrf.mxu0
      %v1606 = vadd.f32 %v1445, %v1605
      %v1607 = vpop.f32.mrf.mxu0
      %1608 = vmatprep.mubr.bf16.mxu0 %v912
      %1609 = vmatmul.mubr.bf16.gmra.mxu0 %v911
      %v1610 = vpop.f32.mrf.mxu0
      %v1611 = vadd.f32 %v1450, %v1610
      %v1612 = vpop.f32.mrf.mxu0
      %v1613 = vpop.f32.mrf.mxu0
      %v1614 = vadd.f32 %v1453, %v1613
      %v1615 = vpop.f32.mrf.mxu0
      %1616 = vmatprep.mubr.bf16.mxu0 %v918
      %1617 = vmatmul.mubr.bf16.gmra.mxu0 %v917
      %v1618 = vpop.f32.mrf.mxu0
      %v1619 = vadd.f32 %v1458, %v1618
      %v1620 = vpop.f32.mrf.mxu0
      %v1621 = vpop.f32.mrf.mxu0
      %v1622 = vadd.f32 %v1461, %v1621
      %v1623 = vpop.f32.mrf.mxu0
      %1624 = vmatprep.mubr.bf16.mxu0 %v924
      %1625 = vmatmul.mubr.bf16.gmra.mxu0 %v923
      %v1626 = vpop.f32.mrf.mxu0
      %v1627 = vadd.f32 %v1466, %v1626
      %v1628 = vpop.f32.mrf.mxu0
      %v1629 = vpop.f32.mrf.mxu0
      %v1630 = vadd.f32 %v1469, %v1629
      %v1631 = vpop.f32.mrf.mxu0
      %1632 = vdwg.mxu0
      %1633 = vmatprep.subr.bf16.mxu0 0
      %1634 = vmatpush1.bf16.msra.mxu0 %v1254
      %1635 = vmatprep.subr.bf16.mxu0 0
      %1636 = vmatpush1.bf16.msra.mxu0 %v1253
      %1637 = vmatprep.subr.bf16.mxu0 0
      %1638 = vmatpush1.bf16.msra.mxu0 %v1252
      %1639 = vmatprep.subr.bf16.mxu0 0
      %1640 = vmatpush1.bf16.msra.mxu0 %v1251
      %1641 = vmatprep.subr.bf16.mxu0 0
      %1642 = vmatpush1.bf16.msra.mxu0 %v1250
      %1643 = vmatprep.subr.bf16.mxu0 0
      %1644 = vmatpush1.bf16.msra.mxu0 %v1249
      %1645 = vmatprep.subr.bf16.mxu0 0
      %1646 = vmatpush1.bf16.msra.mxu0 %v1248
      %1647 = vmatprep.subr.bf16.mxu0 0
      %1648 = vmatpush1.bf16.msra.mxu0 %v1247
      %1649 = vmatprep.subr.bf16.mxu0 0
      %1650 = vmatpush2.bf16.msra.mxu0 %v1262
      %1651 = vmatprep.subr.bf16.mxu0 0
      %1652 = vmatpush2.bf16.msra.mxu0 %v1261
      %1653 = vmatprep.subr.bf16.mxu0 0
      %1654 = vmatpush2.bf16.msra.mxu0 %v1260
      %1655 = vmatprep.subr.bf16.mxu0 0
      %1656 = vmatpush2.bf16.msra.mxu0 %v1259
      %1657 = vmatprep.subr.bf16.mxu0 0
      %1658 = vmatpush2.bf16.msra.mxu0 %v1258
      %1659 = vmatprep.subr.bf16.mxu0 0
      %1660 = vmatpush2.bf16.msra.mxu0 %v1257
      %1661 = vmatprep.subr.bf16.mxu0 0
      %1662 = vmatpush2.bf16.msra.mxu0 %v1256
      %1663 = vmatprep.subr.bf16.mxu0 0
      %1664 = vmatpush2.bf16.msra.mxu0 %v1255
      %1665 = vmatprep.mubr.bf16.mxu0 %v836
      %1666 = vmatmul.mubr.bf16.gmra.mxu0 %v835
      %v1667 = vpop.f32.mrf.mxu0
      %v1668 = vadd.f32 %v1507, %v1667
      %v1669 = vpop.f32.mrf.mxu0
      %v1670 = vpop.f32.mrf.mxu0
      %v1671 = vadd.f32 %v1510, %v1670
      %v1672 = vpop.f32.mrf.mxu0
      %1673 = vmatprep.mubr.bf16.mxu0 %v842
      %1674 = vmatmul.mubr.bf16.gmra.mxu0 %v841
      %v1675 = vpop.f32.mrf.mxu0
      %v1676 = vadd.f32 %v1515, %v1675
      %v1677 = vpop.f32.mrf.mxu0
      %v1678 = vpop.f32.mrf.mxu0
      %v1679 = vadd.f32 %v1518, %v1678
      %v1680 = vpop.f32.mrf.mxu0
      %1681 = vmatprep.mubr.bf16.mxu0 %v848
      %1682 = vmatmul.mubr.bf16.gmra.mxu0 %v847
      %v1683 = vpop.f32.mrf.mxu0
      %v1684 = vadd.f32 %v1523, %v1683
      %v1685 = vpop.f32.mrf.mxu0
      %v1686 = vpop.f32.mrf.mxu0
      %v1687 = vadd.f32 %v1526, %v1686
      %v1688 = vpop.f32.mrf.mxu0
      %1689 = vmatprep.mubr.bf16.mxu0 %v854
      %1690 = vmatmul.mubr.bf16.gmra.mxu0 %v853
      %v1691 = vpop.f32.mrf.mxu0
      %v1692 = vadd.f32 %v1531, %v1691
      %v1693 = vpop.f32.mrf.mxu0
      %v1694 = vpop.f32.mrf.mxu0
      %v1695 = vadd.f32 %v1534, %v1694
      %v1696 = vpop.f32.mrf.mxu0
      %1697 = vmatprep.mubr.bf16.mxu0 %v860
      %1698 = vmatmul.mubr.bf16.gmra.mxu0 %v859
      %v1699 = vpop.f32.mrf.mxu0
      %v1700 = vadd.f32 %v1539, %v1699
      %v1701 = vpop.f32.mrf.mxu0
      %v1702 = vpop.f32.mrf.mxu0
      %v1703 = vadd.f32 %v1542, %v1702
      %v1704 = vpop.f32.mrf.mxu0
      %1705 = vmatprep.mubr.bf16.mxu0 %v866
      %1706 = vmatmul.mubr.bf16.gmra.mxu0 %v865
      %v1707 = vpop.f32.mrf.mxu0
      %v1708 = vadd.f32 %v1547, %v1707
      %v1709 = vpop.f32.mrf.mxu0
      %v1710 = vpop.f32.mrf.mxu0
      %v1711 = vadd.f32 %v1550, %v1710
      %v1712 = vpop.f32.mrf.mxu0
      %1713 = vmatprep.mubr.bf16.mxu0 %v872
      %1714 = vmatmul.mubr.bf16.gmra.mxu0 %v871
      %v1715 = vpop.f32.mrf.mxu0
      %v1716 = vadd.f32 %v1555, %v1715
      %v1717 = vpop.f32.mrf.mxu0
      %v1718 = vpop.f32.mrf.mxu0
      %v1719 = vadd.f32 %v1558, %v1718
      %v1720 = vpop.f32.mrf.mxu0
      %1721 = vmatprep.mubr.bf16.mxu0 %v878
      %1722 = vmatmul.mubr.bf16.gmra.mxu0 %v877
      %v1723 = vpop.f32.mrf.mxu0
      %v1724 = vadd.f32 %v1563, %v1723
      %v1725 = vpop.f32.mrf.mxu0
      %v1726 = vpop.f32.mrf.mxu0
      %v1727 = vadd.f32 %v1566, %v1726
      %v1728 = vpop.f32.mrf.mxu0
      %1729 = vmatprep.mubr.bf16.mxu0 %v884
      %1730 = vmatmul.mubr.bf16.gmra.mxu0 %v883
      %v1731 = vpop.f32.mrf.mxu0
      %v1732 = vadd.f32 %v1571, %v1731
      %v1733 = vpop.f32.mrf.mxu0
      %v1734 = vpop.f32.mrf.mxu0
      %v1735 = vadd.f32 %v1574, %v1734
      %v1736 = vpop.f32.mrf.mxu0
      %1737 = vmatprep.mubr.bf16.mxu0 %v890
      %1738 = vmatmul.mubr.bf16.gmra.mxu0 %v889
      %v1739 = vpop.f32.mrf.mxu0
      %v1740 = vadd.f32 %v1579, %v1739
      %v1741 = vpop.f32.mrf.mxu0
      %v1742 = vpop.f32.mrf.mxu0
      %v1743 = vadd.f32 %v1582, %v1742
      %v1744 = vpop.f32.mrf.mxu0
      %1745 = vmatprep.mubr.bf16.mxu0 %v896
      %1746 = vmatmul.mubr.bf16.gmra.mxu0 %v895
      %v1747 = vpop.f32.mrf.mxu0
      %v1748 = vadd.f32 %v1587, %v1747
      %v1749 = vpop.f32.mrf.mxu0
      %v1750 = vpop.f32.mrf.mxu0
      %v1751 = vadd.f32 %v1590, %v1750
      %v1752 = vpop.f32.mrf.mxu0
      %1753 = vmatprep.mubr.bf16.mxu0 %v902
      %1754 = vmatmul.mubr.bf16.gmra.mxu0 %v901
      %v1755 = vpop.f32.mrf.mxu0
      %v1756 = vadd.f32 %v1595, %v1755
      %v1757 = vpop.f32.mrf.mxu0
      %v1758 = vpop.f32.mrf.mxu0
      %v1759 = vadd.f32 %v1598, %v1758
      %v1760 = vpop.f32.mrf.mxu0
      %1761 = vmatprep.mubr.bf16.mxu0 %v908
      %1762 = vmatmul.mubr.bf16.gmra.mxu0 %v907
      %v1763 = vpop.f32.mrf.mxu0
      %v1764 = vadd.f32 %v1603, %v1763
      %v1765 = vpop.f32.mrf.mxu0
      %v1766 = vpop.f32.mrf.mxu0
      %v1767 = vadd.f32 %v1606, %v1766
      %v1768 = vpop.f32.mrf.mxu0
      %1769 = vmatprep.mubr.bf16.mxu0 %v914
      %1770 = vmatmul.mubr.bf16.gmra.mxu0 %v913
      %v1771 = vpop.f32.mrf.mxu0
      %v1772 = vadd.f32 %v1611, %v1771
      %v1773 = vpop.f32.mrf.mxu0
      %v1774 = vpop.f32.mrf.mxu0
      %v1775 = vadd.f32 %v1614, %v1774
      %v1776 = vpop.f32.mrf.mxu0
      %1777 = vmatprep.mubr.bf16.mxu0 %v920
      %1778 = vmatmul.mubr.bf16.gmra.mxu0 %v919
      %v1779 = vpop.f32.mrf.mxu0
      %v1780 = vadd.f32 %v1619, %v1779
      %v1781 = vpop.f32.mrf.mxu0
      %v1782 = vpop.f32.mrf.mxu0
      %v1783 = vadd.f32 %v1622, %v1782
      %v1784 = vpop.f32.mrf.mxu0
      %1785 = vmatprep.mubr.bf16.mxu0 %v926
      %1786 = vmatmul.mubr.bf16.gmra.mxu0 %v925
      %v1787 = vpop.f32.mrf.mxu0
      %v1788 = vadd.f32 %v1627, %v1787
      %v1789 = vpop.f32.mrf.mxu0
      %v1790 = vpop.f32.mrf.mxu0
      %v1791 = vadd.f32 %v1630, %v1790
      %v1792 = vpop.f32.mrf.mxu0
      %1793 = vdwg.mxu0
      %v1794 = vmul.f32 %v1668, %v1668
      %v1795 = vmul.f32 %v1671, %v1671
      %v1796 = vmul.f32 %v1676, %v1676
      %v1797 = vmul.f32 %v1679, %v1679
      %v1798 = vmul.f32 %v1684, %v1684
      %v1799 = vmul.f32 %v1687, %v1687
      %v1800 = vmul.f32 %v1692, %v1692
      %v1801 = vmul.f32 %v1695, %v1695
      %v1802 = vmul.f32 %v1700, %v1700
      %v1803 = vmul.f32 %v1703, %v1703
      %v1804 = vmul.f32 %v1708, %v1708
      %v1805 = vmul.f32 %v1711, %v1711
      %v1806 = vmul.f32 %v1716, %v1716
      %v1807 = vmul.f32 %v1719, %v1719
      %v1808 = vmul.f32 %v1724, %v1724
      %v1809 = vmul.f32 %v1727, %v1727
      %v1810 = vmul.f32 %v1732, %v1732
      %v1811 = vmul.f32 %v1735, %v1735
      %v1812 = vmul.f32 %v1740, %v1740
      %v1813 = vmul.f32 %v1743, %v1743
      %v1814 = vmul.f32 %v1748, %v1748
      %v1815 = vmul.f32 %v1751, %v1751
      %v1816 = vmul.f32 %v1756, %v1756
      %v1817 = vmul.f32 %v1759, %v1759
      %v1818 = vmul.f32 %v1764, %v1764
      %v1819 = vmul.f32 %v1767, %v1767
      %v1820 = vmul.f32 %v1772, %v1772
      %v1821 = vmul.f32 %v1775, %v1775
      %v1822 = vmul.f32 %v1780, %v1780
      %v1823 = vmul.f32 %v1783, %v1783
      %v1824 = vmul.f32 %v1788, %v1788
      %v1825 = vmul.f32 %v1791, %v1791
      %vm1826 = vcmask 64512
      %v1827 = vsel %vm1826, %v1794, 0.0
      %1828 = vadd.xlane.f32.xlu0 %v1827
      %v1829 = vpop.xlane.xlu0 %1828
      %v1830 = vsel %vm1826, %v1795, 0.0
      %1831 = vadd.xlane.f32.xlu0 %v1830
      %v1832 = vpop.xlane.xlu0 %1831
      %v1833 = vsel %vm1826, %v1796, 0.0
      %1834 = vadd.xlane.f32.xlu0 %v1833
      %v1835 = vpop.xlane.xlu0 %1834
      %v1836 = vsel %vm1826, %v1797, 0.0
      %1837 = vadd.xlane.f32.xlu0 %v1836
      %v1838 = vpop.xlane.xlu0 %1837
      %v1839 = vsel %vm1826, %v1798, 0.0
      %1840 = vadd.xlane.f32.xlu0 %v1839
      %v1841 = vpop.xlane.xlu0 %1840
      %v1842 = vsel %vm1826, %v1799, 0.0
      %1843 = vadd.xlane.f32.xlu0 %v1842
      %v1844 = vpop.xlane.xlu0 %1843
      %v1845 = vsel %vm1826, %v1800, 0.0
      %1846 = vadd.xlane.f32.xlu0 %v1845
      %v1847 = vpop.xlane.xlu0 %1846
      %v1848 = vsel %vm1826, %v1801, 0.0
      %1849 = vadd.xlane.f32.xlu0 %v1848
      %v1850 = vpop.xlane.xlu0 %1849
      %v1851 = vsel %vm1826, %v1802, 0.0
      %1852 = vadd.xlane.f32.xlu0 %v1851
      %v1853 = vpop.xlane.xlu0 %1852
      %v1854 = vsel %vm1826, %v1803, 0.0
      %1855 = vadd.xlane.f32.xlu0 %v1854
      %v1856 = vpop.xlane.xlu0 %1855
      %v1857 = vsel %vm1826, %v1804, 0.0
      %1858 = vadd.xlane.f32.xlu0 %v1857
      %v1859 = vpop.xlane.xlu0 %1858
      %v1860 = vsel %vm1826, %v1805, 0.0
      %1861 = vadd.xlane.f32.xlu0 %v1860
      %v1862 = vpop.xlane.xlu0 %1861
      %v1863 = vsel %vm1826, %v1806, 0.0
      %1864 = vadd.xlane.f32.xlu0 %v1863
      %v1865 = vpop.xlane.xlu0 %1864
      %v1866 = vsel %vm1826, %v1807, 0.0
      %1867 = vadd.xlane.f32.xlu0 %v1866
      %v1868 = vpop.xlane.xlu0 %1867
      %v1869 = vsel %vm1826, %v1808, 0.0
      %1870 = vadd.xlane.f32.xlu0 %v1869
      %v1871 = vpop.xlane.xlu0 %1870
      %v1872 = vsel %vm1826, %v1809, 0.0
      %1873 = vadd.xlane.f32.xlu0 %v1872
      %v1874 = vpop.xlane.xlu0 %1873
      %v1875 = vsel %vm1826, %v1810, 0.0
      %1876 = vadd.xlane.f32.xlu0 %v1875
      %v1877 = vpop.xlane.xlu0 %1876
      %v1878 = vsel %vm1826, %v1811, 0.0
      %1879 = vadd.xlane.f32.xlu0 %v1878
      %v1880 = vpop.xlane.xlu0 %1879
      %v1881 = vsel %vm1826, %v1812, 0.0
      %1882 = vadd.xlane.f32.xlu0 %v1881
      %v1883 = vpop.xlane.xlu0 %1882
      %v1884 = vsel %vm1826, %v1813, 0.0
      %1885 = vadd.xlane.f32.xlu0 %v1884
      %v1886 = vpop.xlane.xlu0 %1885
      %v1887 = vsel %vm1826, %v1814, 0.0
      %1888 = vadd.xlane.f32.xlu0 %v1887
      %v1889 = vpop.xlane.xlu0 %1888
      %v1890 = vsel %vm1826, %v1815, 0.0
      %1891 = vadd.xlane.f32.xlu0 %v1890
      %v1892 = vpop.xlane.xlu0 %1891
      %v1893 = vsel %vm1826, %v1816, 0.0
      %1894 = vadd.xlane.f32.xlu0 %v1893
      %v1895 = vpop.xlane.xlu0 %1894
      %v1896 = vsel %vm1826, %v1817, 0.0
      %1897 = vadd.xlane.f32.xlu0 %v1896
      %v1898 = vpop.xlane.xlu0 %1897
      %v1899 = vsel %vm1826, %v1818, 0.0
      %1900 = vadd.xlane.f32.xlu0 %v1899
      %v1901 = vpop.xlane.xlu0 %1900
      %v1902 = vsel %vm1826, %v1819, 0.0
      %1903 = vadd.xlane.f32.xlu0 %v1902
      %v1904 = vpop.xlane.xlu0 %1903
      %v1905 = vsel %vm1826, %v1820, 0.0
      %1906 = vadd.xlane.f32.xlu0 %v1905
      %v1907 = vpop.xlane.xlu0 %1906
      %v1908 = vsel %vm1826, %v1821, 0.0
      %1909 = vadd.xlane.f32.xlu0 %v1908
      %v1910 = vpop.xlane.xlu0 %1909
      %v1911 = vsel %vm1826, %v1822, 0.0
      %1912 = vadd.xlane.f32.xlu0 %v1911
      %v1913 = vpop.xlane.xlu0 %1912
      %v1914 = vsel %vm1826, %v1823, 0.0
      %1915 = vadd.xlane.f32.xlu0 %v1914
      %v1916 = vpop.xlane.xlu0 %1915
      %v1917 = vsel %vm1826, %v1824, 0.0
      %1918 = vadd.xlane.f32.xlu0 %v1917
      %v1919 = vpop.xlane.xlu0 %1918
      %v1920 = vsel %vm1826, %v1825, 0.0
      %1921 = vadd.xlane.f32.xlu0 %v1920
      %v1922 = vpop.xlane.xlu0 %1921
      %v1923 = vadd.f32 %v1829, 1e-12
      %v1924 = vadd.f32 %v1832, 1e-12
      %v1925 = vadd.f32 %v1835, 1e-12
      %v1926 = vadd.f32 %v1838, 1e-12
      %v1927 = vadd.f32 %v1841, 1e-12
      %v1928 = vadd.f32 %v1844, 1e-12
      %v1929 = vadd.f32 %v1847, 1e-12
      %v1930 = vadd.f32 %v1850, 1e-12
      %v1931 = vadd.f32 %v1853, 1e-12
      %v1932 = vadd.f32 %v1856, 1e-12
      %v1933 = vadd.f32 %v1859, 1e-12
      %v1934 = vadd.f32 %v1862, 1e-12
      %v1935 = vadd.f32 %v1865, 1e-12
      %v1936 = vadd.f32 %v1868, 1e-12
      %v1937 = vadd.f32 %v1871, 1e-12
      %v1938 = vadd.f32 %v1874, 1e-12
      %v1939 = vadd.f32 %v1877, 1e-12
      %v1940 = vadd.f32 %v1880, 1e-12
      %v1941 = vadd.f32 %v1883, 1e-12
      %v1942 = vadd.f32 %v1886, 1e-12
      %v1943 = vadd.f32 %v1889, 1e-12
      %v1944 = vadd.f32 %v1892, 1e-12
      %v1945 = vadd.f32 %v1895, 1e-12
      %v1946 = vadd.f32 %v1898, 1e-12
      %v1947 = vadd.f32 %v1901, 1e-12
      %v1948 = vadd.f32 %v1904, 1e-12
      %v1949 = vadd.f32 %v1907, 1e-12
      %v1950 = vadd.f32 %v1910, 1e-12
      %v1951 = vadd.f32 %v1913, 1e-12
      %v1952 = vadd.f32 %v1916, 1e-12
      %v1953 = vadd.f32 %v1919, 1e-12
      %v1954 = vadd.f32 %v1922, 1e-12
      %v1955 = vrsqrt.pop %v1923
      %v1956 = vrsqrt.pop %v1924
      %v1957 = vrsqrt.pop %v1925
      %v1958 = vrsqrt.pop %v1926
      %v1959 = vrsqrt.pop %v1927
      %v1960 = vrsqrt.pop %v1928
      %v1961 = vrsqrt.pop %v1929
      %v1962 = vrsqrt.pop %v1930
      %v1963 = vrsqrt.pop %v1931
      %v1964 = vrsqrt.pop %v1932
      %v1965 = vrsqrt.pop %v1933
      %v1966 = vrsqrt.pop %v1934
      %v1967 = vrsqrt.pop %v1935
      %v1968 = vrsqrt.pop %v1936
      %v1969 = vrsqrt.pop %v1937
      %v1970 = vrsqrt.pop %v1938
      %v1971 = vrsqrt.pop %v1939
      %v1972 = vrsqrt.pop %v1940
      %v1973 = vrsqrt.pop %v1941
      %v1974 = vrsqrt.pop %v1942
      %v1975 = vrsqrt.pop %v1943
      %v1976 = vrsqrt.pop %v1944
      %v1977 = vrsqrt.pop %v1945
      %v1978 = vrsqrt.pop %v1946
      %v1979 = vrsqrt.pop %v1947
      %v1980 = vrsqrt.pop %v1948
      %v1981 = vrsqrt.pop %v1949
      %v1982 = vrsqrt.pop %v1950
      %v1983 = vrsqrt.pop %v1951
      %v1984 = vrsqrt.pop %v1952
      %v1985 = vrsqrt.pop %v1953
      %v1986 = vrsqrt.pop %v1954
      %v1987 = vmul.f32 %v1668, %v1955
      %v1988 = vmul.f32 %v1671, %v1956
      %v1989 = vmul.f32 %v1676, %v1957
      %v1990 = vmul.f32 %v1679, %v1958
      %v1991 = vmul.f32 %v1684, %v1959
      %v1992 = vmul.f32 %v1687, %v1960
      %v1993 = vmul.f32 %v1692, %v1961
      %v1994 = vmul.f32 %v1695, %v1962
      %v1995 = vmul.f32 %v1700, %v1963
      %v1996 = vmul.f32 %v1703, %v1964
      %v1997 = vmul.f32 %v1708, %v1965
      %v1998 = vmul.f32 %v1711, %v1966
      %v1999 = vmul.f32 %v1716, %v1967
      %v2000 = vmul.f32 %v1719, %v1968
      %v2001 = vmul.f32 %v1724, %v1969
      %v2002 = vmul.f32 %v1727, %v1970
      %v2003 = vmul.f32 %v1732, %v1971
      %v2004 = vmul.f32 %v1735, %v1972
      %v2005 = vmul.f32 %v1740, %v1973
      %v2006 = vmul.f32 %v1743, %v1974
      %v2007 = vmul.f32 %v1748, %v1975
      %v2008 = vmul.f32 %v1751, %v1976
      %v2009 = vmul.f32 %v1756, %v1977
      %v2010 = vmul.f32 %v1759, %v1978
      %v2011 = vmul.f32 %v1764, %v1979
      %v2012 = vmul.f32 %v1767, %v1980
      %v2013 = vmul.f32 %v1772, %v1981
      %v2014 = vmul.f32 %v1775, %v1982
      %v2015 = vmul.f32 %v1780, %v1983
      %v2016 = vmul.f32 %v1783, %v1984
      %v2017 = vmul.f32 %v1788, %v1985
      %v2018 = vmul.f32 %v1791, %v1986
      %v2019 = vpack.c.bf16 %v1988, %v1987
      %v2020 = vpack.c.bf16 %v1990, %v1989
      %v2021 = vpack.c.bf16 %v1992, %v1991
      %v2022 = vpack.c.bf16 %v1994, %v1993
      %v2023 = vpack.c.bf16 %v1996, %v1995
      %v2024 = vpack.c.bf16 %v1998, %v1997
      %v2025 = vpack.c.bf16 %v2000, %v1999
      %v2026 = vpack.c.bf16 %v2002, %v2001
      %v2027 = vpack.c.bf16 %v2004, %v2003
      %v2028 = vpack.c.bf16 %v2006, %v2005
      %v2029 = vpack.c.bf16 %v2008, %v2007
      %v2030 = vpack.c.bf16 %v2010, %v2009
      %v2031 = vpack.c.bf16 %v2012, %v2011
      %v2032 = vpack.c.bf16 %v2014, %v2013
      %v2033 = vpack.c.bf16 %v2016, %v2015
      %v2034 = vpack.c.bf16 %v2018, %v2017
      %v2035 = vld [vmem:[%s5] sm:$0x3f]
      %v2036 = vlaneseq
      %v2037 = vand.u32 %v2036, 127
      %v2038 = vadd.s32 %v2037, 128
      loop: start=0, step=1, limit=4
      $region45: #{vq_model_forward.1} parent=43 // loop_pre_header
        _
      $region46: #{vq_model_forward.1} parent=43 // loop_header
        %s2040 = sphi 0, %s2044
        %p2041 = scmp.ge.s32.totalorder %s2040, 4
        %v2045 = vphi -inf, %v6149
        %v2046 = vphi -inf, %v6150
        %v2047 = vphi -inf, %v6151
        %v2048 = vphi -inf, %v6152
        %v2049 = vphi -inf, %v6153
        %v2050 = vphi -inf, %v6154
        %v2051 = vphi -inf, %v6155
        %v2052 = vphi -inf, %v6156
        %v2053 = vphi -inf, %v6157
        %v2054 = vphi -inf, %v6158
        %v2055 = vphi -inf, %v6159
        %v2056 = vphi -inf, %v6160
        %v2057 = vphi -inf, %v6161
        %v2058 = vphi -inf, %v6162
        %v2059 = vphi -inf, %v6163
        %v2060 = vphi -inf, %v6164
        %v2061 = vphi -inf, %v6165
        %v2062 = vphi -inf, %v6166
        %v2063 = vphi -inf, %v6167
        %v2064 = vphi -inf, %v6168
        %v2065 = vphi -inf, %v6169
        %v2066 = vphi -inf, %v6170
        %v2067 = vphi -inf, %v6171
        %v2068 = vphi -inf, %v6172
        %v2069 = vphi -inf, %v6173
        %v2070 = vphi -inf, %v6174
        %v2071 = vphi -inf, %v6175
        %v2072 = vphi -inf, %v6176
        %v2073 = vphi -inf, %v6177
        %v2074 = vphi -inf, %v6178
        %v2075 = vphi -inf, %v6179
        %v2076 = vphi -inf, %v6180
        %v2077 = vphi 0, %v6117
        %v2078 = vphi 0, %v6118
        %v2079 = vphi 0, %v6119
        %v2080 = vphi 0, %v6120
        %v2081 = vphi 0, %v6121
        %v2082 = vphi 0, %v6122
        %v2083 = vphi 0, %v6123
        %v2084 = vphi 0, %v6124
        %v2085 = vphi 0, %v6125
        %v2086 = vphi 0, %v6126
        %v2087 = vphi 0, %v6127
        %v2088 = vphi 0, %v6128
        %v2089 = vphi 0, %v6129
        %v2090 = vphi 0, %v6130
        %v2091 = vphi 0, %v6131
        %v2092 = vphi 0, %v6132
        %v2093 = vphi 0, %v6133
        %v2094 = vphi 0, %v6134
        %v2095 = vphi 0, %v6135
        %v2096 = vphi 0, %v6136
        %v2097 = vphi 0, %v6137
        %v2098 = vphi 0, %v6138
        %v2099 = vphi 0, %v6139
        %v2100 = vphi 0, %v6140
        %v2101 = vphi 0, %v6141
        %v2102 = vphi 0, %v6142
        %v2103 = vphi 0, %v6143
        %v2104 = vphi 0, %v6144
        %v2105 = vphi 0, %v6145
        %v2106 = vphi 0, %v6146
        %v2107 = vphi 0, %v6147
        %v2108 = vphi 0, %v6148
      $region47: #{vq_model_forward.1} parent=43 // loop_header_branch
        %2043 = sbr.rel (%p2041) target = $region51
      $region48: #{vq_model_forward.1} parent=43 // loop_body
        %s2109 = smul.u32 %s2040, 2
        %s2110 = smul.addr %s2109, 4
        %s2111 = scalar_lea.vmem %s3, %s2110
        %v2112 = vld [vmem:[%s2111] sm:$0xff]
        %v2114 = vunpack.c.l.b16 %v2112
        %v2115 = vunpack.c.h.b16 %v2112
        %v2116 = vpack.c.b16 %v2114, %v2114
        %v2117 = vpack.c.b16 %v2115, %v2115
        %v2119 = vsel %vm1826, %v2019, 0
        %v2122 = vsel %vm1826, %v2020, 0
        %v2125 = vsel %vm1826, %v2021, 0
        %v2128 = vsel %vm1826, %v2022, 0
        %v2131 = vsel %vm1826, %v2023, 0
        %v2134 = vsel %vm1826, %v2024, 0
        %v2137 = vsel %vm1826, %v2025, 0
        %v2140 = vsel %vm1826, %v2026, 0
        %v2143 = vsel %vm1826, %v2027, 0
        %v2146 = vsel %vm1826, %v2028, 0
        %v2149 = vsel %vm1826, %v2029, 0
        %v2152 = vsel %vm1826, %v2030, 0
        %v2155 = vsel %vm1826, %v2031, 0
        %v2158 = vsel %vm1826, %v2032, 0
        %v2161 = vsel %vm1826, %v2033, 0
        %v2164 = vsel %vm1826, %v2034, 0
        %vm2166 = vcmask 1043456
        %v2168 = vsel %vm2166, %v2116, 0
        %v2171 = vsel %vm2166, %v2117, 0
        %2173 = vmatprep.subr.bf16.mxu0 0
        %2174 = vmatpush1.bf16.msra.mxu0 0
        %2175 = vmatprep.subr.bf16.mxu0 0
        %2176 = vmatpush1.bf16.msra.mxu0 0
        %2177 = vmatprep.subr.bf16.mxu0 0
        %2178 = vmatpush1.bf16.msra.mxu0 0
        %2179 = vmatprep.subr.bf16.mxu0 0
        %2180 = vmatpush1.bf16.msra.mxu0 0
        %2181 = vmatprep.subr.bf16.mxu0 0
        %2182 = vmatpush1.bf16.msra.mxu0 0
        %2183 = vmatprep.subr.bf16.mxu0 0
        %2184 = vmatpush1.bf16.msra.mxu0 0
        %2185 = vmatprep.subr.bf16.mxu0 0
        %2186 = vmatpush1.bf16.msra.mxu0 0
        %2187 = vmatprep.subr.bf16.mxu0 %v2171
        %2188 = vmatpush1.bf16.msra.mxu0 %v2168
        %2189 = vmatprep.subr.bf16.mxu0 0
        %2190 = vmatpush2.bf16.msra.mxu0 0
        %2191 = vmatprep.subr.bf16.mxu0 0
        %2192 = vmatpush2.bf16.msra.mxu0 0
        %2193 = vmatprep.subr.bf16.mxu0 0
        %2194 = vmatpush2.bf16.msra.mxu0 0
        %2195 = vmatprep.subr.bf16.mxu0 0
        %2196 = vmatpush2.bf16.msra.mxu0 0
        %2197 = vmatprep.subr.bf16.mxu0 0
        %2198 = vmatpush2.bf16.msra.mxu0 0
        %2199 = vmatprep.subr.bf16.mxu0 0
        %2200 = vmatpush2.bf16.msra.mxu0 0
        %2201 = vmatprep.subr.bf16.mxu0 0
        %2202 = vmatpush2.bf16.msra.mxu0 0
        %2203 = vmatprep.subr.bf16.mxu0 0
        %2204 = vmatpush2.bf16.msra.mxu0 0
        %2205 = vmatprep.mubr.bf16.mxu0 0
        %2206 = vmatmul.mubr.bf16.gmra.mxu0 %v2119
        %v2207 = vpop.f32.mrf.mxu0
        %v2208 = vadd.f32 0.0, %v2207
        %v2209 = vpop.f32.mrf.mxu0
        %v2210 = vadd.f32 0.0, %v2209
        %v2211 = vpop.f32.mrf.mxu0
        %v2212 = vadd.f32 0.0, %v2211
        %v2213 = vpop.f32.mrf.mxu0
        %v2214 = vadd.f32 0.0, %v2213
        %2215 = vmatprep.mubr.bf16.mxu0 0
        %2216 = vmatmul.mubr.bf16.gmra.mxu0 %v2122
        %v2217 = vpop.f32.mrf.mxu0
        %v2218 = vadd.f32 0.0, %v2217
        %v2219 = vpop.f32.mrf.mxu0
        %v2220 = vadd.f32 0.0, %v2219
        %v2221 = vpop.f32.mrf.mxu0
        %v2222 = vadd.f32 0.0, %v2221
        %v2223 = vpop.f32.mrf.mxu0
        %v2224 = vadd.f32 0.0, %v2223
        %2225 = vmatprep.mubr.bf16.mxu0 0
        %2226 = vmatmul.mubr.bf16.gmra.mxu0 %v2125
        %v2227 = vpop.f32.mrf.mxu0
        %v2228 = vadd.f32 0.0, %v2227
        %v2229 = vpop.f32.mrf.mxu0
        %v2230 = vadd.f32 0.0, %v2229
        %v2231 = vpop.f32.mrf.mxu0
        %v2232 = vadd.f32 0.0, %v2231
        %v2233 = vpop.f32.mrf.mxu0
        %v2234 = vadd.f32 0.0, %v2233
        %2235 = vmatprep.mubr.bf16.mxu0 0
        %2236 = vmatmul.mubr.bf16.gmra.mxu0 %v2128
        %v2237 = vpop.f32.mrf.mxu0
        %v2238 = vadd.f32 0.0, %v2237
        %v2239 = vpop.f32.mrf.mxu0
        %v2240 = vadd.f32 0.0, %v2239
        %v2241 = vpop.f32.mrf.mxu0
        %v2242 = vadd.f32 0.0, %v2241
        %v2243 = vpop.f32.mrf.mxu0
        %v2244 = vadd.f32 0.0, %v2243
        %2245 = vmatprep.mubr.bf16.mxu0 0
        %2246 = vmatmul.mubr.bf16.gmra.mxu0 %v2131
        %v2247 = vpop.f32.mrf.mxu0
        %v2248 = vadd.f32 0.0, %v2247
        %v2249 = vpop.f32.mrf.mxu0
        %v2250 = vadd.f32 0.0, %v2249
        %v2251 = vpop.f32.mrf.mxu0
        %v2252 = vadd.f32 0.0, %v2251
        %v2253 = vpop.f32.mrf.mxu0
        %v2254 = vadd.f32 0.0, %v2253
        %2255 = vmatprep.mubr.bf16.mxu0 0
        %2256 = vmatmul.mubr.bf16.gmra.mxu0 %v2134
        %v2257 = vpop.f32.mrf.mxu0
        %v2258 = vadd.f32 0.0, %v2257
        %v2259 = vpop.f32.mrf.mxu0
        %v2260 = vadd.f32 0.0, %v2259
        %v2261 = vpop.f32.mrf.mxu0
        %v2262 = vadd.f32 0.0, %v2261
        %v2263 = vpop.f32.mrf.mxu0
        %v2264 = vadd.f32 0.0, %v2263
        %2265 = vmatprep.mubr.bf16.mxu0 0
        %2266 = vmatmul.mubr.bf16.gmra.mxu0 %v2137
        %v2267 = vpop.f32.mrf.mxu0
        %v2268 = vadd.f32 0.0, %v2267
        %v2269 = vpop.f32.mrf.mxu0
        %v2270 = vadd.f32 0.0, %v2269
        %v2271 = vpop.f32.mrf.mxu0
        %v2272 = vadd.f32 0.0, %v2271
        %v2273 = vpop.f32.mrf.mxu0
        %v2274 = vadd.f32 0.0, %v2273
        %2275 = vmatprep.mubr.bf16.mxu0 0
        %2276 = vmatmul.mubr.bf16.gmra.mxu0 %v2140
        %v2277 = vpop.f32.mrf.mxu0
        %v2278 = vadd.f32 0.0, %v2277
        %v2279 = vpop.f32.mrf.mxu0
        %v2280 = vadd.f32 0.0, %v2279
        %v2281 = vpop.f32.mrf.mxu0
        %v2282 = vadd.f32 0.0, %v2281
        %v2283 = vpop.f32.mrf.mxu0
        %v2284 = vadd.f32 0.0, %v2283
        %2285 = vmatprep.mubr.bf16.mxu0 0
        %2286 = vmatmul.mubr.bf16.gmra.mxu0 %v2143
        %v2287 = vpop.f32.mrf.mxu0
        %v2288 = vadd.f32 0.0, %v2287
        %v2289 = vpop.f32.mrf.mxu0
        %v2290 = vadd.f32 0.0, %v2289
        %v2291 = vpop.f32.mrf.mxu0
        %v2292 = vadd.f32 0.0, %v2291
        %v2293 = vpop.f32.mrf.mxu0
        %v2294 = vadd.f32 0.0, %v2293
        %2295 = vmatprep.mubr.bf16.mxu0 0
        %2296 = vmatmul.mubr.bf16.gmra.mxu0 %v2146
        %v2297 = vpop.f32.mrf.mxu0
        %v2298 = vadd.f32 0.0, %v2297
        %v2299 = vpop.f32.mrf.mxu0
        %v2300 = vadd.f32 0.0, %v2299
        %v2301 = vpop.f32.mrf.mxu0
        %v2302 = vadd.f32 0.0, %v2301
        %v2303 = vpop.f32.mrf.mxu0
        %v2304 = vadd.f32 0.0, %v2303
        %2305 = vmatprep.mubr.bf16.mxu0 0
        %2306 = vmatmul.mubr.bf16.gmra.mxu0 %v2149
        %v2307 = vpop.f32.mrf.mxu0
        %v2308 = vadd.f32 0.0, %v2307
        %v2309 = vpop.f32.mrf.mxu0
        %v2310 = vadd.f32 0.0, %v2309
        %v2311 = vpop.f32.mrf.mxu0
        %v2312 = vadd.f32 0.0, %v2311
        %v2313 = vpop.f32.mrf.mxu0
        %v2314 = vadd.f32 0.0, %v2313
        %2315 = vmatprep.mubr.bf16.mxu0 0
        %2316 = vmatmul.mubr.bf16.gmra.mxu0 %v2152
        %v2317 = vpop.f32.mrf.mxu0
        %v2318 = vadd.f32 0.0, %v2317
        %v2319 = vpop.f32.mrf.mxu0
        %v2320 = vadd.f32 0.0, %v2319
        %v2321 = vpop.f32.mrf.mxu0
        %v2322 = vadd.f32 0.0, %v2321
        %v2323 = vpop.f32.mrf.mxu0
        %v2324 = vadd.f32 0.0, %v2323
        %2325 = vmatprep.mubr.bf16.mxu0 0
        %2326 = vmatmul.mubr.bf16.gmra.mxu0 %v2155
        %v2327 = vpop.f32.mrf.mxu0
        %v2328 = vadd.f32 0.0, %v2327
        %v2329 = vpop.f32.mrf.mxu0
        %v2330 = vadd.f32 0.0, %v2329
        %v2331 = vpop.f32.mrf.mxu0
        %v2332 = vadd.f32 0.0, %v2331
        %v2333 = vpop.f32.mrf.mxu0
        %v2334 = vadd.f32 0.0, %v2333
        %2335 = vmatprep.mubr.bf16.mxu0 0
        %2336 = vmatmul.mubr.bf16.gmra.mxu0 %v2158
        %v2337 = vpop.f32.mrf.mxu0
        %v2338 = vadd.f32 0.0, %v2337
        %v2339 = vpop.f32.mrf.mxu0
        %v2340 = vadd.f32 0.0, %v2339
        %v2341 = vpop.f32.mrf.mxu0
        %v2342 = vadd.f32 0.0, %v2341
        %v2343 = vpop.f32.mrf.mxu0
        %v2344 = vadd.f32 0.0, %v2343
        %2345 = vmatprep.mubr.bf16.mxu0 0
        %2346 = vmatmul.mubr.bf16.gmra.mxu0 %v2161
        %v2347 = vpop.f32.mrf.mxu0
        %v2348 = vadd.f32 0.0, %v2347
        %v2349 = vpop.f32.mrf.mxu0
        %v2350 = vadd.f32 0.0, %v2349
        %v2351 = vpop.f32.mrf.mxu0
        %v2352 = vadd.f32 0.0, %v2351
        %v2353 = vpop.f32.mrf.mxu0
        %v2354 = vadd.f32 0.0, %v2353
        %2355 = vmatprep.mubr.bf16.mxu0 0
        %2356 = vmatmul.mubr.bf16.gmra.mxu0 %v2164
        %v2357 = vpop.f32.mrf.mxu0
        %v2358 = vadd.f32 0.0, %v2357
        %v2359 = vpop.f32.mrf.mxu0
        %v2360 = vadd.f32 0.0, %v2359
        %v2361 = vpop.f32.mrf.mxu0
        %v2362 = vadd.f32 0.0, %v2361
        %v2363 = vpop.f32.mrf.mxu0
        %v2364 = vadd.f32 0.0, %v2363
        %2365 = vdwg.mxu0
        %v2366 = vmax.f32 %v2208, %v2210
        %2367 = vmax.xlane.f32.xlu0 %v2366
        %v2368 = vpop.xlane.xlu0 %2367
        %v2369 = vmax.f32 %v2212, %v2214
        %2370 = vmax.xlane.f32.xlu0 %v2369
        %v2371 = vpop.xlane.xlu0 %2370
        %v2372 = vmax.f32 %v2218, %v2220
        %2373 = vmax.xlane.f32.xlu0 %v2372
        %v2374 = vpop.xlane.xlu0 %2373
        %v2375 = vmax.f32 %v2222, %v2224
        %2376 = vmax.xlane.f32.xlu0 %v2375
        %v2377 = vpop.xlane.xlu0 %2376
        %v2378 = vmax.f32 %v2228, %v2230
        %2379 = vmax.xlane.f32.xlu0 %v2378
        %v2380 = vpop.xlane.xlu0 %2379
        %v2381 = vmax.f32 %v2232, %v2234
        %2382 = vmax.xlane.f32.xlu0 %v2381
        %v2383 = vpop.xlane.xlu0 %2382
        %v2384 = vmax.f32 %v2238, %v2240
        %2385 = vmax.xlane.f32.xlu0 %v2384
        %v2386 = vpop.xlane.xlu0 %2385
        %v2387 = vmax.f32 %v2242, %v2244
        %2388 = vmax.xlane.f32.xlu0 %v2387
        %v2389 = vpop.xlane.xlu0 %2388
        %v2390 = vmax.f32 %v2248, %v2250
        %2391 = vmax.xlane.f32.xlu0 %v2390
        %v2392 = vpop.xlane.xlu0 %2391
        %v2393 = vmax.f32 %v2252, %v2254
        %2394 = vmax.xlane.f32.xlu0 %v2393
        %v2395 = vpop.xlane.xlu0 %2394
        %v2396 = vmax.f32 %v2258, %v2260
        %2397 = vmax.xlane.f32.xlu0 %v2396
        %v2398 = vpop.xlane.xlu0 %2397
        %v2399 = vmax.f32 %v2262, %v2264
        %2400 = vmax.xlane.f32.xlu0 %v2399
        %v2401 = vpop.xlane.xlu0 %2400
        %v2402 = vmax.f32 %v2268, %v2270
        %2403 = vmax.xlane.f32.xlu0 %v2402
        %v2404 = vpop.xlane.xlu0 %2403
        %v2405 = vmax.f32 %v2272, %v2274
        %2406 = vmax.xlane.f32.xlu0 %v2405
        %v2407 = vpop.xlane.xlu0 %2406
        %v2408 = vmax.f32 %v2278, %v2280
        %2409 = vmax.xlane.f32.xlu0 %v2408
        %v2410 = vpop.xlane.xlu0 %2409
        %v2411 = vmax.f32 %v2282, %v2284
        %2412 = vmax.xlane.f32.xlu0 %v2411
        %v2413 = vpop.xlane.xlu0 %2412
        %v2414 = vmax.f32 %v2288, %v2290
        %2415 = vmax.xlane.f32.xlu0 %v2414
        %v2416 = vpop.xlane.xlu0 %2415
        %v2417 = vmax.f32 %v2292, %v2294
        %2418 = vmax.xlane.f32.xlu0 %v2417
        %v2419 = vpop.xlane.xlu0 %2418
        %v2420 = vmax.f32 %v2298, %v2300
        %2421 = vmax.xlane.f32.xlu0 %v2420
        %v2422 = vpop.xlane.xlu0 %2421
        %v2423 = vmax.f32 %v2302, %v2304
        %2424 = vmax.xlane.f32.xlu0 %v2423
        %v2425 = vpop.xlane.xlu0 %2424
        %v2426 = vmax.f32 %v2308, %v2310
        %2427 = vmax.xlane.f32.xlu0 %v2426
        %v2428 = vpop.xlane.xlu0 %2427
        %v2429 = vmax.f32 %v2312, %v2314
        %2430 = vmax.xlane.f32.xlu0 %v2429
        %v2431 = vpop.xlane.xlu0 %2430
        %v2432 = vmax.f32 %v2318, %v2320
        %2433 = vmax.xlane.f32.xlu0 %v2432
        %v2434 = vpop.xlane.xlu0 %2433
        %v2435 = vmax.f32 %v2322, %v2324
        %2436 = vmax.xlane.f32.xlu0 %v2435
        %v2437 = vpop.xlane.xlu0 %2436
        %v2438 = vmax.f32 %v2328, %v2330
        %2439 = vmax.xlane.f32.xlu0 %v2438
        %v2440 = vpop.xlane.xlu0 %2439
        %v2441 = vmax.f32 %v2332, %v2334
        %2442 = vmax.xlane.f32.xlu0 %v2441
        %v2443 = vpop.xlane.xlu0 %2442
        %v2444 = vmax.f32 %v2338, %v2340
        %2445 = vmax.xlane.f32.xlu0 %v2444
        %v2446 = vpop.xlane.xlu0 %2445
        %v2447 = vmax.f32 %v2342, %v2344
        %2448 = vmax.xlane.f32.xlu0 %v2447
        %v2449 = vpop.xlane.xlu0 %2448
        %v2450 = vmax.f32 %v2348, %v2350
        %2451 = vmax.xlane.f32.xlu0 %v2450
        %v2452 = vpop.xlane.xlu0 %2451
        %v2453 = vmax.f32 %v2352, %v2354
        %2454 = vmax.xlane.f32.xlu0 %v2453
        %v2455 = vpop.xlane.xlu0 %2454
        %v2456 = vmax.f32 %v2358, %v2360
        %2457 = vmax.xlane.f32.xlu0 %v2456
        %v2458 = vpop.xlane.xlu0 %2457
        %v2459 = vmax.f32 %v2362, %v2364
        %2460 = vmax.xlane.f32.xlu0 %v2459
        %v2461 = vpop.xlane.xlu0 %2460
        %vm2462 = vcmp.ge.f32.partialorder %v2208, %v2368
        %vm2463 = vcmp.ge.f32.partialorder %v2210, %v2368
        %vm2464 = vcmp.ge.f32.partialorder %v2212, %v2371
        %vm2465 = vcmp.ge.f32.partialorder %v2214, %v2371
        %vm2466 = vcmp.ge.f32.partialorder %v2218, %v2374
        %vm2467 = vcmp.ge.f32.partialorder %v2220, %v2374
        %vm2468 = vcmp.ge.f32.partialorder %v2222, %v2377
        %vm2469 = vcmp.ge.f32.partialorder %v2224, %v2377
        %vm2470 = vcmp.ge.f32.partialorder %v2228, %v2380
        %vm2471 = vcmp.ge.f32.partialorder %v2230, %v2380
        %vm2472 = vcmp.ge.f32.partialorder %v2232, %v2383
        %vm2473 = vcmp.ge.f32.partialorder %v2234, %v2383
        %vm2474 = vcmp.ge.f32.partialorder %v2238, %v2386
        %vm2475 = vcmp.ge.f32.partialorder %v2240, %v2386
        %vm2476 = vcmp.ge.f32.partialorder %v2242, %v2389
        %vm2477 = vcmp.ge.f32.partialorder %v2244, %v2389
        %vm2478 = vcmp.ge.f32.partialorder %v2248, %v2392
        %vm2479 = vcmp.ge.f32.partialorder %v2250, %v2392
        %vm2480 = vcmp.ge.f32.partialorder %v2252, %v2395
        %vm2481 = vcmp.ge.f32.partialorder %v2254, %v2395
        %vm2482 = vcmp.ge.f32.partialorder %v2258, %v2398
        %vm2483 = vcmp.ge.f32.partialorder %v2260, %v2398
        %vm2484 = vcmp.ge.f32.partialorder %v2262, %v2401
        %vm2485 = vcmp.ge.f32.partialorder %v2264, %v2401
        %vm2486 = vcmp.ge.f32.partialorder %v2268, %v2404
        %vm2487 = vcmp.ge.f32.partialorder %v2270, %v2404
        %vm2488 = vcmp.ge.f32.partialorder %v2272, %v2407
        %vm2489 = vcmp.ge.f32.partialorder %v2274, %v2407
        %vm2490 = vcmp.ge.f32.partialorder %v2278, %v2410
        %vm2491 = vcmp.ge.f32.partialorder %v2280, %v2410
        %vm2492 = vcmp.ge.f32.partialorder %v2282, %v2413
        %vm2493 = vcmp.ge.f32.partialorder %v2284, %v2413
        %vm2494 = vcmp.ge.f32.partialorder %v2288, %v2416
        %vm2495 = vcmp.ge.f32.partialorder %v2290, %v2416
        %vm2496 = vcmp.ge.f32.partialorder %v2292, %v2419
        %vm2497 = vcmp.ge.f32.partialorder %v2294, %v2419
        %vm2498 = vcmp.ge.f32.partialorder %v2298, %v2422
        %vm2499 = vcmp.ge.f32.partialorder %v2300, %v2422
        %vm2500 = vcmp.ge.f32.partialorder %v2302, %v2425
        %vm2501 = vcmp.ge.f32.partialorder %v2304, %v2425
        %vm2502 = vcmp.ge.f32.partialorder %v2308, %v2428
        %vm2503 = vcmp.ge.f32.partialorder %v2310, %v2428
        %vm2504 = vcmp.ge.f32.partialorder %v2312, %v2431
        %vm2505 = vcmp.ge.f32.partialorder %v2314, %v2431
        %vm2506 = vcmp.ge.f32.partialorder %v2318, %v2434
        %vm2507 = vcmp.ge.f32.partialorder %v2320, %v2434
        %vm2508 = vcmp.ge.f32.partialorder %v2322, %v2437
        %vm2509 = vcmp.ge.f32.partialorder %v2324, %v2437
        %vm2510 = vcmp.ge.f32.partialorder %v2328, %v2440
        %vm2511 = vcmp.ge.f32.partialorder %v2330, %v2440
        %vm2512 = vcmp.ge.f32.partialorder %v2332, %v2443
        %vm2513 = vcmp.ge.f32.partialorder %v2334, %v2443
        %vm2514 = vcmp.ge.f32.partialorder %v2338, %v2446
        %vm2515 = vcmp.ge.f32.partialorder %v2340, %v2446
        %vm2516 = vcmp.ge.f32.partialorder %v2342, %v2449
        %vm2517 = vcmp.ge.f32.partialorder %v2344, %v2449
        %vm2518 = vcmp.ge.f32.partialorder %v2348, %v2452
        %vm2519 = vcmp.ge.f32.partialorder %v2350, %v2452
        %vm2520 = vcmp.ge.f32.partialorder %v2352, %v2455
        %vm2521 = vcmp.ge.f32.partialorder %v2354, %v2455
        %vm2522 = vcmp.ge.f32.partialorder %v2358, %v2458
        %vm2523 = vcmp.ge.f32.partialorder %v2360, %v2458
        %vm2524 = vcmp.ge.f32.partialorder %v2362, %v2461
        %vm2525 = vcmp.ge.f32.partialorder %v2364, %v2461
        %v2526 = vsel %vm2462, %v2037, 256
        %v2527 = vsel %vm2463, %v2038, 256
        %v2528 = vsel %vm2464, %v2037, 256
        %v2529 = vsel %vm2465, %v2038, 256
        %v2530 = vsel %vm2466, %v2037, 256
        %v2531 = vsel %vm2467, %v2038, 256
        %v2532 = vsel %vm2468, %v2037, 256
        %v2533 = vsel %vm2469, %v2038, 256
        %v2534 = vsel %vm2470, %v2037, 256
        %v2535 = vsel %vm2471, %v2038, 256
        %v2536 = vsel %vm2472, %v2037, 256
        %v2537 = vsel %vm2473, %v2038, 256
        %v2538 = vsel %vm2474, %v2037, 256
        %v2539 = vsel %vm2475, %v2038, 256
        %v2540 = vsel %vm2476, %v2037, 256
        %v2541 = vsel %vm2477, %v2038, 256
        %v2542 = vsel %vm2478, %v2037, 256
        %v2543 = vsel %vm2479, %v2038, 256
        %v2544 = vsel %vm2480, %v2037, 256
        %v2545 = vsel %vm2481, %v2038, 256
        %v2546 = vsel %vm2482, %v2037, 256
        %v2547 = vsel %vm2483, %v2038, 256
        %v2548 = vsel %vm2484, %v2037, 256
        %v2549 = vsel %vm2485, %v2038, 256
        %v2550 = vsel %vm2486, %v2037, 256
        %v2551 = vsel %vm2487, %v2038, 256
        %v2552 = vsel %vm2488, %v2037, 256
        %v2553 = vsel %vm2489, %v2038, 256
        %v2554 = vsel %vm2490, %v2037, 256
        %v2555 = vsel %vm2491, %v2038, 256
        %v2556 = vsel %vm2492, %v2037, 256
        %v2557 = vsel %vm2493, %v2038, 256
        %v2558 = vsel %vm2494, %v2037, 256
        %v2559 = vsel %vm2495, %v2038, 256
        %v2560 = vsel %vm2496, %v2037, 256
        %v2561 = vsel %vm2497, %v2038, 256
        %v2562 = vsel %vm2498, %v2037, 256
        %v2563 = vsel %vm2499, %v2038, 256
        %v2564 = vsel %vm2500, %v2037, 256
        %v2565 = vsel %vm2501, %v2038, 256
        %v2566 = vsel %vm2502, %v2037, 256
        %v2567 = vsel %vm2503, %v2038, 256
        %v2568 = vsel %vm2504, %v2037, 256
        %v2569 = vsel %vm2505, %v2038, 256
        %v2570 = vsel %vm2506, %v2037, 256
        %v2571 = vsel %vm2507, %v2038, 256
        %v2572 = vsel %vm2508, %v2037, 256
        %v2573 = vsel %vm2509, %v2038, 256
        %v2574 = vsel %vm2510, %v2037, 256
        %v2575 = vsel %vm2511, %v2038, 256
        %v2576 = vsel %vm2512, %v2037, 256
        %v2577 = vsel %vm2513, %v2038, 256
        %v2578 = vsel %vm2514, %v2037, 256
        %v2579 = vsel %vm2515, %v2038, 256
        %v2580 = vsel %vm2516, %v2037, 256
        %v2581 = vsel %vm2517, %v2038, 256
        %v2582 = vsel %vm2518, %v2037, 256
        %v2583 = vsel %vm2519, %v2038, 256
        %v2584 = vsel %vm2520, %v2037, 256
        %v2585 = vsel %vm2521, %v2038, 256
        %v2586 = vsel %vm2522, %v2037, 256
        %v2587 = vsel %vm2523, %v2038, 256
        %v2588 = vsel %vm2524, %v2037, 256
        %v2589 = vsel %vm2525, %v2038, 256
        %vm2590 = vcmp.lt.s32.totalorder %v2526, %v2527
        %v2591 = vsel %vm2590, %v2526, %v2527
        %v2592 = vand.u32 %v2591, 65535
        %v2593 = vshra.s32 %v2591, 16
        %v2594 = vcvt.s32.f32 %v2592
        %v2595 = vcvt.s32.f32 %v2593
        %2596 = vmin.xlane.f32.xlu0 %v2595
        %v2597 = vpop.xlane.xlu0 %2596
        %vm2598 = vcmp.eq.f32.partialorder %v2595, %v2597
        %v2599 = vsel %vm2598, %v2594, inf
        %2600 = vmin.xlane.f32.xlu0 %v2599
        %v2601 = vpop.xlane.xlu0 %2600
        %v2602 = vcvt.f32.s32 %v2601
        %v2603 = vcvt.f32.s32 %v2597
        %v2604 = vshll.u32 %v2603, 16
        %v2605 = vadd.s32 %v2604, %v2602
        %vm2606 = vcmp.lt.s32.totalorder %v2528, %v2529
        %v2607 = vsel %vm2606, %v2528, %v2529
        %v2608 = vand.u32 %v2607, 65535
        %v2609 = vshra.s32 %v2607, 16
        %v2610 = vcvt.s32.f32 %v2608
        %v2611 = vcvt.s32.f32 %v2609
        %2612 = vmin.xlane.f32.xlu0 %v2611
        %v2613 = vpop.xlane.xlu0 %2612
        %vm2614 = vcmp.eq.f32.partialorder %v2611, %v2613
        %v2615 = vsel %vm2614, %v2610, inf
        %2616 = vmin.xlane.f32.xlu0 %v2615
        %v2617 = vpop.xlane.xlu0 %2616
        %v2618 = vcvt.f32.s32 %v2617
        %v2619 = vcvt.f32.s32 %v2613
        %v2620 = vshll.u32 %v2619, 16
        %v2621 = vadd.s32 %v2620, %v2618
        %vm2622 = vcmp.lt.s32.totalorder %v2530, %v2531
        %v2623 = vsel %vm2622, %v2530, %v2531
        %v2624 = vand.u32 %v2623, 65535
        %v2625 = vshra.s32 %v2623, 16
        %v2626 = vcvt.s32.f32 %v2624
        %v2627 = vcvt.s32.f32 %v2625
        %2628 = vmin.xlane.f32.xlu0 %v2627
        %v2629 = vpop.xlane.xlu0 %2628
        %vm2630 = vcmp.eq.f32.partialorder %v2627, %v2629
        %v2631 = vsel %vm2630, %v2626, inf
        %2632 = vmin.xlane.f32.xlu0 %v2631
        %v2633 = vpop.xlane.xlu0 %2632
        %v2634 = vcvt.f32.s32 %v2633
        %v2635 = vcvt.f32.s32 %v2629
        %v2636 = vshll.u32 %v2635, 16
        %v2637 = vadd.s32 %v2636, %v2634
        %vm2638 = vcmp.lt.s32.totalorder %v2532, %v2533
        %v2639 = vsel %vm2638, %v2532, %v2533
        %v2640 = vand.u32 %v2639, 65535
        %v2641 = vshra.s32 %v2639, 16
        %v2642 = vcvt.s32.f32 %v2640
        %v2643 = vcvt.s32.f32 %v2641
        %2644 = vmin.xlane.f32.xlu0 %v2643
        %v2645 = vpop.xlane.xlu0 %2644
        %vm2646 = vcmp.eq.f32.partialorder %v2643, %v2645
        %v2647 = vsel %vm2646, %v2642, inf
        %2648 = vmin.xlane.f32.xlu0 %v2647
        %v2649 = vpop.xlane.xlu0 %2648
        %v2650 = vcvt.f32.s32 %v2649
        %v2651 = vcvt.f32.s32 %v2645
        %v2652 = vshll.u32 %v2651, 16
        %v2653 = vadd.s32 %v2652, %v2650
        %vm2654 = vcmp.lt.s32.totalorder %v2534, %v2535
        %v2655 = vsel %vm2654, %v2534, %v2535
        %v2656 = vand.u32 %v2655, 65535
        %v2657 = vshra.s32 %v2655, 16
        %v2658 = vcvt.s32.f32 %v2656
        %v2659 = vcvt.s32.f32 %v2657
        %2660 = vmin.xlane.f32.xlu0 %v2659
        %v2661 = vpop.xlane.xlu0 %2660
        %vm2662 = vcmp.eq.f32.partialorder %v2659, %v2661
        %v2663 = vsel %vm2662, %v2658, inf
        %2664 = vmin.xlane.f32.xlu0 %v2663
        %v2665 = vpop.xlane.xlu0 %2664
        %v2666 = vcvt.f32.s32 %v2665
        %v2667 = vcvt.f32.s32 %v2661
        %v2668 = vshll.u32 %v2667, 16
        %v2669 = vadd.s32 %v2668, %v2666
        %vm2670 = vcmp.lt.s32.totalorder %v2536, %v2537
        %v2671 = vsel %vm2670, %v2536, %v2537
        %v2672 = vand.u32 %v2671, 65535
        %v2673 = vshra.s32 %v2671, 16
        %v2674 = vcvt.s32.f32 %v2672
        %v2675 = vcvt.s32.f32 %v2673
        %2676 = vmin.xlane.f32.xlu0 %v2675
        %v2677 = vpop.xlane.xlu0 %2676
        %vm2678 = vcmp.eq.f32.partialorder %v2675, %v2677
        %v2679 = vsel %vm2678, %v2674, inf
        %2680 = vmin.xlane.f32.xlu0 %v2679
        %v2681 = vpop.xlane.xlu0 %2680
        %v2682 = vcvt.f32.s32 %v2681
        %v2683 = vcvt.f32.s32 %v2677
        %v2684 = vshll.u32 %v2683, 16
        %v2685 = vadd.s32 %v2684, %v2682
        %vm2686 = vcmp.lt.s32.totalorder %v2538, %v2539
        %v2687 = vsel %vm2686, %v2538, %v2539
        %v2688 = vand.u32 %v2687, 65535
        %v2689 = vshra.s32 %v2687, 16
        %v2690 = vcvt.s32.f32 %v2688
        %v2691 = vcvt.s32.f32 %v2689
        %2692 = vmin.xlane.f32.xlu0 %v2691
        %v2693 = vpop.xlane.xlu0 %2692
        %vm2694 = vcmp.eq.f32.partialorder %v2691, %v2693
        %v2695 = vsel %vm2694, %v2690, inf
        %2696 = vmin.xlane.f32.xlu0 %v2695
        %v2697 = vpop.xlane.xlu0 %2696
        %v2698 = vcvt.f32.s32 %v2697
        %v2699 = vcvt.f32.s32 %v2693
        %v2700 = vshll.u32 %v2699, 16
        %v2701 = vadd.s32 %v2700, %v2698
        %vm2702 = vcmp.lt.s32.totalorder %v2540, %v2541
        %v2703 = vsel %vm2702, %v2540, %v2541
        %v2704 = vand.u32 %v2703, 65535
        %v2705 = vshra.s32 %v2703, 16
        %v2706 = vcvt.s32.f32 %v2704
        %v2707 = vcvt.s32.f32 %v2705
        %2708 = vmin.xlane.f32.xlu0 %v2707
        %v2709 = vpop.xlane.xlu0 %2708
        %vm2710 = vcmp.eq.f32.partialorder %v2707, %v2709
        %v2711 = vsel %vm2710, %v2706, inf
        %2712 = vmin.xlane.f32.xlu0 %v2711
        %v2713 = vpop.xlane.xlu0 %2712
        %v2714 = vcvt.f32.s32 %v2713
        %v2715 = vcvt.f32.s32 %v2709
        %v2716 = vshll.u32 %v2715, 16
        %v2717 = vadd.s32 %v2716, %v2714
        %vm2718 = vcmp.lt.s32.totalorder %v2542, %v2543
        %v2719 = vsel %vm2718, %v2542, %v2543
        %v2720 = vand.u32 %v2719, 65535
        %v2721 = vshra.s32 %v2719, 16
        %v2722 = vcvt.s32.f32 %v2720
        %v2723 = vcvt.s32.f32 %v2721
        %2724 = vmin.xlane.f32.xlu0 %v2723
        %v2725 = vpop.xlane.xlu0 %2724
        %vm2726 = vcmp.eq.f32.partialorder %v2723, %v2725
        %v2727 = vsel %vm2726, %v2722, inf
        %2728 = vmin.xlane.f32.xlu0 %v2727
        %v2729 = vpop.xlane.xlu0 %2728
        %v2730 = vcvt.f32.s32 %v2729
        %v2731 = vcvt.f32.s32 %v2725
        %v2732 = vshll.u32 %v2731, 16
        %v2733 = vadd.s32 %v2732, %v2730
        %vm2734 = vcmp.lt.s32.totalorder %v2544, %v2545
        %v2735 = vsel %vm2734, %v2544, %v2545
        %v2736 = vand.u32 %v2735, 65535
        %v2737 = vshra.s32 %v2735, 16
        %v2738 = vcvt.s32.f32 %v2736
        %v2739 = vcvt.s32.f32 %v2737
        %2740 = vmin.xlane.f32.xlu0 %v2739
        %v2741 = vpop.xlane.xlu0 %2740
        %vm2742 = vcmp.eq.f32.partialorder %v2739, %v2741
        %v2743 = vsel %vm2742, %v2738, inf
        %2744 = vmin.xlane.f32.xlu0 %v2743
        %v2745 = vpop.xlane.xlu0 %2744
        %v2746 = vcvt.f32.s32 %v2745
        %v2747 = vcvt.f32.s32 %v2741
        %v2748 = vshll.u32 %v2747, 16
        %v2749 = vadd.s32 %v2748, %v2746
        %vm2750 = vcmp.lt.s32.totalorder %v2546, %v2547
        %v2751 = vsel %vm2750, %v2546, %v2547
        %v2752 = vand.u32 %v2751, 65535
        %v2753 = vshra.s32 %v2751, 16
        %v2754 = vcvt.s32.f32 %v2752
        %v2755 = vcvt.s32.f32 %v2753
        %2756 = vmin.xlane.f32.xlu0 %v2755
        %v2757 = vpop.xlane.xlu0 %2756
        %vm2758 = vcmp.eq.f32.partialorder %v2755, %v2757
        %v2759 = vsel %vm2758, %v2754, inf
        %2760 = vmin.xlane.f32.xlu0 %v2759
        %v2761 = vpop.xlane.xlu0 %2760
        %v2762 = vcvt.f32.s32 %v2761
        %v2763 = vcvt.f32.s32 %v2757
        %v2764 = vshll.u32 %v2763, 16
        %v2765 = vadd.s32 %v2764, %v2762
        %vm2766 = vcmp.lt.s32.totalorder %v2548, %v2549
        %v2767 = vsel %vm2766, %v2548, %v2549
        %v2768 = vand.u32 %v2767, 65535
        %v2769 = vshra.s32 %v2767, 16
        %v2770 = vcvt.s32.f32 %v2768
        %v2771 = vcvt.s32.f32 %v2769
        %2772 = vmin.xlane.f32.xlu0 %v2771
        %v2773 = vpop.xlane.xlu0 %2772
        %vm2774 = vcmp.eq.f32.partialorder %v2771, %v2773
        %v2775 = vsel %vm2774, %v2770, inf
        %2776 = vmin.xlane.f32.xlu0 %v2775
        %v2777 = vpop.xlane.xlu0 %2776
        %v2778 = vcvt.f32.s32 %v2777
        %v2779 = vcvt.f32.s32 %v2773
        %v2780 = vshll.u32 %v2779, 16
        %v2781 = vadd.s32 %v2780, %v2778
        %vm2782 = vcmp.lt.s32.totalorder %v2550, %v2551
        %v2783 = vsel %vm2782, %v2550, %v2551
        %v2784 = vand.u32 %v2783, 65535
        %v2785 = vshra.s32 %v2783, 16
        %v2786 = vcvt.s32.f32 %v2784
        %v2787 = vcvt.s32.f32 %v2785
        %2788 = vmin.xlane.f32.xlu0 %v2787
        %v2789 = vpop.xlane.xlu0 %2788
        %vm2790 = vcmp.eq.f32.partialorder %v2787, %v2789
        %v2791 = vsel %vm2790, %v2786, inf
        %2792 = vmin.xlane.f32.xlu0 %v2791
        %v2793 = vpop.xlane.xlu0 %2792
        %v2794 = vcvt.f32.s32 %v2793
        %v2795 = vcvt.f32.s32 %v2789
        %v2796 = vshll.u32 %v2795, 16
        %v2797 = vadd.s32 %v2796, %v2794
        %vm2798 = vcmp.lt.s32.totalorder %v2552, %v2553
        %v2799 = vsel %vm2798, %v2552, %v2553
        %v2800 = vand.u32 %v2799, 65535
        %v2801 = vshra.s32 %v2799, 16
        %v2802 = vcvt.s32.f32 %v2800
        %v2803 = vcvt.s32.f32 %v2801
        %2804 = vmin.xlane.f32.xlu0 %v2803
        %v2805 = vpop.xlane.xlu0 %2804
        %vm2806 = vcmp.eq.f32.partialorder %v2803, %v2805
        %v2807 = vsel %vm2806, %v2802, inf
        %2808 = vmin.xlane.f32.xlu0 %v2807
        %v2809 = vpop.xlane.xlu0 %2808
        %v2810 = vcvt.f32.s32 %v2809
        %v2811 = vcvt.f32.s32 %v2805
        %v2812 = vshll.u32 %v2811, 16
        %v2813 = vadd.s32 %v2812, %v2810
        %vm2814 = vcmp.lt.s32.totalorder %v2554, %v2555
        %v2815 = vsel %vm2814, %v2554, %v2555
        %v2816 = vand.u32 %v2815, 65535
        %v2817 = vshra.s32 %v2815, 16
        %v2818 = vcvt.s32.f32 %v2816
        %v2819 = vcvt.s32.f32 %v2817
        %2820 = vmin.xlane.f32.xlu0 %v2819
        %v2821 = vpop.xlane.xlu0 %2820
        %vm2822 = vcmp.eq.f32.partialorder %v2819, %v2821
        %v2823 = vsel %vm2822, %v2818, inf
        %2824 = vmin.xlane.f32.xlu0 %v2823
        %v2825 = vpop.xlane.xlu0 %2824
        %v2826 = vcvt.f32.s32 %v2825
        %v2827 = vcvt.f32.s32 %v2821
        %v2828 = vshll.u32 %v2827, 16
        %v2829 = vadd.s32 %v2828, %v2826
        %vm2830 = vcmp.lt.s32.totalorder %v2556, %v2557
        %v2831 = vsel %vm2830, %v2556, %v2557
        %v2832 = vand.u32 %v2831, 65535
        %v2833 = vshra.s32 %v2831, 16
        %v2834 = vcvt.s32.f32 %v2832
        %v2835 = vcvt.s32.f32 %v2833
        %2836 = vmin.xlane.f32.xlu0 %v2835
        %v2837 = vpop.xlane.xlu0 %2836
        %vm2838 = vcmp.eq.f32.partialorder %v2835, %v2837
        %v2839 = vsel %vm2838, %v2834, inf
        %2840 = vmin.xlane.f32.xlu0 %v2839
        %v2841 = vpop.xlane.xlu0 %2840
        %v2842 = vcvt.f32.s32 %v2841
        %v2843 = vcvt.f32.s32 %v2837
        %v2844 = vshll.u32 %v2843, 16
        %v2845 = vadd.s32 %v2844, %v2842
        %vm2846 = vcmp.lt.s32.totalorder %v2558, %v2559
        %v2847 = vsel %vm2846, %v2558, %v2559
        %v2848 = vand.u32 %v2847, 65535
        %v2849 = vshra.s32 %v2847, 16
        %v2850 = vcvt.s32.f32 %v2848
        %v2851 = vcvt.s32.f32 %v2849
        %2852 = vmin.xlane.f32.xlu0 %v2851
        %v2853 = vpop.xlane.xlu0 %2852
        %vm2854 = vcmp.eq.f32.partialorder %v2851, %v2853
        %v2855 = vsel %vm2854, %v2850, inf
        %2856 = vmin.xlane.f32.xlu0 %v2855
        %v2857 = vpop.xlane.xlu0 %2856
        %v2858 = vcvt.f32.s32 %v2857
        %v2859 = vcvt.f32.s32 %v2853
        %v2860 = vshll.u32 %v2859, 16
        %v2861 = vadd.s32 %v2860, %v2858
        %vm2862 = vcmp.lt.s32.totalorder %v2560, %v2561
        %v2863 = vsel %vm2862, %v2560, %v2561
        %v2864 = vand.u32 %v2863, 65535
        %v2865 = vshra.s32 %v2863, 16
        %v2866 = vcvt.s32.f32 %v2864
        %v2867 = vcvt.s32.f32 %v2865
        %2868 = vmin.xlane.f32.xlu0 %v2867
        %v2869 = vpop.xlane.xlu0 %2868
        %vm2870 = vcmp.eq.f32.partialorder %v2867, %v2869
        %v2871 = vsel %vm2870, %v2866, inf
        %2872 = vmin.xlane.f32.xlu0 %v2871
        %v2873 = vpop.xlane.xlu0 %2872
        %v2874 = vcvt.f32.s32 %v2873
        %v2875 = vcvt.f32.s32 %v2869
        %v2876 = vshll.u32 %v2875, 16
        %v2877 = vadd.s32 %v2876, %v2874
        %vm2878 = vcmp.lt.s32.totalorder %v2562, %v2563
        %v2879 = vsel %vm2878, %v2562, %v2563
        %v2880 = vand.u32 %v2879, 65535
        %v2881 = vshra.s32 %v2879, 16
        %v2882 = vcvt.s32.f32 %v2880
        %v2883 = vcvt.s32.f32 %v2881
        %2884 = vmin.xlane.f32.xlu0 %v2883
        %v2885 = vpop.xlane.xlu0 %2884
        %vm2886 = vcmp.eq.f32.partialorder %v2883, %v2885
        %v2887 = vsel %vm2886, %v2882, inf
        %2888 = vmin.xlane.f32.xlu0 %v2887
        %v2889 = vpop.xlane.xlu0 %2888
        %v2890 = vcvt.f32.s32 %v2889
        %v2891 = vcvt.f32.s32 %v2885
        %v2892 = vshll.u32 %v2891, 16
        %v2893 = vadd.s32 %v2892, %v2890
        %vm2894 = vcmp.lt.s32.totalorder %v2564, %v2565
        %v2895 = vsel %vm2894, %v2564, %v2565
        %v2896 = vand.u32 %v2895, 65535
        %v2897 = vshra.s32 %v2895, 16
        %v2898 = vcvt.s32.f32 %v2896
        %v2899 = vcvt.s32.f32 %v2897
        %2900 = vmin.xlane.f32.xlu0 %v2899
        %v2901 = vpop.xlane.xlu0 %2900
        %vm2902 = vcmp.eq.f32.partialorder %v2899, %v2901
        %v2903 = vsel %vm2902, %v2898, inf
        %2904 = vmin.xlane.f32.xlu0 %v2903
        %v2905 = vpop.xlane.xlu0 %2904
        %v2906 = vcvt.f32.s32 %v2905
        %v2907 = vcvt.f32.s32 %v2901
        %v2908 = vshll.u32 %v2907, 16
        %v2909 = vadd.s32 %v2908, %v2906
        %vm2910 = vcmp.lt.s32.totalorder %v2566, %v2567
        %v2911 = vsel %vm2910, %v2566, %v2567
        %v2912 = vand.u32 %v2911, 65535
        %v2913 = vshra.s32 %v2911, 16
        %v2914 = vcvt.s32.f32 %v2912
        %v2915 = vcvt.s32.f32 %v2913
        %2916 = vmin.xlane.f32.xlu0 %v2915
        %v2917 = vpop.xlane.xlu0 %2916
        %vm2918 = vcmp.eq.f32.partialorder %v2915, %v2917
        %v2919 = vsel %vm2918, %v2914, inf
        %2920 = vmin.xlane.f32.xlu0 %v2919
        %v2921 = vpop.xlane.xlu0 %2920
        %v2922 = vcvt.f32.s32 %v2921
        %v2923 = vcvt.f32.s32 %v2917
        %v2924 = vshll.u32 %v2923, 16
        %v2925 = vadd.s32 %v2924, %v2922
        %vm2926 = vcmp.lt.s32.totalorder %v2568, %v2569
        %v2927 = vsel %vm2926, %v2568, %v2569
        %v2928 = vand.u32 %v2927, 65535
        %v2929 = vshra.s32 %v2927, 16
        %v2930 = vcvt.s32.f32 %v2928
        %v2931 = vcvt.s32.f32 %v2929
        %2932 = vmin.xlane.f32.xlu0 %v2931
        %v2933 = vpop.xlane.xlu0 %2932
        %vm2934 = vcmp.eq.f32.partialorder %v2931, %v2933
        %v2935 = vsel %vm2934, %v2930, inf
        %2936 = vmin.xlane.f32.xlu0 %v2935
        %v2937 = vpop.xlane.xlu0 %2936
        %v2938 = vcvt.f32.s32 %v2937
        %v2939 = vcvt.f32.s32 %v2933
        %v2940 = vshll.u32 %v2939, 16
        %v2941 = vadd.s32 %v2940, %v2938
        %vm2942 = vcmp.lt.s32.totalorder %v2570, %v2571
        %v2943 = vsel %vm2942, %v2570, %v2571
        %v2944 = vand.u32 %v2943, 65535
        %v2945 = vshra.s32 %v2943, 16
        %v2946 = vcvt.s32.f32 %v2944
        %v2947 = vcvt.s32.f32 %v2945
        %2948 = vmin.xlane.f32.xlu0 %v2947
        %v2949 = vpop.xlane.xlu0 %2948
        %vm2950 = vcmp.eq.f32.partialorder %v2947, %v2949
        %v2951 = vsel %vm2950, %v2946, inf
        %2952 = vmin.xlane.f32.xlu0 %v2951
        %v2953 = vpop.xlane.xlu0 %2952
        %v2954 = vcvt.f32.s32 %v2953
        %v2955 = vcvt.f32.s32 %v2949
        %v2956 = vshll.u32 %v2955, 16
        %v2957 = vadd.s32 %v2956, %v2954
        %vm2958 = vcmp.lt.s32.totalorder %v2572, %v2573
        %v2959 = vsel %vm2958, %v2572, %v2573
        %v2960 = vand.u32 %v2959, 65535
        %v2961 = vshra.s32 %v2959, 16
        %v2962 = vcvt.s32.f32 %v2960
        %v2963 = vcvt.s32.f32 %v2961
        %2964 = vmin.xlane.f32.xlu0 %v2963
        %v2965 = vpop.xlane.xlu0 %2964
        %vm2966 = vcmp.eq.f32.partialorder %v2963, %v2965
        %v2967 = vsel %vm2966, %v2962, inf
        %2968 = vmin.xlane.f32.xlu0 %v2967
        %v2969 = vpop.xlane.xlu0 %2968
        %v2970 = vcvt.f32.s32 %v2969
        %v2971 = vcvt.f32.s32 %v2965
        %v2972 = vshll.u32 %v2971, 16
        %v2973 = vadd.s32 %v2972, %v2970
        %vm2974 = vcmp.lt.s32.totalorder %v2574, %v2575
        %v2975 = vsel %vm2974, %v2574, %v2575
        %v2976 = vand.u32 %v2975, 65535
        %v2977 = vshra.s32 %v2975, 16
        %v2978 = vcvt.s32.f32 %v2976
        %v2979 = vcvt.s32.f32 %v2977
        %2980 = vmin.xlane.f32.xlu0 %v2979
        %v2981 = vpop.xlane.xlu0 %2980
        %vm2982 = vcmp.eq.f32.partialorder %v2979, %v2981
        %v2983 = vsel %vm2982, %v2978, inf
        %2984 = vmin.xlane.f32.xlu0 %v2983
        %v2985 = vpop.xlane.xlu0 %2984
        %v2986 = vcvt.f32.s32 %v2985
        %v2987 = vcvt.f32.s32 %v2981
        %v2988 = vshll.u32 %v2987, 16
        %v2989 = vadd.s32 %v2988, %v2986
        %vm2990 = vcmp.lt.s32.totalorder %v2576, %v2577
        %v2991 = vsel %vm2990, %v2576, %v2577
        %v2992 = vand.u32 %v2991, 65535
        %v2993 = vshra.s32 %v2991, 16
        %v2994 = vcvt.s32.f32 %v2992
        %v2995 = vcvt.s32.f32 %v2993
        %2996 = vmin.xlane.f32.xlu0 %v2995
        %v2997 = vpop.xlane.xlu0 %2996
        %vm2998 = vcmp.eq.f32.partialorder %v2995, %v2997
        %v2999 = vsel %vm2998, %v2994, inf
        %3000 = vmin.xlane.f32.xlu0 %v2999
        %v3001 = vpop.xlane.xlu0 %3000
        %v3002 = vcvt.f32.s32 %v3001
        %v3003 = vcvt.f32.s32 %v2997
        %v3004 = vshll.u32 %v3003, 16
        %v3005 = vadd.s32 %v3004, %v3002
        %vm3006 = vcmp.lt.s32.totalorder %v2578, %v2579
        %v3007 = vsel %vm3006, %v2578, %v2579
        %v3008 = vand.u32 %v3007, 65535
        %v3009 = vshra.s32 %v3007, 16
        %v3010 = vcvt.s32.f32 %v3008
        %v3011 = vcvt.s32.f32 %v3009
        %3012 = vmin.xlane.f32.xlu0 %v3011
        %v3013 = vpop.xlane.xlu0 %3012
        %vm3014 = vcmp.eq.f32.partialorder %v3011, %v3013
        %v3015 = vsel %vm3014, %v3010, inf
        %3016 = vmin.xlane.f32.xlu0 %v3015
        %v3017 = vpop.xlane.xlu0 %3016
        %v3018 = vcvt.f32.s32 %v3017
        %v3019 = vcvt.f32.s32 %v3013
        %v3020 = vshll.u32 %v3019, 16
        %v3021 = vadd.s32 %v3020, %v3018
        %vm3022 = vcmp.lt.s32.totalorder %v2580, %v2581
        %v3023 = vsel %vm3022, %v2580, %v2581
        %v3024 = vand.u32 %v3023, 65535
        %v3025 = vshra.s32 %v3023, 16
        %v3026 = vcvt.s32.f32 %v3024
        %v3027 = vcvt.s32.f32 %v3025
        %3028 = vmin.xlane.f32.xlu0 %v3027
        %v3029 = vpop.xlane.xlu0 %3028
        %vm3030 = vcmp.eq.f32.partialorder %v3027, %v3029
        %v3031 = vsel %vm3030, %v3026, inf
        %3032 = vmin.xlane.f32.xlu0 %v3031
        %v3033 = vpop.xlane.xlu0 %3032
        %v3034 = vcvt.f32.s32 %v3033
        %v3035 = vcvt.f32.s32 %v3029
        %v3036 = vshll.u32 %v3035, 16
        %v3037 = vadd.s32 %v3036, %v3034
        %vm3038 = vcmp.lt.s32.totalorder %v2582, %v2583
        %v3039 = vsel %vm3038, %v2582, %v2583
        %v3040 = vand.u32 %v3039, 65535
        %v3041 = vshra.s32 %v3039, 16
        %v3042 = vcvt.s32.f32 %v3040
        %v3043 = vcvt.s32.f32 %v3041
        %3044 = vmin.xlane.f32.xlu0 %v3043
        %v3045 = vpop.xlane.xlu0 %3044
        %vm3046 = vcmp.eq.f32.partialorder %v3043, %v3045
        %v3047 = vsel %vm3046, %v3042, inf
        %3048 = vmin.xlane.f32.xlu0 %v3047
        %v3049 = vpop.xlane.xlu0 %3048
        %v3050 = vcvt.f32.s32 %v3049
        %v3051 = vcvt.f32.s32 %v3045
        %v3052 = vshll.u32 %v3051, 16
        %v3053 = vadd.s32 %v3052, %v3050
        %vm3054 = vcmp.lt.s32.totalorder %v2584, %v2585
        %v3055 = vsel %vm3054, %v2584, %v2585
        %v3056 = vand.u32 %v3055, 65535
        %v3057 = vshra.s32 %v3055, 16
        %v3058 = vcvt.s32.f32 %v3056
        %v3059 = vcvt.s32.f32 %v3057
        %3060 = vmin.xlane.f32.xlu0 %v3059
        %v3061 = vpop.xlane.xlu0 %3060
        %vm3062 = vcmp.eq.f32.partialorder %v3059, %v3061
        %v3063 = vsel %vm3062, %v3058, inf
        %3064 = vmin.xlane.f32.xlu0 %v3063
        %v3065 = vpop.xlane.xlu0 %3064
        %v3066 = vcvt.f32.s32 %v3065
        %v3067 = vcvt.f32.s32 %v3061
        %v3068 = vshll.u32 %v3067, 16
        %v3069 = vadd.s32 %v3068, %v3066
        %vm3070 = vcmp.lt.s32.totalorder %v2586, %v2587
        %v3071 = vsel %vm3070, %v2586, %v2587
        %v3072 = vand.u32 %v3071, 65535
        %v3073 = vshra.s32 %v3071, 16
        %v3074 = vcvt.s32.f32 %v3072
        %v3075 = vcvt.s32.f32 %v3073
        %3076 = vmin.xlane.f32.xlu0 %v3075
        %v3077 = vpop.xlane.xlu0 %3076
        %vm3078 = vcmp.eq.f32.partialorder %v3075, %v3077
        %v3079 = vsel %vm3078, %v3074, inf
        %3080 = vmin.xlane.f32.xlu0 %v3079
        %v3081 = vpop.xlane.xlu0 %3080
        %v3082 = vcvt.f32.s32 %v3081
        %v3083 = vcvt.f32.s32 %v3077
        %v3084 = vshll.u32 %v3083, 16
        %v3085 = vadd.s32 %v3084, %v3082
        %vm3086 = vcmp.lt.s32.totalorder %v2588, %v2589
        %v3087 = vsel %vm3086, %v2588, %v2589
        %v3088 = vand.u32 %v3087, 65535
        %v3089 = vshra.s32 %v3087, 16
        %v3090 = vcvt.s32.f32 %v3088
        %v3091 = vcvt.s32.f32 %v3089
        %3092 = vmin.xlane.f32.xlu0 %v3091
        %v3093 = vpop.xlane.xlu0 %3092
        %vm3094 = vcmp.eq.f32.partialorder %v3091, %v3093
        %v3095 = vsel %vm3094, %v3090, inf
        %3096 = vmin.xlane.f32.xlu0 %v3095
        %v3097 = vpop.xlane.xlu0 %3096
        %v3098 = vcvt.f32.s32 %v3097
        %v3099 = vcvt.f32.s32 %v3093
        %v3100 = vshll.u32 %v3099, 16
        %v3101 = vadd.s32 %v3100, %v3098
        %vm3102 = vcmp.eq.s32.totalorder %v2037, %v2605
        %vm3103 = vcmp.eq.s32.totalorder %v2038, %v2605
        %vm3104 = vcmp.eq.s32.totalorder %v2037, %v2621
        %vm3105 = vcmp.eq.s32.totalorder %v2038, %v2621
        %vm3106 = vcmp.eq.s32.totalorder %v2037, %v2637
        %vm3107 = vcmp.eq.s32.totalorder %v2038, %v2637
        %vm3108 = vcmp.eq.s32.totalorder %v2037, %v2653
        %vm3109 = vcmp.eq.s32.totalorder %v2038, %v2653
        %vm3110 = vcmp.eq.s32.totalorder %v2037, %v2669
        %vm3111 = vcmp.eq.s32.totalorder %v2038, %v2669
        %vm3112 = vcmp.eq.s32.totalorder %v2037, %v2685
        %vm3113 = vcmp.eq.s32.totalorder %v2038, %v2685
        %vm3114 = vcmp.eq.s32.totalorder %v2037, %v2701
        %vm3115 = vcmp.eq.s32.totalorder %v2038, %v2701
        %vm3116 = vcmp.eq.s32.totalorder %v2037, %v2717
        %vm3117 = vcmp.eq.s32.totalorder %v2038, %v2717
        %vm3118 = vcmp.eq.s32.totalorder %v2037, %v2733
        %vm3119 = vcmp.eq.s32.totalorder %v2038, %v2733
        %vm3120 = vcmp.eq.s32.totalorder %v2037, %v2749
        %vm3121 = vcmp.eq.s32.totalorder %v2038, %v2749
        %vm3122 = vcmp.eq.s32.totalorder %v2037, %v2765
        %vm3123 = vcmp.eq.s32.totalorder %v2038, %v2765
        %vm3124 = vcmp.eq.s32.totalorder %v2037, %v2781
        %vm3125 = vcmp.eq.s32.totalorder %v2038, %v2781
        %vm3126 = vcmp.eq.s32.totalorder %v2037, %v2797
        %vm3127 = vcmp.eq.s32.totalorder %v2038, %v2797
        %vm3128 = vcmp.eq.s32.totalorder %v2037, %v2813
        %vm3129 = vcmp.eq.s32.totalorder %v2038, %v2813
        %vm3130 = vcmp.eq.s32.totalorder %v2037, %v2829
        %vm3131 = vcmp.eq.s32.totalorder %v2038, %v2829
        %vm3132 = vcmp.eq.s32.totalorder %v2037, %v2845
        %vm3133 = vcmp.eq.s32.totalorder %v2038, %v2845
        %vm3134 = vcmp.eq.s32.totalorder %v2037, %v2861
        %vm3135 = vcmp.eq.s32.totalorder %v2038, %v2861
        %vm3136 = vcmp.eq.s32.totalorder %v2037, %v2877
        %vm3137 = vcmp.eq.s32.totalorder %v2038, %v2877
        %vm3138 = vcmp.eq.s32.totalorder %v2037, %v2893
        %vm3139 = vcmp.eq.s32.totalorder %v2038, %v2893
        %vm3140 = vcmp.eq.s32.totalorder %v2037, %v2909
        %vm3141 = vcmp.eq.s32.totalorder %v2038, %v2909
        %vm3142 = vcmp.eq.s32.totalorder %v2037, %v2925
        %vm3143 = vcmp.eq.s32.totalorder %v2038, %v2925
        %vm3144 = vcmp.eq.s32.totalorder %v2037, %v2941
        %vm3145 = vcmp.eq.s32.totalorder %v2038, %v2941
        %vm3146 = vcmp.eq.s32.totalorder %v2037, %v2957
        %vm3147 = vcmp.eq.s32.totalorder %v2038, %v2957
        %vm3148 = vcmp.eq.s32.totalorder %v2037, %v2973
        %vm3149 = vcmp.eq.s32.totalorder %v2038, %v2973
        %vm3150 = vcmp.eq.s32.totalorder %v2037, %v2989
        %vm3151 = vcmp.eq.s32.totalorder %v2038, %v2989
        %vm3152 = vcmp.eq.s32.totalorder %v2037, %v3005
        %vm3153 = vcmp.eq.s32.totalorder %v2038, %v3005
        %vm3154 = vcmp.eq.s32.totalorder %v2037, %v3021
        %vm3155 = vcmp.eq.s32.totalorder %v2038, %v3021
        %vm3156 = vcmp.eq.s32.totalorder %v2037, %v3037
        %vm3157 = vcmp.eq.s32.totalorder %v2038, %v3037
        %vm3158 = vcmp.eq.s32.totalorder %v2037, %v3053
        %vm3159 = vcmp.eq.s32.totalorder %v2038, %v3053
        %vm3160 = vcmp.eq.s32.totalorder %v2037, %v3069
        %vm3161 = vcmp.eq.s32.totalorder %v2038, %v3069
        %vm3162 = vcmp.eq.s32.totalorder %v2037, %v3085
        %vm3163 = vcmp.eq.s32.totalorder %v2038, %v3085
        %vm3164 = vcmp.eq.s32.totalorder %v2037, %v3101
        %vm3165 = vcmp.eq.s32.totalorder %v2038, %v3101
        %v3166 = vsel %vm3102, 1, 0
        %v3167 = vsel %vm3103, 1, 0
        %v3168 = vsel %vm3104, 1, 0
        %v3169 = vsel %vm3105, 1, 0
        %v3170 = vsel %vm3106, 1, 0
        %v3171 = vsel %vm3107, 1, 0
        %v3172 = vsel %vm3108, 1, 0
        %v3173 = vsel %vm3109, 1, 0
        %v3174 = vsel %vm3110, 1, 0
        %v3175 = vsel %vm3111, 1, 0
        %v3176 = vsel %vm3112, 1, 0
        %v3177 = vsel %vm3113, 1, 0
        %v3178 = vsel %vm3114, 1, 0
        %v3179 = vsel %vm3115, 1, 0
        %v3180 = vsel %vm3116, 1, 0
        %v3181 = vsel %vm3117, 1, 0
        %v3182 = vsel %vm3118, 1, 0
        %v3183 = vsel %vm3119, 1, 0
        %v3184 = vsel %vm3120, 1, 0
        %v3185 = vsel %vm3121, 1, 0
        %v3186 = vsel %vm3122, 1, 0
        %v3187 = vsel %vm3123, 1, 0
        %v3188 = vsel %vm3124, 1, 0
        %v3189 = vsel %vm3125, 1, 0
        %v3190 = vsel %vm3126, 1, 0
        %v3191 = vsel %vm3127, 1, 0
        %v3192 = vsel %vm3128, 1, 0
        %v3193 = vsel %vm3129, 1, 0
        %v3194 = vsel %vm3130, 1, 0
        %v3195 = vsel %vm3131, 1, 0
        %v3196 = vsel %vm3132, 1, 0
        %v3197 = vsel %vm3133, 1, 0
        %v3198 = vsel %vm3134, 1, 0
        %v3199 = vsel %vm3135, 1, 0
        %v3200 = vsel %vm3136, 1, 0
        %v3201 = vsel %vm3137, 1, 0
        %v3202 = vsel %vm3138, 1, 0
        %v3203 = vsel %vm3139, 1, 0
        %v3204 = vsel %vm3140, 1, 0
        %v3205 = vsel %vm3141, 1, 0
        %v3206 = vsel %vm3142, 1, 0
        %v3207 = vsel %vm3143, 1, 0
        %v3208 = vsel %vm3144, 1, 0
        %v3209 = vsel %vm3145, 1, 0
        %v3210 = vsel %vm3146, 1, 0
        %v3211 = vsel %vm3147, 1, 0
        %v3212 = vsel %vm3148, 1, 0
        %v3213 = vsel %vm3149, 1, 0
        %v3214 = vsel %vm3150, 1, 0
        %v3215 = vsel %vm3151, 1, 0
        %v3216 = vsel %vm3152, 1, 0
        %v3217 = vsel %vm3153, 1, 0
        %v3218 = vsel %vm3154, 1, 0
        %v3219 = vsel %vm3155, 1, 0
        %v3220 = vsel %vm3156, 1, 0
        %v3221 = vsel %vm3157, 1, 0
        %v3222 = vsel %vm3158, 1, 0
        %v3223 = vsel %vm3159, 1, 0
        %v3224 = vsel %vm3160, 1, 0
        %v3225 = vsel %vm3161, 1, 0
        %v3226 = vsel %vm3162, 1, 0
        %v3227 = vsel %vm3163, 1, 0
        %v3228 = vsel %vm3164, 1, 0
        %v3229 = vsel %vm3165, 1, 0
        %v3230 = vcvt.s32.f32 %v3166
        %v3231 = vcvt.s32.f32 %v3167
        %v3232 = vcvt.s32.f32 %v3168
        %v3233 = vcvt.s32.f32 %v3169
        %v3234 = vcvt.s32.f32 %v3170
        %v3235 = vcvt.s32.f32 %v3171
        %v3236 = vcvt.s32.f32 %v3172
        %v3237 = vcvt.s32.f32 %v3173
        %v3238 = vcvt.s32.f32 %v3174
        %v3239 = vcvt.s32.f32 %v3175
        %v3240 = vcvt.s32.f32 %v3176
        %v3241 = vcvt.s32.f32 %v3177
        %v3242 = vcvt.s32.f32 %v3178
        %v3243 = vcvt.s32.f32 %v3179
        %v3244 = vcvt.s32.f32 %v3180
        %v3245 = vcvt.s32.f32 %v3181
        %v3246 = vcvt.s32.f32 %v3182
        %v3247 = vcvt.s32.f32 %v3183
        %v3248 = vcvt.s32.f32 %v3184
        %v3249 = vcvt.s32.f32 %v3185
        %v3250 = vcvt.s32.f32 %v3186
        %v3251 = vcvt.s32.f32 %v3187
        %v3252 = vcvt.s32.f32 %v3188
        %v3253 = vcvt.s32.f32 %v3189
        %v3254 = vcvt.s32.f32 %v3190
        %v3255 = vcvt.s32.f32 %v3191
        %v3256 = vcvt.s32.f32 %v3192
        %v3257 = vcvt.s32.f32 %v3193
        %v3258 = vcvt.s32.f32 %v3194
        %v3259 = vcvt.s32.f32 %v3195
        %v3260 = vcvt.s32.f32 %v3196
        %v3261 = vcvt.s32.f32 %v3197
        %v3262 = vcvt.s32.f32 %v3198
        %v3263 = vcvt.s32.f32 %v3199
        %v3264 = vcvt.s32.f32 %v3200
        %v3265 = vcvt.s32.f32 %v3201
        %v3266 = vcvt.s32.f32 %v3202
        %v3267 = vcvt.s32.f32 %v3203
        %v3268 = vcvt.s32.f32 %v3204
        %v3269 = vcvt.s32.f32 %v3205
        %v3270 = vcvt.s32.f32 %v3206
        %v3271 = vcvt.s32.f32 %v3207
        %v3272 = vcvt.s32.f32 %v3208
        %v3273 = vcvt.s32.f32 %v3209
        %v3274 = vcvt.s32.f32 %v3210
        %v3275 = vcvt.s32.f32 %v3211
        %v3276 = vcvt.s32.f32 %v3212
        %v3277 = vcvt.s32.f32 %v3213
        %v3278 = vcvt.s32.f32 %v3214
        %v3279 = vcvt.s32.f32 %v3215
        %v3280 = vcvt.s32.f32 %v3216
        %v3281 = vcvt.s32.f32 %v3217
        %v3282 = vcvt.s32.f32 %v3218
        %v3283 = vcvt.s32.f32 %v3219
        %v3284 = vcvt.s32.f32 %v3220
        %v3285 = vcvt.s32.f32 %v3221
        %v3286 = vcvt.s32.f32 %v3222
        %v3287 = vcvt.s32.f32 %v3223
        %v3288 = vcvt.s32.f32 %v3224
        %v3289 = vcvt.s32.f32 %v3225
        %v3290 = vcvt.s32.f32 %v3226
        %v3291 = vcvt.s32.f32 %v3227
        %v3292 = vcvt.s32.f32 %v3228
        %v3293 = vcvt.s32.f32 %v3229
        %v3294 = vpack.c.bf16 %v3232, %v3230
        %v3295 = vpack.c.bf16 %v3233, %v3231
        %v3296 = vpack.c.bf16 %v3236, %v3234
        %v3297 = vpack.c.bf16 %v3237, %v3235
        %v3298 = vpack.c.bf16 %v3240, %v3238
        %v3299 = vpack.c.bf16 %v3241, %v3239
        %v3300 = vpack.c.bf16 %v3244, %v3242
        %v3301 = vpack.c.bf16 %v3245, %v3243
        %v3302 = vpack.c.bf16 %v3248, %v3246
        %v3303 = vpack.c.bf16 %v3249, %v3247
        %v3304 = vpack.c.bf16 %v3252, %v3250
        %v3305 = vpack.c.bf16 %v3253, %v3251
        %v3306 = vpack.c.bf16 %v3256, %v3254
        %v3307 = vpack.c.bf16 %v3257, %v3255
        %v3308 = vpack.c.bf16 %v3260, %v3258
        %v3309 = vpack.c.bf16 %v3261, %v3259
        %v3310 = vpack.c.bf16 %v3264, %v3262
        %v3311 = vpack.c.bf16 %v3265, %v3263
        %v3312 = vpack.c.bf16 %v3268, %v3266
        %v3313 = vpack.c.bf16 %v3269, %v3267
        %v3314 = vpack.c.bf16 %v3272, %v3270
        %v3315 = vpack.c.bf16 %v3273, %v3271
        %v3316 = vpack.c.bf16 %v3276, %v3274
        %v3317 = vpack.c.bf16 %v3277, %v3275
        %v3318 = vpack.c.bf16 %v3280, %v3278
        %v3319 = vpack.c.bf16 %v3281, %v3279
        %v3320 = vpack.c.bf16 %v3284, %v3282
        %v3321 = vpack.c.bf16 %v3285, %v3283
        %v3322 = vpack.c.bf16 %v3288, %v3286
        %v3323 = vpack.c.bf16 %v3289, %v3287
        %v3324 = vpack.c.bf16 %v3292, %v3290
        %v3325 = vpack.c.bf16 %v3293, %v3291
        %s3326 = smul.u32 %s2040, 192
        %s3327 = smul.addr %s3326, 4
        %s3328 = scalar_lea.vmem %s4, %s3327
        %v3329 = vld [vmem:[%s3328] sm:$0xff]
        %v3330 = vld [vmem:[%s3328 + $0x8] sm:$0xff]
        %v3331 = vld [vmem:[%s3328 + $0x10] sm:$0xff]
        %v3332 = vld [vmem:[%s3328 + $0x18] sm:$0xff]
        %v3333 = vld [vmem:[%s3328 + $0x20] sm:$0xff]
        %v3334 = vld [vmem:[%s3328 + $0x28] sm:$0xff]
        %v3335 = vld [vmem:[%s3328 + $0x30] sm:$0xff]
        %v3336 = vld [vmem:[%s3328 + $0x38] sm:$0xff]
        %v3337 = vld [vmem:[%s3328 + $0x40] sm:$0xff]
        %v3338 = vld [vmem:[%s3328 + $0x48] sm:$0xff]
        %v3339 = vld [vmem:[%s3328 + $0x50] sm:$0xff]
        %v3340 = vld [vmem:[%s3328 + $0x58] sm:$0xff]
        %v3341 = vld [vmem:[%s3328 + $0x60] sm:$0xff]
        %v3342 = vld [vmem:[%s3328 + $0x68] sm:$0xff]
        %v3343 = vld [vmem:[%s3328 + $0x70] sm:$0xff]
        %v3344 = vld [vmem:[%s3328 + $0x78] sm:$0xff]
        %v3345 = vld [vmem:[%s3328 + $0x80] sm:$0xff]
        %v3346 = vld [vmem:[%s3328 + $0x88] sm:$0xff]
        %v3347 = vld [vmem:[%s3328 + $0x90] sm:$0xff]
        %v3348 = vld [vmem:[%s3328 + $0x98] sm:$0xff]
        %v3349 = vld [vmem:[%s3328 + $0xa0] sm:$0xff]
        %v3350 = vld [vmem:[%s3328 + $0xa8] sm:$0xff]
        %v3351 = vld [vmem:[%s3328 + $0xb0] sm:$0xff]
        %v3352 = vld [vmem:[%s3328 + $0xb8] sm:$0xff]
        %v3353 = vld [vmem:[%s3328 + $0xc0] sm:$0xff]
        %v3354 = vld [vmem:[%s3328 + $0xc8] sm:$0xff]
        %v3355 = vld [vmem:[%s3328 + $0xd0] sm:$0xff]
        %v3356 = vld [vmem:[%s3328 + $0xd8] sm:$0xff]
        %v3357 = vld [vmem:[%s3328 + $0xe0] sm:$0xff]
        %v3358 = vld [vmem:[%s3328 + $0xe8] sm:$0xff]
        %v3359 = vld [vmem:[%s3328 + $0xf0] sm:$0xff]
        %v3360 = vld [vmem:[%s3328 + $0xf8] sm:$0xff]
        %v3361 = vld [vmem:[%s3328 + $0x100] sm:$0xff]
        %v3362 = vld [vmem:[%s3328 + $0x108] sm:$0xff]
        %v3363 = vld [vmem:[%s3328 + $0x110] sm:$0xff]
        %v3364 = vld [vmem:[%s3328 + $0x118] sm:$0xff]
        %v3365 = vld [vmem:[%s3328 + $0x120] sm:$0xff]
        %v3366 = vld [vmem:[%s3328 + $0x128] sm:$0xff]
        %v3367 = vld [vmem:[%s3328 + $0x130] sm:$0xff]
        %v3368 = vld [vmem:[%s3328 + $0x138] sm:$0xff]
        %v3369 = vld [vmem:[%s3328 + $0x140] sm:$0xff]
        %v3370 = vld [vmem:[%s3328 + $0x148] sm:$0xff]
        %v3371 = vld [vmem:[%s3328 + $0x150] sm:$0xff]
        %v3372 = vld [vmem:[%s3328 + $0x158] sm:$0xff]
        %v3373 = vld [vmem:[%s3328 + $0x160] sm:$0xff]
        %v3374 = vld [vmem:[%s3328 + $0x168] sm:$0xff]
        %v3375 = vld [vmem:[%s3328 + $0x170] sm:$0xff]
        %v3376 = vld [vmem:[%s3328 + $0x178] sm:$0xff]
        %v3377 = vld [vmem:[%s3328 + $0x180] sm:$0xff]
        %v3378 = vld [vmem:[%s3328 + $0x188] sm:$0xff]
        %v3379 = vld [vmem:[%s3328 + $0x190] sm:$0xff]
        %v3380 = vld [vmem:[%s3328 + $0x198] sm:$0xff]
        %v3381 = vld [vmem:[%s3328 + $0x1a0] sm:$0xff]
        %v3382 = vld [vmem:[%s3328 + $0x1a8] sm:$0xff]
        %v3383 = vld [vmem:[%s3328 + $0x1b0] sm:$0xff]
        %v3384 = vld [vmem:[%s3328 + $0x1b8] sm:$0xff]
        %v3385 = vld [vmem:[%s3328 + $0x1c0] sm:$0xff]
        %v3386 = vld [vmem:[%s3328 + $0x1c8] sm:$0xff]
        %v3387 = vld [vmem:[%s3328 + $0x1d0] sm:$0xff]
        %v3388 = vld [vmem:[%s3328 + $0x1d8] sm:$0xff]
        %v3389 = vld [vmem:[%s3328 + $0x1e0] sm:$0xff]
        %v3390 = vld [vmem:[%s3328 + $0x1e8] sm:$0xff]
        %v3391 = vld [vmem:[%s3328 + $0x1f0] sm:$0xff]
        %v3392 = vld [vmem:[%s3328 + $0x1f8] sm:$0xff]
        %v3393 = vld [vmem:[%s3328 + $0x200] sm:$0xff]
        %v3394 = vld [vmem:[%s3328 + $0x208] sm:$0xff]
        %v3395 = vld [vmem:[%s3328 + $0x210] sm:$0xff]
        %v3396 = vld [vmem:[%s3328 + $0x218] sm:$0xff]
        %v3397 = vld [vmem:[%s3328 + $0x220] sm:$0xff]
        %v3398 = vld [vmem:[%s3328 + $0x228] sm:$0xff]
        %v3399 = vld [vmem:[%s3328 + $0x230] sm:$0xff]
        %v3400 = vld [vmem:[%s3328 + $0x238] sm:$0xff]
        %v3401 = vld [vmem:[%s3328 + $0x240] sm:$0xff]
        %v3402 = vld [vmem:[%s3328 + $0x248] sm:$0xff]
        %v3403 = vld [vmem:[%s3328 + $0x250] sm:$0xff]
        %v3404 = vld [vmem:[%s3328 + $0x258] sm:$0xff]
        %v3405 = vld [vmem:[%s3328 + $0x260] sm:$0xff]
        %v3406 = vld [vmem:[%s3328 + $0x268] sm:$0xff]
        %v3407 = vld [vmem:[%s3328 + $0x270] sm:$0xff]
        %v3408 = vld [vmem:[%s3328 + $0x278] sm:$0xff]
        %v3409 = vld [vmem:[%s3328 + $0x280] sm:$0xff]
        %v3410 = vld [vmem:[%s3328 + $0x288] sm:$0xff]
        %v3411 = vld [vmem:[%s3328 + $0x290] sm:$0xff]
        %v3412 = vld [vmem:[%s3328 + $0x298] sm:$0xff]
        %v3413 = vld [vmem:[%s3328 + $0x2a0] sm:$0xff]
        %v3414 = vld [vmem:[%s3328 + $0x2a8] sm:$0xff]
        %v3415 = vld [vmem:[%s3328 + $0x2b0] sm:$0xff]
        %v3416 = vld [vmem:[%s3328 + $0x2b8] sm:$0xff]
        %v3417 = vld [vmem:[%s3328 + $0x2c0] sm:$0xff]
        %v3418 = vld [vmem:[%s3328 + $0x2c8] sm:$0xff]
        %v3419 = vld [vmem:[%s3328 + $0x2d0] sm:$0xff]
        %v3420 = vld [vmem:[%s3328 + $0x2d8] sm:$0xff]
        %v3421 = vld [vmem:[%s3328 + $0x2e0] sm:$0xff]
        %v3422 = vld [vmem:[%s3328 + $0x2e8] sm:$0xff]
        %v3423 = vld [vmem:[%s3328 + $0x2f0] sm:$0xff]
        %v3424 = vld [vmem:[%s3328 + $0x2f8] sm:$0xff]
        %v3426 = vlaneseq
        %v3427 = vshrl.u32 %v3426, 7
        %v3428 = vsub.s32 0, %v3427
        %v3429 = vrot.slane %v2035, %v3428
        %v3430 = vlaneseq
        %v3431 = vshrl.u32 %v3430, 7
        %v3432 = vsub.s32 1, %v3431
        %v3433 = vrot.slane %v2035, %v3432
        %v3434 = vlaneseq
        %v3435 = vshrl.u32 %v3434, 7
        %v3436 = vsub.s32 2, %v3435
        %v3437 = vrot.slane %v2035, %v3436
        %v3438 = vlaneseq
        %v3439 = vshrl.u32 %v3438, 7
        %v3440 = vsub.s32 3, %v3439
        %v3441 = vrot.slane %v2035, %v3440
        %v3442 = vlaneseq
        %v3443 = vshrl.u32 %v3442, 7
        %v3444 = vsub.s32 4, %v3443
        %v3445 = vrot.slane %v2035, %v3444
        %v3446 = vlaneseq
        %v3447 = vshrl.u32 %v3446, 7
        %v3448 = vsub.s32 5, %v3447
        %v3449 = vrot.slane %v2035, %v3448
        %v3552 = vunpack.c.l.b16 %v3329
        %v3553 = vunpack.c.h.b16 %v3329
        %v3554 = vunpack.c.l.b16 %v3330
        %v3555 = vunpack.c.h.b16 %v3330
        %v3556 = vunpack.c.l.b16 %v3331
        %v3557 = vunpack.c.h.b16 %v3331
        %v3558 = vunpack.c.l.b16 %v3332
        %v3559 = vunpack.c.h.b16 %v3332
        %v3560 = vunpack.c.l.b16 %v3333
        %v3561 = vunpack.c.h.b16 %v3333
        %v3562 = vunpack.c.l.b16 %v3334
        %v3563 = vunpack.c.h.b16 %v3334
        %v3564 = vunpack.c.l.b16 %v3335
        %v3565 = vunpack.c.h.b16 %v3335
        %v3566 = vunpack.c.l.b16 %v3336
        %v3567 = vunpack.c.h.b16 %v3336
        %v3568 = vunpack.c.l.b16 %v3337
        %v3569 = vunpack.c.h.b16 %v3337
        %v3570 = vunpack.c.l.b16 %v3338
        %v3571 = vunpack.c.h.b16 %v3338
        %v3572 = vunpack.c.l.b16 %v3339
        %v3573 = vunpack.c.h.b16 %v3339
        %v3574 = vunpack.c.l.b16 %v3340
        %v3575 = vunpack.c.h.b16 %v3340
        %v3576 = vunpack.c.l.b16 %v3341
        %v3577 = vunpack.c.h.b16 %v3341
        %v3578 = vunpack.c.l.b16 %v3342
        %v3579 = vunpack.c.h.b16 %v3342
        %v3580 = vunpack.c.l.b16 %v3343
        %v3581 = vunpack.c.h.b16 %v3343
        %v3582 = vunpack.c.l.b16 %v3344
        %v3583 = vunpack.c.h.b16 %v3344
        %v3584 = vunpack.c.l.b16 %v3345
        %v3585 = vunpack.c.h.b16 %v3345
        %v3586 = vunpack.c.l.b16 %v3346
        %v3587 = vunpack.c.h.b16 %v3346
        %v3588 = vunpack.c.l.b16 %v3347
        %v3589 = vunpack.c.h.b16 %v3347
        %v3590 = vunpack.c.l.b16 %v3348
        %v3591 = vunpack.c.h.b16 %v3348
        %v3592 = vunpack.c.l.b16 %v3349
        %v3593 = vunpack.c.h.b16 %v3349
        %v3594 = vunpack.c.l.b16 %v3350
        %v3595 = vunpack.c.h.b16 %v3350
        %v3596 = vunpack.c.l.b16 %v3351
        %v3597 = vunpack.c.h.b16 %v3351
        %v3598 = vunpack.c.l.b16 %v3352
        %v3599 = vunpack.c.h.b16 %v3352
        %v3600 = vunpack.c.l.b16 %v3353
        %v3601 = vunpack.c.h.b16 %v3353
        %v3602 = vunpack.c.l.b16 %v3354
        %v3603 = vunpack.c.h.b16 %v3354
        %v3604 = vunpack.c.l.b16 %v3355
        %v3605 = vunpack.c.h.b16 %v3355
        %v3606 = vunpack.c.l.b16 %v3356
        %v3607 = vunpack.c.h.b16 %v3356
        %v3608 = vunpack.c.l.b16 %v3357
        %v3609 = vunpack.c.h.b16 %v3357
        %v3610 = vunpack.c.l.b16 %v3358
        %v3611 = vunpack.c.h.b16 %v3358
        %v3612 = vunpack.c.l.b16 %v3359
        %v3613 = vunpack.c.h.b16 %v3359
        %v3614 = vunpack.c.l.b16 %v3360
        %v3615 = vunpack.c.h.b16 %v3360
        %v3616 = vunpack.c.l.b16 %v3361
        %v3617 = vunpack.c.h.b16 %v3361
        %v3618 = vunpack.c.l.b16 %v3362
        %v3619 = vunpack.c.h.b16 %v3362
        %v3620 = vunpack.c.l.b16 %v3363
        %v3621 = vunpack.c.h.b16 %v3363
        %v3622 = vunpack.c.l.b16 %v3364
        %v3623 = vunpack.c.h.b16 %v3364
        %v3624 = vunpack.c.l.b16 %v3365
        %v3625 = vunpack.c.h.b16 %v3365
        %v3626 = vunpack.c.l.b16 %v3366
        %v3627 = vunpack.c.h.b16 %v3366
        %v3628 = vunpack.c.l.b16 %v3367
        %v3629 = vunpack.c.h.b16 %v3367
        %v3630 = vunpack.c.l.b16 %v3368
        %v3631 = vunpack.c.h.b16 %v3368
        %v3632 = vunpack.c.l.b16 %v3369
        %v3633 = vunpack.c.h.b16 %v3369
        %v3634 = vunpack.c.l.b16 %v3370
        %v3635 = vunpack.c.h.b16 %v3370
        %v3636 = vunpack.c.l.b16 %v3371
        %v3637 = vunpack.c.h.b16 %v3371
        %v3638 = vunpack.c.l.b16 %v3372
        %v3639 = vunpack.c.h.b16 %v3372
        %v3640 = vunpack.c.l.b16 %v3373
        %v3641 = vunpack.c.h.b16 %v3373
        %v3642 = vunpack.c.l.b16 %v3374
        %v3643 = vunpack.c.h.b16 %v3374
        %v3644 = vunpack.c.l.b16 %v3375
        %v3645 = vunpack.c.h.b16 %v3375
        %v3646 = vunpack.c.l.b16 %v3376
        %v3647 = vunpack.c.h.b16 %v3376
        %v3648 = vunpack.c.l.b16 %v3377
        %v3649 = vunpack.c.h.b16 %v3377
        %v3650 = vunpack.c.l.b16 %v3378
        %v3651 = vunpack.c.h.b16 %v3378
        %v3652 = vunpack.c.l.b16 %v3379
        %v3653 = vunpack.c.h.b16 %v3379
        %v3654 = vunpack.c.l.b16 %v3380
        %v3655 = vunpack.c.h.b16 %v3380
        %v3656 = vunpack.c.l.b16 %v3381
        %v3657 = vunpack.c.h.b16 %v3381
        %v3658 = vunpack.c.l.b16 %v3382
        %v3659 = vunpack.c.h.b16 %v3382
        %v3660 = vunpack.c.l.b16 %v3383
        %v3661 = vunpack.c.h.b16 %v3383
        %v3662 = vunpack.c.l.b16 %v3384
        %v3663 = vunpack.c.h.b16 %v3384
        %v3664 = vunpack.c.l.b16 %v3385
        %v3665 = vunpack.c.h.b16 %v3385
        %v3666 = vunpack.c.l.b16 %v3386
        %v3667 = vunpack.c.h.b16 %v3386
        %v3668 = vunpack.c.l.b16 %v3387
        %v3669 = vunpack.c.h.b16 %v3387
        %v3670 = vunpack.c.l.b16 %v3388
        %v3671 = vunpack.c.h.b16 %v3388
        %v3672 = vunpack.c.l.b16 %v3389
        %v3673 = vunpack.c.h.b16 %v3389
        %v3674 = vunpack.c.l.b16 %v3390
        %v3675 = vunpack.c.h.b16 %v3390
        %v3676 = vunpack.c.l.b16 %v3391
        %v3677 = vunpack.c.h.b16 %v3391
        %v3678 = vunpack.c.l.b16 %v3392
        %v3679 = vunpack.c.h.b16 %v3392
        %v3680 = vunpack.c.l.b16 %v3393
        %v3681 = vunpack.c.h.b16 %v3393
        %v3682 = vunpack.c.l.b16 %v3394
        %v3683 = vunpack.c.h.b16 %v3394
        %v3684 = vunpack.c.l.b16 %v3395
        %v3685 = vunpack.c.h.b16 %v3395
        %v3686 = vunpack.c.l.b16 %v3396
        %v3687 = vunpack.c.h.b16 %v3396
        %v3688 = vunpack.c.l.b16 %v3397
        %v3689 = vunpack.c.h.b16 %v3397
        %v3690 = vunpack.c.l.b16 %v3398
        %v3691 = vunpack.c.h.b16 %v3398
        %v3692 = vunpack.c.l.b16 %v3399
        %v3693 = vunpack.c.h.b16 %v3399
        %v3694 = vunpack.c.l.b16 %v3400
        %v3695 = vunpack.c.h.b16 %v3400
        %v3696 = vunpack.c.l.b16 %v3401
        %v3697 = vunpack.c.h.b16 %v3401
        %v3698 = vunpack.c.l.b16 %v3402
        %v3699 = vunpack.c.h.b16 %v3402
        %v3700 = vunpack.c.l.b16 %v3403
        %v3701 = vunpack.c.h.b16 %v3403
        %v3702 = vunpack.c.l.b16 %v3404
        %v3703 = vunpack.c.h.b16 %v3404
        %v3704 = vunpack.c.l.b16 %v3405
        %v3705 = vunpack.c.h.b16 %v3405
        %v3706 = vunpack.c.l.b16 %v3406
        %v3707 = vunpack.c.h.b16 %v3406
        %v3708 = vunpack.c.l.b16 %v3407
        %v3709 = vunpack.c.h.b16 %v3407
        %v3710 = vunpack.c.l.b16 %v3408
        %v3711 = vunpack.c.h.b16 %v3408
        %v3712 = vunpack.c.l.b16 %v3409
        %v3713 = vunpack.c.h.b16 %v3409
        %v3714 = vunpack.c.l.b16 %v3410
        %v3715 = vunpack.c.h.b16 %v3410
        %v3716 = vunpack.c.l.b16 %v3411
        %v3717 = vunpack.c.h.b16 %v3411
        %v3718 = vunpack.c.l.b16 %v3412
        %v3719 = vunpack.c.h.b16 %v3412
        %v3720 = vunpack.c.l.b16 %v3413
        %v3721 = vunpack.c.h.b16 %v3413
        %v3722 = vunpack.c.l.b16 %v3414
        %v3723 = vunpack.c.h.b16 %v3414
        %v3724 = vunpack.c.l.b16 %v3415
        %v3725 = vunpack.c.h.b16 %v3415
        %v3726 = vunpack.c.l.b16 %v3416
        %v3727 = vunpack.c.h.b16 %v3416
        %v3728 = vunpack.c.l.b16 %v3417
        %v3729 = vunpack.c.h.b16 %v3417
        %v3730 = vunpack.c.l.b16 %v3418
        %v3731 = vunpack.c.h.b16 %v3418
        %v3732 = vunpack.c.l.b16 %v3419
        %v3733 = vunpack.c.h.b16 %v3419
        %v3734 = vunpack.c.l.b16 %v3420
        %v3735 = vunpack.c.h.b16 %v3420
        %v3736 = vunpack.c.l.b16 %v3421
        %v3737 = vunpack.c.h.b16 %v3421
        %v3738 = vunpack.c.l.b16 %v3422
        %v3739 = vunpack.c.h.b16 %v3422
        %v3740 = vunpack.c.l.b16 %v3423
        %v3741 = vunpack.c.h.b16 %v3423
        %v3742 = vunpack.c.l.b16 %v3424
        %v3743 = vunpack.c.h.b16 %v3424
        %v3744 = vpack.c.b16 %v3558, %v3552
        %v3745 = vpack.c.b16 %v3559, %v3553
        %v3746 = vpack.c.b16 %v3560, %v3554
        %v3747 = vpack.c.b16 %v3561, %v3555
        %v3748 = vpack.c.b16 %v3562, %v3556
        %v3749 = vpack.c.b16 %v3563, %v3557
        %v3750 = vpack.c.b16 %v3570, %v3564
        %v3751 = vpack.c.b16 %v3571, %v3565
        %v3752 = vpack.c.b16 %v3572, %v3566
        %v3753 = vpack.c.b16 %v3573, %v3567
        %v3754 = vpack.c.b16 %v3574, %v3568
        %v3755 = vpack.c.b16 %v3575, %v3569
        %v3756 = vpack.c.b16 %v3582, %v3576
        %v3757 = vpack.c.b16 %v3583, %v3577
        %v3758 = vpack.c.b16 %v3584, %v3578
        %v3759 = vpack.c.b16 %v3585, %v3579
        %v3760 = vpack.c.b16 %v3586, %v3580
        %v3761 = vpack.c.b16 %v3587, %v3581
        %v3762 = vpack.c.b16 %v3594, %v3588
        %v3763 = vpack.c.b16 %v3595, %v3589
        %v3764 = vpack.c.b16 %v3596, %v3590
        %v3765 = vpack.c.b16 %v3597, %v3591
        %v3766 = vpack.c.b16 %v3598, %v3592
        %v3767 = vpack.c.b16 %v3599, %v3593
        %v3768 = vpack.c.b16 %v3606, %v3600
        %v3769 = vpack.c.b16 %v3607, %v3601
        %v3770 = vpack.c.b16 %v3608, %v3602
        %v3771 = vpack.c.b16 %v3609, %v3603
        %v3772 = vpack.c.b16 %v3610, %v3604
        %v3773 = vpack.c.b16 %v3611, %v3605
        %v3774 = vpack.c.b16 %v3618, %v3612
        %v3775 = vpack.c.b16 %v3619, %v3613
        %v3776 = vpack.c.b16 %v3620, %v3614
        %v3777 = vpack.c.b16 %v3621, %v3615
        %v3778 = vpack.c.b16 %v3622, %v3616
        %v3779 = vpack.c.b16 %v3623, %v3617
        %v3780 = vpack.c.b16 %v3630, %v3624
        %v3781 = vpack.c.b16 %v3631, %v3625
        %v3782 = vpack.c.b16 %v3632, %v3626
        %v3783 = vpack.c.b16 %v3633, %v3627
        %v3784 = vpack.c.b16 %v3634, %v3628
        %v3785 = vpack.c.b16 %v3635, %v3629
        %v3786 = vpack.c.b16 %v3642, %v3636
        %v3787 = vpack.c.b16 %v3643, %v3637
        %v3788 = vpack.c.b16 %v3644, %v3638
        %v3789 = vpack.c.b16 %v3645, %v3639
        %v3790 = vpack.c.b16 %v3646, %v3640
        %v3791 = vpack.c.b16 %v3647, %v3641
        %v3792 = vpack.c.b16 %v3654, %v3648
        %v3793 = vpack.c.b16 %v3655, %v3649
        %v3794 = vpack.c.b16 %v3656, %v3650
        %v3795 = vpack.c.b16 %v3657, %v3651
        %v3796 = vpack.c.b16 %v3658, %v3652
        %v3797 = vpack.c.b16 %v3659, %v3653
        %v3798 = vpack.c.b16 %v3666, %v3660
        %v3799 = vpack.c.b16 %v3667, %v3661
        %v3800 = vpack.c.b16 %v3668, %v3662
        %v3801 = vpack.c.b16 %v3669, %v3663
        %v3802 = vpack.c.b16 %v3670, %v3664
        %v3803 = vpack.c.b16 %v3671, %v3665
        %v3804 = vpack.c.b16 %v3678, %v3672
        %v3805 = vpack.c.b16 %v3679, %v3673
        %v3806 = vpack.c.b16 %v3680, %v3674
        %v3807 = vpack.c.b16 %v3681, %v3675
        %v3808 = vpack.c.b16 %v3682, %v3676
        %v3809 = vpack.c.b16 %v3683, %v3677
        %v3810 = vpack.c.b16 %v3690, %v3684
        %v3811 = vpack.c.b16 %v3691, %v3685
        %v3812 = vpack.c.b16 %v3692, %v3686
        %v3813 = vpack.c.b16 %v3693, %v3687
        %v3814 = vpack.c.b16 %v3694, %v3688
        %v3815 = vpack.c.b16 %v3695, %v3689
        %v3816 = vpack.c.b16 %v3702, %v3696
        %v3817 = vpack.c.b16 %v3703, %v3697
        %v3818 = vpack.c.b16 %v3704, %v3698
        %v3819 = vpack.c.b16 %v3705, %v3699
        %v3820 = vpack.c.b16 %v3706, %v3700
        %v3821 = vpack.c.b16 %v3707, %v3701
        %v3822 = vpack.c.b16 %v3714, %v3708
        %v3823 = vpack.c.b16 %v3715, %v3709
        %v3824 = vpack.c.b16 %v3716, %v3710
        %v3825 = vpack.c.b16 %v3717, %v3711
        %v3826 = vpack.c.b16 %v3718, %v3712
        %v3827 = vpack.c.b16 %v3719, %v3713
        %v3828 = vpack.c.b16 %v3726, %v3720
        %v3829 = vpack.c.b16 %v3727, %v3721
        %v3830 = vpack.c.b16 %v3728, %v3722
        %v3831 = vpack.c.b16 %v3729, %v3723
        %v3832 = vpack.c.b16 %v3730, %v3724
        %v3833 = vpack.c.b16 %v3731, %v3725
        %v3834 = vpack.c.b16 %v3738, %v3732
        %v3835 = vpack.c.b16 %v3739, %v3733
        %v3836 = vpack.c.b16 %v3740, %v3734
        %v3837 = vpack.c.b16 %v3741, %v3735
        %v3838 = vpack.c.b16 %v3742, %v3736
        %v3839 = vpack.c.b16 %v3743, %v3737
        %3936 = vmatprep.subr.bf16.mxu0 %v3787
        %3937 = vmatpush1.bf16.msra.mxu0 %v3786
        %3938 = vmatprep.subr.bf16.mxu0 %v3781
        %3939 = vmatpush1.bf16.msra.mxu0 %v3780
        %3940 = vmatprep.subr.bf16.mxu0 %v3775
        %3941 = vmatpush1.bf16.msra.mxu0 %v3774
        %3942 = vmatprep.subr.bf16.mxu0 %v3769
        %3943 = vmatpush1.bf16.msra.mxu0 %v3768
        %3944 = vmatprep.subr.bf16.mxu0 %v3763
        %3945 = vmatpush1.bf16.msra.mxu0 %v3762
        %3946 = vmatprep.subr.bf16.mxu0 %v3757
        %3947 = vmatpush1.bf16.msra.mxu0 %v3756
        %3948 = vmatprep.subr.bf16.mxu0 %v3751
        %3949 = vmatpush1.bf16.msra.mxu0 %v3750
        %3950 = vmatprep.subr.bf16.mxu0 %v3745
        %3951 = vmatpush1.bf16.msra.mxu0 %v3744
        %3952 = vmatprep.subr.bf16.mxu0 %v3835
        %3953 = vmatpush2.bf16.msra.mxu0 %v3834
        %3954 = vmatprep.subr.bf16.mxu0 %v3829
        %3955 = vmatpush2.bf16.msra.mxu0 %v3828
        %3956 = vmatprep.subr.bf16.mxu0 %v3823
        %3957 = vmatpush2.bf16.msra.mxu0 %v3822
        %3958 = vmatprep.subr.bf16.mxu0 %v3817
        %3959 = vmatpush2.bf16.msra.mxu0 %v3816
        %3960 = vmatprep.subr.bf16.mxu0 %v3811
        %3961 = vmatpush2.bf16.msra.mxu0 %v3810
        %3962 = vmatprep.subr.bf16.mxu0 %v3805
        %3963 = vmatpush2.bf16.msra.mxu0 %v3804
        %3964 = vmatprep.subr.bf16.mxu0 %v3799
        %3965 = vmatpush2.bf16.msra.mxu0 %v3798
        %3966 = vmatprep.subr.bf16.mxu0 %v3793
        %3967 = vmatpush2.bf16.msra.mxu0 %v3792
        %3968 = vmatprep.mubr.bf16.mxu0 %v3295
        %3969 = vmatmul.mubr.bf16.gmra.mxu0 %v3294
        %v3970 = vpop.f32.mrf.mxu0
        %v3971 = vadd.f32 %v3429, %v3970
        %v3972 = vpop.f32.mrf.mxu0
        %v3973 = vadd.f32 %v3433, %v3972
        %v3974 = vpop.f32.mrf.mxu0
        %v3975 = vadd.f32 %v3429, %v3974
        %v3976 = vpop.f32.mrf.mxu0
        %v3977 = vadd.f32 %v3433, %v3976
        %3978 = vmatprep.mubr.bf16.mxu0 %v3297
        %3979 = vmatmul.mubr.bf16.gmra.mxu0 %v3296
        %v3980 = vpop.f32.mrf.mxu0
        %v3981 = vadd.f32 %v3429, %v3980
        %v3982 = vpop.f32.mrf.mxu0
        %v3983 = vadd.f32 %v3433, %v3982
        %v3984 = vpop.f32.mrf.mxu0
        %v3985 = vadd.f32 %v3429, %v3984
        %v3986 = vpop.f32.mrf.mxu0
        %v3987 = vadd.f32 %v3433, %v3986
        %3988 = vmatprep.mubr.bf16.mxu0 %v3299
        %3989 = vmatmul.mubr.bf16.gmra.mxu0 %v3298
        %v3990 = vpop.f32.mrf.mxu0
        %v3991 = vadd.f32 %v3429, %v3990
        %v3992 = vpop.f32.mrf.mxu0
        %v3993 = vadd.f32 %v3433, %v3992
        %v3994 = vpop.f32.mrf.mxu0
        %v3995 = vadd.f32 %v3429, %v3994
        %v3996 = vpop.f32.mrf.mxu0
        %v3997 = vadd.f32 %v3433, %v3996
        %3998 = vmatprep.mubr.bf16.mxu0 %v3301
        %3999 = vmatmul.mubr.bf16.gmra.mxu0 %v3300
        %v4000 = vpop.f32.mrf.mxu0
        %v4001 = vadd.f32 %v3429, %v4000
        %v4002 = vpop.f32.mrf.mxu0
        %v4003 = vadd.f32 %v3433, %v4002
        %v4004 = vpop.f32.mrf.mxu0
        %v4005 = vadd.f32 %v3429, %v4004
        %v4006 = vpop.f32.mrf.mxu0
        %v4007 = vadd.f32 %v3433, %v4006
        %4008 = vmatprep.mubr.bf16.mxu0 %v3303
        %4009 = vmatmul.mubr.bf16.gmra.mxu0 %v3302
        %v4010 = vpop.f32.mrf.mxu0
        %v4011 = vadd.f32 %v3429, %v4010
        %v4012 = vpop.f32.mrf.mxu0
        %v4013 = vadd.f32 %v3433, %v4012
        %v4014 = vpop.f32.mrf.mxu0
        %v4015 = vadd.f32 %v3429, %v4014
        %v4016 = vpop.f32.mrf.mxu0
        %v4017 = vadd.f32 %v3433, %v4016
        %4018 = vmatprep.mubr.bf16.mxu0 %v3305
        %4019 = vmatmul.mubr.bf16.gmra.mxu0 %v3304
        %v4020 = vpop.f32.mrf.mxu0
        %v4021 = vadd.f32 %v3429, %v4020
        %v4022 = vpop.f32.mrf.mxu0
        %v4023 = vadd.f32 %v3433, %v4022
        %v4024 = vpop.f32.mrf.mxu0
        %v4025 = vadd.f32 %v3429, %v4024
        %v4026 = vpop.f32.mrf.mxu0
        %v4027 = vadd.f32 %v3433, %v4026
        %4028 = vmatprep.mubr.bf16.mxu0 %v3307
        %4029 = vmatmul.mubr.bf16.gmra.mxu0 %v3306
        %v4030 = vpop.f32.mrf.mxu0
        %v4031 = vadd.f32 %v3429, %v4030
        %v4032 = vpop.f32.mrf.mxu0
        %v4033 = vadd.f32 %v3433, %v4032
        %v4034 = vpop.f32.mrf.mxu0
        %v4035 = vadd.f32 %v3429, %v4034
        %v4036 = vpop.f32.mrf.mxu0
        %v4037 = vadd.f32 %v3433, %v4036
        %4038 = vmatprep.mubr.bf16.mxu0 %v3309
        %4039 = vmatmul.mubr.bf16.gmra.mxu0 %v3308
        %v4040 = vpop.f32.mrf.mxu0
        %v4041 = vadd.f32 %v3429, %v4040
        %v4042 = vpop.f32.mrf.mxu0
        %v4043 = vadd.f32 %v3433, %v4042
        %v4044 = vpop.f32.mrf.mxu0
        %v4045 = vadd.f32 %v3429, %v4044
        %v4046 = vpop.f32.mrf.mxu0
        %v4047 = vadd.f32 %v3433, %v4046
        %4048 = vmatprep.mubr.bf16.mxu0 %v3311
        %4049 = vmatmul.mubr.bf16.gmra.mxu0 %v3310
        %v4050 = vpop.f32.mrf.mxu0
        %v4051 = vadd.f32 %v3429, %v4050
        %v4052 = vpop.f32.mrf.mxu0
        %v4053 = vadd.f32 %v3433, %v4052
        %v4054 = vpop.f32.mrf.mxu0
        %v4055 = vadd.f32 %v3429, %v4054
        %v4056 = vpop.f32.mrf.mxu0
        %v4057 = vadd.f32 %v3433, %v4056
        %4058 = vmatprep.mubr.bf16.mxu0 %v3313
        %4059 = vmatmul.mubr.bf16.gmra.mxu0 %v3312
        %v4060 = vpop.f32.mrf.mxu0
        %v4061 = vadd.f32 %v3429, %v4060
        %v4062 = vpop.f32.mrf.mxu0
        %v4063 = vadd.f32 %v3433, %v4062
        %v4064 = vpop.f32.mrf.mxu0
        %v4065 = vadd.f32 %v3429, %v4064
        %v4066 = vpop.f32.mrf.mxu0
        %v4067 = vadd.f32 %v3433, %v4066
        %4068 = vmatprep.mubr.bf16.mxu0 %v3315
        %4069 = vmatmul.mubr.bf16.gmra.mxu0 %v3314
        %v4070 = vpop.f32.mrf.mxu0
        %v4071 = vadd.f32 %v3429, %v4070
        %v4072 = vpop.f32.mrf.mxu0
        %v4073 = vadd.f32 %v3433, %v4072
        %v4074 = vpop.f32.mrf.mxu0
        %v4075 = vadd.f32 %v3429, %v4074
        %v4076 = vpop.f32.mrf.mxu0
        %v4077 = vadd.f32 %v3433, %v4076
        %4078 = vmatprep.mubr.bf16.mxu0 %v3317
        %4079 = vmatmul.mubr.bf16.gmra.mxu0 %v3316
        %v4080 = vpop.f32.mrf.mxu0
        %v4081 = vadd.f32 %v3429, %v4080
        %v4082 = vpop.f32.mrf.mxu0
        %v4083 = vadd.f32 %v3433, %v4082
        %v4084 = vpop.f32.mrf.mxu0
        %v4085 = vadd.f32 %v3429, %v4084
        %v4086 = vpop.f32.mrf.mxu0
        %v4087 = vadd.f32 %v3433, %v4086
        %4088 = vmatprep.mubr.bf16.mxu0 %v3319
        %4089 = vmatmul.mubr.bf16.gmra.mxu0 %v3318
        %v4090 = vpop.f32.mrf.mxu0
        %v4091 = vadd.f32 %v3429, %v4090
        %v4092 = vpop.f32.mrf.mxu0
        %v4093 = vadd.f32 %v3433, %v4092
        %v4094 = vpop.f32.mrf.mxu0
        %v4095 = vadd.f32 %v3429, %v4094
        %v4096 = vpop.f32.mrf.mxu0
        %v4097 = vadd.f32 %v3433, %v4096
        %4098 = vmatprep.mubr.bf16.mxu0 %v3321
        %4099 = vmatmul.mubr.bf16.gmra.mxu0 %v3320
        %v4100 = vpop.f32.mrf.mxu0
        %v4101 = vadd.f32 %v3429, %v4100
        %v4102 = vpop.f32.mrf.mxu0
        %v4103 = vadd.f32 %v3433, %v4102
        %v4104 = vpop.f32.mrf.mxu0
        %v4105 = vadd.f32 %v3429, %v4104
        %v4106 = vpop.f32.mrf.mxu0
        %v4107 = vadd.f32 %v3433, %v4106
        %4108 = vmatprep.mubr.bf16.mxu0 %v3323
        %4109 = vmatmul.mubr.bf16.gmra.mxu0 %v3322
        %v4110 = vpop.f32.mrf.mxu0
        %v4111 = vadd.f32 %v3429, %v4110
        %v4112 = vpop.f32.mrf.mxu0
        %v4113 = vadd.f32 %v3433, %v4112
        %v4114 = vpop.f32.mrf.mxu0
        %v4115 = vadd.f32 %v3429, %v4114
        %v4116 = vpop.f32.mrf.mxu0
        %v4117 = vadd.f32 %v3433, %v4116
        %4118 = vmatprep.mubr.bf16.mxu0 %v3325
        %4119 = vmatmul.mubr.bf16.gmra.mxu0 %v3324
        %v4120 = vpop.f32.mrf.mxu0
        %v4121 = vadd.f32 %v3429, %v4120
        %v4122 = vpop.f32.mrf.mxu0
        %v4123 = vadd.f32 %v3433, %v4122
        %v4124 = vpop.f32.mrf.mxu0
        %v4125 = vadd.f32 %v3429, %v4124
        %v4126 = vpop.f32.mrf.mxu0
        %v4127 = vadd.f32 %v3433, %v4126
        %4128 = vdwg.mxu0
        %4129 = vmatprep.subr.bf16.mxu0 %v3789
        %4130 = vmatpush1.bf16.msra.mxu0 %v3788
        %4131 = vmatprep.subr.bf16.mxu0 %v3783
        %4132 = vmatpush1.bf16.msra.mxu0 %v3782
        %4133 = vmatprep.subr.bf16.mxu0 %v3777
        %4134 = vmatpush1.bf16.msra.mxu0 %v3776
        %4135 = vmatprep.subr.bf16.mxu0 %v3771
        %4136 = vmatpush1.bf16.msra.mxu0 %v3770
        %4137 = vmatprep.subr.bf16.mxu0 %v3765
        %4138 = vmatpush1.bf16.msra.mxu0 %v3764
        %4139 = vmatprep.subr.bf16.mxu0 %v3759
        %4140 = vmatpush1.bf16.msra.mxu0 %v3758
        %4141 = vmatprep.subr.bf16.mxu0 %v3753
        %4142 = vmatpush1.bf16.msra.mxu0 %v3752
        %4143 = vmatprep.subr.bf16.mxu0 %v3747
        %4144 = vmatpush1.bf16.msra.mxu0 %v3746
        %4145 = vmatprep.subr.bf16.mxu0 %v3837
        %4146 = vmatpush2.bf16.msra.mxu0 %v3836
        %4147 = vmatprep.subr.bf16.mxu0 %v3831
        %4148 = vmatpush2.bf16.msra.mxu0 %v3830
        %4149 = vmatprep.subr.bf16.mxu0 %v3825
        %4150 = vmatpush2.bf16.msra.mxu0 %v3824
        %4151 = vmatprep.subr.bf16.mxu0 %v3819
        %4152 = vmatpush2.bf16.msra.mxu0 %v3818
        %4153 = vmatprep.subr.bf16.mxu0 %v3813
        %4154 = vmatpush2.bf16.msra.mxu0 %v3812
        %4155 = vmatprep.subr.bf16.mxu0 %v3807
        %4156 = vmatpush2.bf16.msra.mxu0 %v3806
        %4157 = vmatprep.subr.bf16.mxu0 %v3801
        %4158 = vmatpush2.bf16.msra.mxu0 %v3800
        %4159 = vmatprep.subr.bf16.mxu0 %v3795
        %4160 = vmatpush2.bf16.msra.mxu0 %v3794
        %4161 = vmatprep.mubr.bf16.mxu0 %v3295
        %4162 = vmatmul.mubr.bf16.gmra.mxu0 %v3294
        %v4163 = vpop.f32.mrf.mxu0
        %v4164 = vadd.f32 %v3437, %v4163
        %v4165 = vpop.f32.mrf.mxu0
        %v4166 = vadd.f32 %v3441, %v4165
        %v4167 = vpop.f32.mrf.mxu0
        %v4168 = vadd.f32 %v3437, %v4167
        %v4169 = vpop.f32.mrf.mxu0
        %v4170 = vadd.f32 %v3441, %v4169
        %4171 = vmatprep.mubr.bf16.mxu0 %v3297
        %4172 = vmatmul.mubr.bf16.gmra.mxu0 %v3296
        %v4173 = vpop.f32.mrf.mxu0
        %v4174 = vadd.f32 %v3437, %v4173
        %v4175 = vpop.f32.mrf.mxu0
        %v4176 = vadd.f32 %v3441, %v4175
        %v4177 = vpop.f32.mrf.mxu0
        %v4178 = vadd.f32 %v3437, %v4177
        %v4179 = vpop.f32.mrf.mxu0
        %v4180 = vadd.f32 %v3441, %v4179
        %4181 = vmatprep.mubr.bf16.mxu0 %v3299
        %4182 = vmatmul.mubr.bf16.gmra.mxu0 %v3298
        %v4183 = vpop.f32.mrf.mxu0
        %v4184 = vadd.f32 %v3437, %v4183
        %v4185 = vpop.f32.mrf.mxu0
        %v4186 = vadd.f32 %v3441, %v4185
        %v4187 = vpop.f32.mrf.mxu0
        %v4188 = vadd.f32 %v3437, %v4187
        %v4189 = vpop.f32.mrf.mxu0
        %v4190 = vadd.f32 %v3441, %v4189
        %4191 = vmatprep.mubr.bf16.mxu0 %v3301
        %4192 = vmatmul.mubr.bf16.gmra.mxu0 %v3300
        %v4193 = vpop.f32.mrf.mxu0
        %v4194 = vadd.f32 %v3437, %v4193
        %v4195 = vpop.f32.mrf.mxu0
        %v4196 = vadd.f32 %v3441, %v4195
        %v4197 = vpop.f32.mrf.mxu0
        %v4198 = vadd.f32 %v3437, %v4197
        %v4199 = vpop.f32.mrf.mxu0
        %v4200 = vadd.f32 %v3441, %v4199
        %4201 = vmatprep.mubr.bf16.mxu0 %v3303
        %4202 = vmatmul.mubr.bf16.gmra.mxu0 %v3302
        %v4203 = vpop.f32.mrf.mxu0
        %v4204 = vadd.f32 %v3437, %v4203
        %v4205 = vpop.f32.mrf.mxu0
        %v4206 = vadd.f32 %v3441, %v4205
        %v4207 = vpop.f32.mrf.mxu0
        %v4208 = vadd.f32 %v3437, %v4207
        %v4209 = vpop.f32.mrf.mxu0
        %v4210 = vadd.f32 %v3441, %v4209
        %4211 = vmatprep.mubr.bf16.mxu0 %v3305
        %4212 = vmatmul.mubr.bf16.gmra.mxu0 %v3304
        %v4213 = vpop.f32.mrf.mxu0
        %v4214 = vadd.f32 %v3437, %v4213
        %v4215 = vpop.f32.mrf.mxu0
        %v4216 = vadd.f32 %v3441, %v4215
        %v4217 = vpop.f32.mrf.mxu0
        %v4218 = vadd.f32 %v3437, %v4217
        %v4219 = vpop.f32.mrf.mxu0
        %v4220 = vadd.f32 %v3441, %v4219
        %4221 = vmatprep.mubr.bf16.mxu0 %v3307
        %4222 = vmatmul.mubr.bf16.gmra.mxu0 %v3306
        %v4223 = vpop.f32.mrf.mxu0
        %v4224 = vadd.f32 %v3437, %v4223
        %v4225 = vpop.f32.mrf.mxu0
        %v4226 = vadd.f32 %v3441, %v4225
        %v4227 = vpop.f32.mrf.mxu0
        %v4228 = vadd.f32 %v3437, %v4227
        %v4229 = vpop.f32.mrf.mxu0
        %v4230 = vadd.f32 %v3441, %v4229
        %4231 = vmatprep.mubr.bf16.mxu0 %v3309
        %4232 = vmatmul.mubr.bf16.gmra.mxu0 %v3308
        %v4233 = vpop.f32.mrf.mxu0
        %v4234 = vadd.f32 %v3437, %v4233
        %v4235 = vpop.f32.mrf.mxu0
        %v4236 = vadd.f32 %v3441, %v4235
        %v4237 = vpop.f32.mrf.mxu0
        %v4238 = vadd.f32 %v3437, %v4237
        %v4239 = vpop.f32.mrf.mxu0
        %v4240 = vadd.f32 %v3441, %v4239
        %4241 = vmatprep.mubr.bf16.mxu0 %v3311
        %4242 = vmatmul.mubr.bf16.gmra.mxu0 %v3310
        %v4243 = vpop.f32.mrf.mxu0
        %v4244 = vadd.f32 %v3437, %v4243
        %v4245 = vpop.f32.mrf.mxu0
        %v4246 = vadd.f32 %v3441, %v4245
        %v4247 = vpop.f32.mrf.mxu0
        %v4248 = vadd.f32 %v3437, %v4247
        %v4249 = vpop.f32.mrf.mxu0
        %v4250 = vadd.f32 %v3441, %v4249
        %4251 = vmatprep.mubr.bf16.mxu0 %v3313
        %4252 = vmatmul.mubr.bf16.gmra.mxu0 %v3312
        %v4253 = vpop.f32.mrf.mxu0
        %v4254 = vadd.f32 %v3437, %v4253
        %v4255 = vpop.f32.mrf.mxu0
        %v4256 = vadd.f32 %v3441, %v4255
        %v4257 = vpop.f32.mrf.mxu0
        %v4258 = vadd.f32 %v3437, %v4257
        %v4259 = vpop.f32.mrf.mxu0
        %v4260 = vadd.f32 %v3441, %v4259
        %4261 = vmatprep.mubr.bf16.mxu0 %v3315
        %4262 = vmatmul.mubr.bf16.gmra.mxu0 %v3314
        %v4263 = vpop.f32.mrf.mxu0
        %v4264 = vadd.f32 %v3437, %v4263
        %v4265 = vpop.f32.mrf.mxu0
        %v4266 = vadd.f32 %v3441, %v4265
        %v4267 = vpop.f32.mrf.mxu0
        %v4268 = vadd.f32 %v3437, %v4267
        %v4269 = vpop.f32.mrf.mxu0
        %v4270 = vadd.f32 %v3441, %v4269
        %4271 = vmatprep.mubr.bf16.mxu0 %v3317
        %4272 = vmatmul.mubr.bf16.gmra.mxu0 %v3316
        %v4273 = vpop.f32.mrf.mxu0
        %v4274 = vadd.f32 %v3437, %v4273
        %v4275 = vpop.f32.mrf.mxu0
        %v4276 = vadd.f32 %v3441, %v4275
        %v4277 = vpop.f32.mrf.mxu0
        %v4278 = vadd.f32 %v3437, %v4277
        %v4279 = vpop.f32.mrf.mxu0
        %v4280 = vadd.f32 %v3441, %v4279
        %4281 = vmatprep.mubr.bf16.mxu0 %v3319
        %4282 = vmatmul.mubr.bf16.gmra.mxu0 %v3318
        %v4283 = vpop.f32.mrf.mxu0
        %v4284 = vadd.f32 %v3437, %v4283
        %v4285 = vpop.f32.mrf.mxu0
        %v4286 = vadd.f32 %v3441, %v4285
        %v4287 = vpop.f32.mrf.mxu0
        %v4288 = vadd.f32 %v3437, %v4287
        %v4289 = vpop.f32.mrf.mxu0
        %v4290 = vadd.f32 %v3441, %v4289
        %4291 = vmatprep.mubr.bf16.mxu0 %v3321
        %4292 = vmatmul.mubr.bf16.gmra.mxu0 %v3320
        %v4293 = vpop.f32.mrf.mxu0
        %v4294 = vadd.f32 %v3437, %v4293
        %v4295 = vpop.f32.mrf.mxu0
        %v4296 = vadd.f32 %v3441, %v4295
        %v4297 = vpop.f32.mrf.mxu0
        %v4298 = vadd.f32 %v3437, %v4297
        %v4299 = vpop.f32.mrf.mxu0
        %v4300 = vadd.f32 %v3441, %v4299
        %4301 = vmatprep.mubr.bf16.mxu0 %v3323
        %4302 = vmatmul.mubr.bf16.gmra.mxu0 %v3322
        %v4303 = vpop.f32.mrf.mxu0
        %v4304 = vadd.f32 %v3437, %v4303
        %v4305 = vpop.f32.mrf.mxu0
        %v4306 = vadd.f32 %v3441, %v4305
        %v4307 = vpop.f32.mrf.mxu0
        %v4308 = vadd.f32 %v3437, %v4307
        %v4309 = vpop.f32.mrf.mxu0
        %v4310 = vadd.f32 %v3441, %v4309
        %4311 = vmatprep.mubr.bf16.mxu0 %v3325
        %4312 = vmatmul.mubr.bf16.gmra.mxu0 %v3324
        %v4313 = vpop.f32.mrf.mxu0
        %v4314 = vadd.f32 %v3437, %v4313
        %v4315 = vpop.f32.mrf.mxu0
        %v4316 = vadd.f32 %v3441, %v4315
        %v4317 = vpop.f32.mrf.mxu0
        %v4318 = vadd.f32 %v3437, %v4317
        %v4319 = vpop.f32.mrf.mxu0
        %v4320 = vadd.f32 %v3441, %v4319
        %4321 = vdwg.mxu0
        %4322 = vmatprep.subr.bf16.mxu0 %v3791
        %4323 = vmatpush1.bf16.msra.mxu0 %v3790
        %4324 = vmatprep.subr.bf16.mxu0 %v3785
        %4325 = vmatpush1.bf16.msra.mxu0 %v3784
        %4326 = vmatprep.subr.bf16.mxu0 %v3779
        %4327 = vmatpush1.bf16.msra.mxu0 %v3778
        %4328 = vmatprep.subr.bf16.mxu0 %v3773
        %4329 = vmatpush1.bf16.msra.mxu0 %v3772
        %4330 = vmatprep.subr.bf16.mxu0 %v3767
        %4331 = vmatpush1.bf16.msra.mxu0 %v3766
        %4332 = vmatprep.subr.bf16.mxu0 %v3761
        %4333 = vmatpush1.bf16.msra.mxu0 %v3760
        %4334 = vmatprep.subr.bf16.mxu0 %v3755
        %4335 = vmatpush1.bf16.msra.mxu0 %v3754
        %4336 = vmatprep.subr.bf16.mxu0 %v3749
        %4337 = vmatpush1.bf16.msra.mxu0 %v3748
        %4338 = vmatprep.subr.bf16.mxu0 %v3839
        %4339 = vmatpush2.bf16.msra.mxu0 %v3838
        %4340 = vmatprep.subr.bf16.mxu0 %v3833
        %4341 = vmatpush2.bf16.msra.mxu0 %v3832
        %4342 = vmatprep.subr.bf16.mxu0 %v3827
        %4343 = vmatpush2.bf16.msra.mxu0 %v3826
        %4344 = vmatprep.subr.bf16.mxu0 %v3821
        %4345 = vmatpush2.bf16.msra.mxu0 %v3820
        %4346 = vmatprep.subr.bf16.mxu0 %v3815
        %4347 = vmatpush2.bf16.msra.mxu0 %v3814
        %4348 = vmatprep.subr.bf16.mxu0 %v3809
        %4349 = vmatpush2.bf16.msra.mxu0 %v3808
        %4350 = vmatprep.subr.bf16.mxu0 %v3803
        %4351 = vmatpush2.bf16.msra.mxu0 %v3802
        %4352 = vmatprep.subr.bf16.mxu0 %v3797
        %4353 = vmatpush2.bf16.msra.mxu0 %v3796
        %4354 = vmatprep.mubr.bf16.mxu0 %v3295
        %4355 = vmatmul.mubr.bf16.gmra.mxu0 %v3294
        %v4356 = vpop.f32.mrf.mxu0
        %v4357 = vadd.f32 %v3445, %v4356
        %v4358 = vpop.f32.mrf.mxu0
        %v4359 = vadd.f32 %v3449, %v4358
        %v4360 = vpop.f32.mrf.mxu0
        %v4361 = vadd.f32 %v3445, %v4360
        %v4362 = vpop.f32.mrf.mxu0
        %v4363 = vadd.f32 %v3449, %v4362
        %4364 = vmatprep.mubr.bf16.mxu0 %v3297
        %4365 = vmatmul.mubr.bf16.gmra.mxu0 %v3296
        %v4366 = vpop.f32.mrf.mxu0
        %v4367 = vadd.f32 %v3445, %v4366
        %v4368 = vpop.f32.mrf.mxu0
        %v4369 = vadd.f32 %v3449, %v4368
        %v4370 = vpop.f32.mrf.mxu0
        %v4371 = vadd.f32 %v3445, %v4370
        %v4372 = vpop.f32.mrf.mxu0
        %v4373 = vadd.f32 %v3449, %v4372
        %4374 = vmatprep.mubr.bf16.mxu0 %v3299
        %4375 = vmatmul.mubr.bf16.gmra.mxu0 %v3298
        %v4376 = vpop.f32.mrf.mxu0
        %v4377 = vadd.f32 %v3445, %v4376
        %v4378 = vpop.f32.mrf.mxu0
        %v4379 = vadd.f32 %v3449, %v4378
        %v4380 = vpop.f32.mrf.mxu0
        %v4381 = vadd.f32 %v3445, %v4380
        %v4382 = vpop.f32.mrf.mxu0
        %v4383 = vadd.f32 %v3449, %v4382
        %4384 = vmatprep.mubr.bf16.mxu0 %v3301
        %4385 = vmatmul.mubr.bf16.gmra.mxu0 %v3300
        %v4386 = vpop.f32.mrf.mxu0
        %v4387 = vadd.f32 %v3445, %v4386
        %v4388 = vpop.f32.mrf.mxu0
        %v4389 = vadd.f32 %v3449, %v4388
        %v4390 = vpop.f32.mrf.mxu0
        %v4391 = vadd.f32 %v3445, %v4390
        %v4392 = vpop.f32.mrf.mxu0
        %v4393 = vadd.f32 %v3449, %v4392
        %4394 = vmatprep.mubr.bf16.mxu0 %v3303
        %4395 = vmatmul.mubr.bf16.gmra.mxu0 %v3302
        %v4396 = vpop.f32.mrf.mxu0
        %v4397 = vadd.f32 %v3445, %v4396
        %v4398 = vpop.f32.mrf.mxu0
        %v4399 = vadd.f32 %v3449, %v4398
        %v4400 = vpop.f32.mrf.mxu0
        %v4401 = vadd.f32 %v3445, %v4400
        %v4402 = vpop.f32.mrf.mxu0
        %v4403 = vadd.f32 %v3449, %v4402
        %4404 = vmatprep.mubr.bf16.mxu0 %v3305
        %4405 = vmatmul.mubr.bf16.gmra.mxu0 %v3304
        %v4406 = vpop.f32.mrf.mxu0
        %v4407 = vadd.f32 %v3445, %v4406
        %v4408 = vpop.f32.mrf.mxu0
        %v4409 = vadd.f32 %v3449, %v4408
        %v4410 = vpop.f32.mrf.mxu0
        %v4411 = vadd.f32 %v3445, %v4410
        %v4412 = vpop.f32.mrf.mxu0
        %v4413 = vadd.f32 %v3449, %v4412
        %4414 = vmatprep.mubr.bf16.mxu0 %v3307
        %4415 = vmatmul.mubr.bf16.gmra.mxu0 %v3306
        %v4416 = vpop.f32.mrf.mxu0
        %v4417 = vadd.f32 %v3445, %v4416
        %v4418 = vpop.f32.mrf.mxu0
        %v4419 = vadd.f32 %v3449, %v4418
        %v4420 = vpop.f32.mrf.mxu0
        %v4421 = vadd.f32 %v3445, %v4420
        %v4422 = vpop.f32.mrf.mxu0
        %v4423 = vadd.f32 %v3449, %v4422
        %4424 = vmatprep.mubr.bf16.mxu0 %v3309
        %4425 = vmatmul.mubr.bf16.gmra.mxu0 %v3308
        %v4426 = vpop.f32.mrf.mxu0
        %v4427 = vadd.f32 %v3445, %v4426
        %v4428 = vpop.f32.mrf.mxu0
        %v4429 = vadd.f32 %v3449, %v4428
        %v4430 = vpop.f32.mrf.mxu0
        %v4431 = vadd.f32 %v3445, %v4430
        %v4432 = vpop.f32.mrf.mxu0
        %v4433 = vadd.f32 %v3449, %v4432
        %4434 = vmatprep.mubr.bf16.mxu0 %v3311
        %4435 = vmatmul.mubr.bf16.gmra.mxu0 %v3310
        %v4436 = vpop.f32.mrf.mxu0
        %v4437 = vadd.f32 %v3445, %v4436
        %v4438 = vpop.f32.mrf.mxu0
        %v4439 = vadd.f32 %v3449, %v4438
        %v4440 = vpop.f32.mrf.mxu0
        %v4441 = vadd.f32 %v3445, %v4440
        %v4442 = vpop.f32.mrf.mxu0
        %v4443 = vadd.f32 %v3449, %v4442
        %4444 = vmatprep.mubr.bf16.mxu0 %v3313
        %4445 = vmatmul.mubr.bf16.gmra.mxu0 %v3312
        %v4446 = vpop.f32.mrf.mxu0
        %v4447 = vadd.f32 %v3445, %v4446
        %v4448 = vpop.f32.mrf.mxu0
        %v4449 = vadd.f32 %v3449, %v4448
        %v4450 = vpop.f32.mrf.mxu0
        %v4451 = vadd.f32 %v3445, %v4450
        %v4452 = vpop.f32.mrf.mxu0
        %v4453 = vadd.f32 %v3449, %v4452
        %4454 = vmatprep.mubr.bf16.mxu0 %v3315
        %4455 = vmatmul.mubr.bf16.gmra.mxu0 %v3314
        %v4456 = vpop.f32.mrf.mxu0
        %v4457 = vadd.f32 %v3445, %v4456
        %v4458 = vpop.f32.mrf.mxu0
        %v4459 = vadd.f32 %v3449, %v4458
        %v4460 = vpop.f32.mrf.mxu0
        %v4461 = vadd.f32 %v3445, %v4460
        %v4462 = vpop.f32.mrf.mxu0
        %v4463 = vadd.f32 %v3449, %v4462
        %4464 = vmatprep.mubr.bf16.mxu0 %v3317
        %4465 = vmatmul.mubr.bf16.gmra.mxu0 %v3316
        %v4466 = vpop.f32.mrf.mxu0
        %v4467 = vadd.f32 %v3445, %v4466
        %v4468 = vpop.f32.mrf.mxu0
        %v4469 = vadd.f32 %v3449, %v4468
        %v4470 = vpop.f32.mrf.mxu0
        %v4471 = vadd.f32 %v3445, %v4470
        %v4472 = vpop.f32.mrf.mxu0
        %v4473 = vadd.f32 %v3449, %v4472
        %4474 = vmatprep.mubr.bf16.mxu0 %v3319
        %4475 = vmatmul.mubr.bf16.gmra.mxu0 %v3318
        %v4476 = vpop.f32.mrf.mxu0
        %v4477 = vadd.f32 %v3445, %v4476
        %v4478 = vpop.f32.mrf.mxu0
        %v4479 = vadd.f32 %v3449, %v4478
        %v4480 = vpop.f32.mrf.mxu0
        %v4481 = vadd.f32 %v3445, %v4480
        %v4482 = vpop.f32.mrf.mxu0
        %v4483 = vadd.f32 %v3449, %v4482
        %4484 = vmatprep.mubr.bf16.mxu0 %v3321
        %4485 = vmatmul.mubr.bf16.gmra.mxu0 %v3320
        %v4486 = vpop.f32.mrf.mxu0
        %v4487 = vadd.f32 %v3445, %v4486
        %v4488 = vpop.f32.mrf.mxu0
        %v4489 = vadd.f32 %v3449, %v4488
        %v4490 = vpop.f32.mrf.mxu0
        %v4491 = vadd.f32 %v3445, %v4490
        %v4492 = vpop.f32.mrf.mxu0
        %v4493 = vadd.f32 %v3449, %v4492
        %4494 = vmatprep.mubr.bf16.mxu0 %v3323
        %4495 = vmatmul.mubr.bf16.gmra.mxu0 %v3322
        %v4496 = vpop.f32.mrf.mxu0
        %v4497 = vadd.f32 %v3445, %v4496
        %v4498 = vpop.f32.mrf.mxu0
        %v4499 = vadd.f32 %v3449, %v4498
        %v4500 = vpop.f32.mrf.mxu0
        %v4501 = vadd.f32 %v3445, %v4500
        %v4502 = vpop.f32.mrf.mxu0
        %v4503 = vadd.f32 %v3449, %v4502
        %4504 = vmatprep.mubr.bf16.mxu0 %v3325
        %4505 = vmatmul.mubr.bf16.gmra.mxu0 %v3324
        %v4506 = vpop.f32.mrf.mxu0
        %v4507 = vadd.f32 %v3445, %v4506
        %v4508 = vpop.f32.mrf.mxu0
        %v4509 = vadd.f32 %v3449, %v4508
        %v4510 = vpop.f32.mrf.mxu0
        %v4511 = vadd.f32 %v3445, %v4510
        %v4512 = vpop.f32.mrf.mxu0
        %v4513 = vadd.f32 %v3449, %v4512
        %4514 = vdwg.mxu0
        %v4515 = vpack.c.bf16 %v3975, %v3971
        %v4516 = vpack.c.bf16 %v3977, %v3973
        %v4517 = vpack.c.bf16 %v4168, %v4164
        %v4518 = vpack.c.bf16 %v4170, %v4166
        %v4519 = vpack.c.bf16 %v4361, %v4357
        %v4520 = vpack.c.bf16 %v4363, %v4359
        %v4521 = vpack.c.bf16 %v3985, %v3981
        %v4522 = vpack.c.bf16 %v3987, %v3983
        %v4523 = vpack.c.bf16 %v4178, %v4174
        %v4524 = vpack.c.bf16 %v4180, %v4176
        %v4525 = vpack.c.bf16 %v4371, %v4367
        %v4526 = vpack.c.bf16 %v4373, %v4369
        %v4527 = vpack.c.bf16 %v3995, %v3991
        %v4528 = vpack.c.bf16 %v3997, %v3993
        %v4529 = vpack.c.bf16 %v4188, %v4184
        %v4530 = vpack.c.bf16 %v4190, %v4186
        %v4531 = vpack.c.bf16 %v4381, %v4377
        %v4532 = vpack.c.bf16 %v4383, %v4379
        %v4533 = vpack.c.bf16 %v4005, %v4001
        %v4534 = vpack.c.bf16 %v4007, %v4003
        %v4535 = vpack.c.bf16 %v4198, %v4194
        %v4536 = vpack.c.bf16 %v4200, %v4196
        %v4537 = vpack.c.bf16 %v4391, %v4387
        %v4538 = vpack.c.bf16 %v4393, %v4389
        %v4539 = vpack.c.bf16 %v4015, %v4011
        %v4540 = vpack.c.bf16 %v4017, %v4013
        %v4541 = vpack.c.bf16 %v4208, %v4204
        %v4542 = vpack.c.bf16 %v4210, %v4206
        %v4543 = vpack.c.bf16 %v4401, %v4397
        %v4544 = vpack.c.bf16 %v4403, %v4399
        %v4545 = vpack.c.bf16 %v4025, %v4021
        %v4546 = vpack.c.bf16 %v4027, %v4023
        %v4547 = vpack.c.bf16 %v4218, %v4214
        %v4548 = vpack.c.bf16 %v4220, %v4216
        %v4549 = vpack.c.bf16 %v4411, %v4407
        %v4550 = vpack.c.bf16 %v4413, %v4409
        %v4551 = vpack.c.bf16 %v4035, %v4031
        %v4552 = vpack.c.bf16 %v4037, %v4033
        %v4553 = vpack.c.bf16 %v4228, %v4224
        %v4554 = vpack.c.bf16 %v4230, %v4226
        %v4555 = vpack.c.bf16 %v4421, %v4417
        %v4556 = vpack.c.bf16 %v4423, %v4419
        %v4557 = vpack.c.bf16 %v4045, %v4041
        %v4558 = vpack.c.bf16 %v4047, %v4043
        %v4559 = vpack.c.bf16 %v4238, %v4234
        %v4560 = vpack.c.bf16 %v4240, %v4236
        %v4561 = vpack.c.bf16 %v4431, %v4427
        %v4562 = vpack.c.bf16 %v4433, %v4429
        %v4563 = vpack.c.bf16 %v4055, %v4051
        %v4564 = vpack.c.bf16 %v4057, %v4053
        %v4565 = vpack.c.bf16 %v4248, %v4244
        %v4566 = vpack.c.bf16 %v4250, %v4246
        %v4567 = vpack.c.bf16 %v4441, %v4437
        %v4568 = vpack.c.bf16 %v4443, %v4439
        %v4569 = vpack.c.bf16 %v4065, %v4061
        %v4570 = vpack.c.bf16 %v4067, %v4063
        %v4571 = vpack.c.bf16 %v4258, %v4254
        %v4572 = vpack.c.bf16 %v4260, %v4256
        %v4573 = vpack.c.bf16 %v4451, %v4447
        %v4574 = vpack.c.bf16 %v4453, %v4449
        %v4575 = vpack.c.bf16 %v4075, %v4071
        %v4576 = vpack.c.bf16 %v4077, %v4073
        %v4577 = vpack.c.bf16 %v4268, %v4264
        %v4578 = vpack.c.bf16 %v4270, %v4266
        %v4579 = vpack.c.bf16 %v4461, %v4457
        %v4580 = vpack.c.bf16 %v4463, %v4459
        %v4581 = vpack.c.bf16 %v4085, %v4081
        %v4582 = vpack.c.bf16 %v4087, %v4083
        %v4583 = vpack.c.bf16 %v4278, %v4274
        %v4584 = vpack.c.bf16 %v4280, %v4276
        %v4585 = vpack.c.bf16 %v4471, %v4467
        %v4586 = vpack.c.bf16 %v4473, %v4469
        %v4587 = vpack.c.bf16 %v4095, %v4091
        %v4588 = vpack.c.bf16 %v4097, %v4093
        %v4589 = vpack.c.bf16 %v4288, %v4284
        %v4590 = vpack.c.bf16 %v4290, %v4286
        %v4591 = vpack.c.bf16 %v4481, %v4477
        %v4592 = vpack.c.bf16 %v4483, %v4479
        %v4593 = vpack.c.bf16 %v4105, %v4101
        %v4594 = vpack.c.bf16 %v4107, %v4103
        %v4595 = vpack.c.bf16 %v4298, %v4294
        %v4596 = vpack.c.bf16 %v4300, %v4296
        %v4597 = vpack.c.bf16 %v4491, %v4487
        %v4598 = vpack.c.bf16 %v4493, %v4489
        %v4599 = vpack.c.bf16 %v4115, %v4111
        %v4600 = vpack.c.bf16 %v4117, %v4113
        %v4601 = vpack.c.bf16 %v4308, %v4304
        %v4602 = vpack.c.bf16 %v4310, %v4306
        %v4603 = vpack.c.bf16 %v4501, %v4497
        %v4604 = vpack.c.bf16 %v4503, %v4499
        %v4605 = vpack.c.bf16 %v4125, %v4121
        %v4606 = vpack.c.bf16 %v4127, %v4123
        %v4607 = vpack.c.bf16 %v4318, %v4314
        %v4608 = vpack.c.bf16 %v4320, %v4316
        %v4609 = vpack.c.bf16 %v4511, %v4507
        %v4610 = vpack.c.bf16 %v4513, %v4509
        %vm4611 = vcmp.gt.f32.partialorder %v2368, %v2045
        %vm4612 = vcmp.gt.f32.partialorder %v2371, %v2046
        %vm4613 = vcmp.gt.f32.partialorder %v2374, %v2047
        %vm4614 = vcmp.gt.f32.partialorder %v2377, %v2048
        %vm4615 = vcmp.gt.f32.partialorder %v2380, %v2049
        %vm4616 = vcmp.gt.f32.partialorder %v2383, %v2050
        %vm4617 = vcmp.gt.f32.partialorder %v2386, %v2051
        %vm4618 = vcmp.gt.f32.partialorder %v2389, %v2052
        %vm4619 = vcmp.gt.f32.partialorder %v2392, %v2053
        %vm4620 = vcmp.gt.f32.partialorder %v2395, %v2054
        %vm4621 = vcmp.gt.f32.partialorder %v2398, %v2055
        %vm4622 = vcmp.gt.f32.partialorder %v2401, %v2056
        %vm4623 = vcmp.gt.f32.partialorder %v2404, %v2057
        %vm4624 = vcmp.gt.f32.partialorder %v2407, %v2058
        %vm4625 = vcmp.gt.f32.partialorder %v2410, %v2059
        %vm4626 = vcmp.gt.f32.partialorder %v2413, %v2060
        %vm4627 = vcmp.gt.f32.partialorder %v2416, %v2061
        %vm4628 = vcmp.gt.f32.partialorder %v2419, %v2062
        %vm4629 = vcmp.gt.f32.partialorder %v2422, %v2063
        %vm4630 = vcmp.gt.f32.partialorder %v2425, %v2064
        %vm4631 = vcmp.gt.f32.partialorder %v2428, %v2065
        %vm4632 = vcmp.gt.f32.partialorder %v2431, %v2066
        %vm4633 = vcmp.gt.f32.partialorder %v2434, %v2067
        %vm4634 = vcmp.gt.f32.partialorder %v2437, %v2068
        %vm4635 = vcmp.gt.f32.partialorder %v2440, %v2069
        %vm4636 = vcmp.gt.f32.partialorder %v2443, %v2070
        %vm4637 = vcmp.gt.f32.partialorder %v2446, %v2071
        %vm4638 = vcmp.gt.f32.partialorder %v2449, %v2072
        %vm4639 = vcmp.gt.f32.partialorder %v2452, %v2073
        %vm4640 = vcmp.gt.f32.partialorder %v2455, %v2074
        %vm4641 = vcmp.gt.f32.partialorder %v2458, %v2075
        %vm4642 = vcmp.gt.f32.partialorder %v2461, %v2076
        %v4643 = vld [vmem:[%s327] sm:$0xff]
        %v4644 = vld [vmem:[%s327 + $0x8] sm:$0xff]
        %v4645 = vld [vmem:[%s327 + $0x10] sm:$0xff]
        %v4646 = vld [vmem:[%s327 + $0x18] sm:$0xff]
        %v4647 = vld [vmem:[%s327 + $0x20] sm:$0xff]
        %v4648 = vld [vmem:[%s327 + $0x28] sm:$0xff]
        %v4649 = vld [vmem:[%s327 + $0x30] sm:$0xff]
        %v4650 = vld [vmem:[%s327 + $0x38] sm:$0xff]
        %v4651 = vld [vmem:[%s327 + $0x40] sm:$0xff]
        %v4652 = vld [vmem:[%s327 + $0x48] sm:$0xff]
        %v4653 = vld [vmem:[%s327 + $0x50] sm:$0xff]
        %v4654 = vld [vmem:[%s327 + $0x58] sm:$0xff]
        %v4655 = vld [vmem:[%s327 + $0x60] sm:$0xff]
        %v4656 = vld [vmem:[%s327 + $0x68] sm:$0xff]
        %v4657 = vld [vmem:[%s327 + $0x70] sm:$0xff]
        %v4658 = vld [vmem:[%s327 + $0x78] sm:$0xff]
        %v4659 = vld [vmem:[%s327 + $0x80] sm:$0xff]
        %v4660 = vld [vmem:[%s327 + $0x88] sm:$0xff]
        %v4661 = vld [vmem:[%s327 + $0x90] sm:$0xff]
        %v4662 = vld [vmem:[%s327 + $0x98] sm:$0xff]
        %v4663 = vld [vmem:[%s327 + $0xa0] sm:$0xff]
        %v4664 = vld [vmem:[%s327 + $0xa8] sm:$0xff]
        %v4665 = vld [vmem:[%s327 + $0xb0] sm:$0xff]
        %v4666 = vld [vmem:[%s327 + $0xb8] sm:$0xff]
        %v4667 = vld [vmem:[%s327 + $0xc0] sm:$0xff]
        %v4668 = vld [vmem:[%s327 + $0xc8] sm:$0xff]
        %v4669 = vld [vmem:[%s327 + $0xd0] sm:$0xff]
        %v4670 = vld [vmem:[%s327 + $0xd8] sm:$0xff]
        %v4671 = vld [vmem:[%s327 + $0xe0] sm:$0xff]
        %v4672 = vld [vmem:[%s327 + $0xe8] sm:$0xff]
        %v4673 = vld [vmem:[%s327 + $0xf0] sm:$0xff]
        %v4674 = vld [vmem:[%s327 + $0xf8] sm:$0xff]
        %v4675 = vld [vmem:[%s327 + $0x100] sm:$0xff]
        %v4676 = vld [vmem:[%s327 + $0x108] sm:$0xff]
        %v4677 = vld [vmem:[%s327 + $0x110] sm:$0xff]
        %v4678 = vld [vmem:[%s327 + $0x118] sm:$0xff]
        %v4679 = vld [vmem:[%s327 + $0x120] sm:$0xff]
        %v4680 = vld [vmem:[%s327 + $0x128] sm:$0xff]
        %v4681 = vld [vmem:[%s327 + $0x130] sm:$0xff]
        %v4682 = vld [vmem:[%s327 + $0x138] sm:$0xff]
        %v4683 = vld [vmem:[%s327 + $0x140] sm:$0xff]
        %v4684 = vld [vmem:[%s327 + $0x148] sm:$0xff]
        %v4685 = vld [vmem:[%s327 + $0x150] sm:$0xff]
        %v4686 = vld [vmem:[%s327 + $0x158] sm:$0xff]
        %v4687 = vld [vmem:[%s327 + $0x160] sm:$0xff]
        %v4688 = vld [vmem:[%s327 + $0x168] sm:$0xff]
        %v4689 = vld [vmem:[%s327 + $0x170] sm:$0xff]
        %v4690 = vld [vmem:[%s327 + $0x178] sm:$0xff]
        %v4691 = vld [vmem:[%s327 + $0x180] sm:$0xff]
        %v4692 = vld [vmem:[%s327 + $0x188] sm:$0xff]
        %v4693 = vld [vmem:[%s327 + $0x190] sm:$0xff]
        %v4694 = vld [vmem:[%s327 + $0x198] sm:$0xff]
        %v4695 = vld [vmem:[%s327 + $0x1a0] sm:$0xff]
        %v4696 = vld [vmem:[%s327 + $0x1a8] sm:$0xff]
        %v4697 = vld [vmem:[%s327 + $0x1b0] sm:$0xff]
        %v4698 = vld [vmem:[%s327 + $0x1b8] sm:$0xff]
        %v4699 = vld [vmem:[%s327 + $0x1c0] sm:$0xff]
        %v4700 = vld [vmem:[%s327 + $0x1c8] sm:$0xff]
        %v4701 = vld [vmem:[%s327 + $0x1d0] sm:$0xff]
        %v4702 = vld [vmem:[%s327 + $0x1d8] sm:$0xff]
        %v4703 = vld [vmem:[%s327 + $0x1e0] sm:$0xff]
        %v4704 = vld [vmem:[%s327 + $0x1e8] sm:$0xff]
        %v4705 = vld [vmem:[%s327 + $0x1f0] sm:$0xff]
        %v4706 = vld [vmem:[%s327 + $0x1f8] sm:$0xff]
        %v4707 = vld [vmem:[%s327 + $0x200] sm:$0xff]
        %v4708 = vld [vmem:[%s327 + $0x208] sm:$0xff]
        %v4709 = vld [vmem:[%s327 + $0x210] sm:$0xff]
        %v4710 = vld [vmem:[%s327 + $0x218] sm:$0xff]
        %v4711 = vld [vmem:[%s327 + $0x220] sm:$0xff]
        %v4712 = vld [vmem:[%s327 + $0x228] sm:$0xff]
        %v4713 = vld [vmem:[%s327 + $0x230] sm:$0xff]
        %v4714 = vld [vmem:[%s327 + $0x238] sm:$0xff]
        %v4715 = vld [vmem:[%s327 + $0x240] sm:$0xff]
        %v4716 = vld [vmem:[%s327 + $0x248] sm:$0xff]
        %v4717 = vld [vmem:[%s327 + $0x250] sm:$0xff]
        %v4718 = vld [vmem:[%s327 + $0x258] sm:$0xff]
        %v4719 = vld [vmem:[%s327 + $0x260] sm:$0xff]
        %v4720 = vld [vmem:[%s327 + $0x268] sm:$0xff]
        %v4721 = vld [vmem:[%s327 + $0x270] sm:$0xff]
        %v4722 = vld [vmem:[%s327 + $0x278] sm:$0xff]
        %v4723 = vld [vmem:[%s327 + $0x280] sm:$0xff]
        %v4724 = vld [vmem:[%s327 + $0x288] sm:$0xff]
        %v4725 = vld [vmem:[%s327 + $0x290] sm:$0xff]
        %v4726 = vld [vmem:[%s327 + $0x298] sm:$0xff]
        %v4727 = vld [vmem:[%s327 + $0x2a0] sm:$0xff]
        %v4728 = vld [vmem:[%s327 + $0x2a8] sm:$0xff]
        %v4729 = vld [vmem:[%s327 + $0x2b0] sm:$0xff]
        %v4730 = vld [vmem:[%s327 + $0x2b8] sm:$0xff]
        %v4731 = vld [vmem:[%s327 + $0x2c0] sm:$0xff]
        %v4732 = vld [vmem:[%s327 + $0x2c8] sm:$0xff]
        %v4733 = vld [vmem:[%s327 + $0x2d0] sm:$0xff]
        %v4734 = vld [vmem:[%s327 + $0x2d8] sm:$0xff]
        %v4735 = vld [vmem:[%s327 + $0x2e0] sm:$0xff]
        %v4736 = vld [vmem:[%s327 + $0x2e8] sm:$0xff]
        %v4737 = vld [vmem:[%s327 + $0x2f0] sm:$0xff]
        %v4738 = vld [vmem:[%s327 + $0x2f8] sm:$0xff]
        %v4739 = vsel %vm4611, 1, 0
        %v4740 = vsel %vm4612, 1, 0
        %v4741 = vsel %vm4613, 1, 0
        %v4742 = vsel %vm4614, 1, 0
        %v4743 = vsel %vm4615, 1, 0
        %v4744 = vsel %vm4616, 1, 0
        %v4745 = vsel %vm4617, 1, 0
        %v4746 = vsel %vm4618, 1, 0
        %v4747 = vsel %vm4619, 1, 0
        %v4748 = vsel %vm4620, 1, 0
        %v4749 = vsel %vm4621, 1, 0
        %v4750 = vsel %vm4622, 1, 0
        %v4751 = vsel %vm4623, 1, 0
        %v4752 = vsel %vm4624, 1, 0
        %v4753 = vsel %vm4625, 1, 0
        %v4754 = vsel %vm4626, 1, 0
        %v4755 = vsel %vm4627, 1, 0
        %v4756 = vsel %vm4628, 1, 0
        %v4757 = vsel %vm4629, 1, 0
        %v4758 = vsel %vm4630, 1, 0
        %v4759 = vsel %vm4631, 1, 0
        %v4760 = vsel %vm4632, 1, 0
        %v4761 = vsel %vm4633, 1, 0
        %v4762 = vsel %vm4634, 1, 0
        %v4763 = vsel %vm4635, 1, 0
        %v4764 = vsel %vm4636, 1, 0
        %v4765 = vsel %vm4637, 1, 0
        %v4766 = vsel %vm4638, 1, 0
        %v4767 = vsel %vm4639, 1, 0
        %v4768 = vsel %vm4640, 1, 0
        %v4769 = vsel %vm4641, 1, 0
        %v4770 = vsel %vm4642, 1, 0
        %vm4771 = vcmp.eq.s32.totalorder %v4739, 1
        %vm4772 = vcmp.eq.s32.totalorder %v4740, 1
        %vm4773 = vcmp.eq.s32.totalorder %v4741, 1
        %vm4774 = vcmp.eq.s32.totalorder %v4742, 1
        %vm4775 = vcmp.eq.s32.totalorder %v4743, 1
        %vm4776 = vcmp.eq.s32.totalorder %v4744, 1
        %vm4777 = vcmp.eq.s32.totalorder %v4745, 1
        %vm4778 = vcmp.eq.s32.totalorder %v4746, 1
        %vm4779 = vcmp.eq.s32.totalorder %v4747, 1
        %vm4780 = vcmp.eq.s32.totalorder %v4748, 1
        %vm4781 = vcmp.eq.s32.totalorder %v4749, 1
        %vm4782 = vcmp.eq.s32.totalorder %v4750, 1
        %vm4783 = vcmp.eq.s32.totalorder %v4751, 1
        %vm4784 = vcmp.eq.s32.totalorder %v4752, 1
        %vm4785 = vcmp.eq.s32.totalorder %v4753, 1
        %vm4786 = vcmp.eq.s32.totalorder %v4754, 1
        %vm4787 = vcmp.eq.s32.totalorder %v4755, 1
        %vm4788 = vcmp.eq.s32.totalorder %v4756, 1
        %vm4789 = vcmp.eq.s32.totalorder %v4757, 1
        %vm4790 = vcmp.eq.s32.totalorder %v4758, 1
        %vm4791 = vcmp.eq.s32.totalorder %v4759, 1
        %vm4792 = vcmp.eq.s32.totalorder %v4760, 1
        %vm4793 = vcmp.eq.s32.totalorder %v4761, 1
        %vm4794 = vcmp.eq.s32.totalorder %v4762, 1
        %vm4795 = vcmp.eq.s32.totalorder %v4763, 1
        %vm4796 = vcmp.eq.s32.totalorder %v4764, 1
        %vm4797 = vcmp.eq.s32.totalorder %v4765, 1
        %vm4798 = vcmp.eq.s32.totalorder %v4766, 1
        %vm4799 = vcmp.eq.s32.totalorder %v4767, 1
        %vm4800 = vcmp.eq.s32.totalorder %v4768, 1
        %vm4801 = vcmp.eq.s32.totalorder %v4769, 1
        %vm4802 = vcmp.eq.s32.totalorder %v4770, 1
        %vm4803 = vmpackc.low %vm4771, %vm4771
        %vm4804 = vmpackc.low %vm4772, %vm4772
        %vm4805 = vmpackc.low %vm4773, %vm4773
        %vm4806 = vmpackc.low %vm4774, %vm4774
        %vm4807 = vmpackc.low %vm4775, %vm4775
        %vm4808 = vmpackc.low %vm4776, %vm4776
        %vm4809 = vmpackc.low %vm4777, %vm4777
        %vm4810 = vmpackc.low %vm4778, %vm4778
        %vm4811 = vmpackc.low %vm4779, %vm4779
        %vm4812 = vmpackc.low %vm4780, %vm4780
        %vm4813 = vmpackc.low %vm4781, %vm4781
        %vm4814 = vmpackc.low %vm4782, %vm4782
        %vm4815 = vmpackc.low %vm4783, %vm4783
        %vm4816 = vmpackc.low %vm4784, %vm4784
        %vm4817 = vmpackc.low %vm4785, %vm4785
        %vm4818 = vmpackc.low %vm4786, %vm4786
        %vm4819 = vmpackc.low %vm4787, %vm4787
        %vm4820 = vmpackc.low %vm4788, %vm4788
        %vm4821 = vmpackc.low %vm4789, %vm4789
        %vm4822 = vmpackc.low %vm4790, %vm4790
        %vm4823 = vmpackc.low %vm4791, %vm4791
        %vm4824 = vmpackc.low %vm4792, %vm4792
        %vm4825 = vmpackc.low %vm4793, %vm4793
        %vm4826 = vmpackc.low %vm4794, %vm4794
        %vm4827 = vmpackc.low %vm4795, %vm4795
        %vm4828 = vmpackc.low %vm4796, %vm4796
        %vm4829 = vmpackc.low %vm4797, %vm4797
        %vm4830 = vmpackc.low %vm4798, %vm4798
        %vm4831 = vmpackc.low %vm4799, %vm4799
        %vm4832 = vmpackc.low %vm4800, %vm4800
        %vm4833 = vmpackc.low %vm4801, %vm4801
        %vm4834 = vmpackc.low %vm4802, %vm4802
        %v4835 = vsel %vm4803, 65537, 0
        %v4836 = vsel %vm4804, 65537, 0
        %v4837 = vsel %vm4805, 65537, 0
        %v4838 = vsel %vm4806, 65537, 0
        %v4839 = vsel %vm4807, 65537, 0
        %v4840 = vsel %vm4808, 65537, 0
        %v4841 = vsel %vm4809, 65537, 0
        %v4842 = vsel %vm4810, 65537, 0
        %v4843 = vsel %vm4811, 65537, 0
        %v4844 = vsel %vm4812, 65537, 0
        %v4845 = vsel %vm4813, 65537, 0
        %v4846 = vsel %vm4814, 65537, 0
        %v4847 = vsel %vm4815, 65537, 0
        %v4848 = vsel %vm4816, 65537, 0
        %v4849 = vsel %vm4817, 65537, 0
        %v4850 = vsel %vm4818, 65537, 0
        %v4851 = vsel %vm4819, 65537, 0
        %v4852 = vsel %vm4820, 65537, 0
        %v4853 = vsel %vm4821, 65537, 0
        %v4854 = vsel %vm4822, 65537, 0
        %v4855 = vsel %vm4823, 65537, 0
        %v4856 = vsel %vm4824, 65537, 0
        %v4857 = vsel %vm4825, 65537, 0
        %v4858 = vsel %vm4826, 65537, 0
        %v4859 = vsel %vm4827, 65537, 0
        %v4860 = vsel %vm4828, 65537, 0
        %v4861 = vsel %vm4829, 65537, 0
        %v4862 = vsel %vm4830, 65537, 0
        %v4863 = vsel %vm4831, 65537, 0
        %v4864 = vsel %vm4832, 65537, 0
        %v4865 = vsel %vm4833, 65537, 0
        %v4866 = vsel %vm4834, 65537, 0
        %v4867 = vunpack.c.l.b16 %v4835
        %v4868 = vunpack.c.l.b16 %v4836
        %v4869 = vunpack.c.l.b16 %v4837
        %v4870 = vunpack.c.l.b16 %v4838
        %v4871 = vunpack.c.l.b16 %v4839
        %v4872 = vunpack.c.l.b16 %v4840
        %v4873 = vunpack.c.l.b16 %v4841
        %v4874 = vunpack.c.l.b16 %v4842
        %v4875 = vunpack.c.l.b16 %v4843
        %v4876 = vunpack.c.l.b16 %v4844
        %v4877 = vunpack.c.l.b16 %v4845
        %v4878 = vunpack.c.l.b16 %v4846
        %v4879 = vunpack.c.l.b16 %v4847
        %v4880 = vunpack.c.l.b16 %v4848
        %v4881 = vunpack.c.l.b16 %v4849
        %v4882 = vunpack.c.l.b16 %v4850
        %v4883 = vunpack.c.l.b16 %v4851
        %v4884 = vunpack.c.l.b16 %v4852
        %v4885 = vunpack.c.l.b16 %v4853
        %v4886 = vunpack.c.l.b16 %v4854
        %v4887 = vunpack.c.l.b16 %v4855
        %v4888 = vunpack.c.l.b16 %v4856
        %v4889 = vunpack.c.l.b16 %v4857
        %v4890 = vunpack.c.l.b16 %v4858
        %v4891 = vunpack.c.l.b16 %v4859
        %v4892 = vunpack.c.l.b16 %v4860
        %v4893 = vunpack.c.l.b16 %v4861
        %v4894 = vunpack.c.l.b16 %v4862
        %v4895 = vunpack.c.l.b16 %v4863
        %v4896 = vunpack.c.l.b16 %v4864
        %v4897 = vunpack.c.l.b16 %v4865
        %v4898 = vunpack.c.l.b16 %v4866
        %v4899 = vpack.c.b16 %v4868, %v4867
        %v4900 = vpack.c.b16 %v4870, %v4869
        %v4901 = vpack.c.b16 %v4872, %v4871
        %v4902 = vpack.c.b16 %v4874, %v4873
        %v4903 = vpack.c.b16 %v4876, %v4875
        %v4904 = vpack.c.b16 %v4878, %v4877
        %v4905 = vpack.c.b16 %v4880, %v4879
        %v4906 = vpack.c.b16 %v4882, %v4881
        %v4907 = vpack.c.b16 %v4884, %v4883
        %v4908 = vpack.c.b16 %v4886, %v4885
        %v4909 = vpack.c.b16 %v4888, %v4887
        %v4910 = vpack.c.b16 %v4890, %v4889
        %v4911 = vpack.c.b16 %v4892, %v4891
        %v4912 = vpack.c.b16 %v4894, %v4893
        %v4913 = vpack.c.b16 %v4896, %v4895
        %v4914 = vpack.c.b16 %v4898, %v4897
        %vm4915 = vcmp.ne.s16.totalorder %v4899, 0
        %vm4916 = vcmp.ne.s16.totalorder %v4900, 0
        %vm4917 = vcmp.ne.s16.totalorder %v4901, 0
        %vm4918 = vcmp.ne.s16.totalorder %v4902, 0
        %vm4919 = vcmp.ne.s16.totalorder %v4903, 0
        %vm4920 = vcmp.ne.s16.totalorder %v4904, 0
        %vm4921 = vcmp.ne.s16.totalorder %v4905, 0
        %vm4922 = vcmp.ne.s16.totalorder %v4906, 0
        %vm4923 = vcmp.ne.s16.totalorder %v4907, 0
        %vm4924 = vcmp.ne.s16.totalorder %v4908, 0
        %vm4925 = vcmp.ne.s16.totalorder %v4909, 0
        %vm4926 = vcmp.ne.s16.totalorder %v4910, 0
        %vm4927 = vcmp.ne.s16.totalorder %v4911, 0
        %vm4928 = vcmp.ne.s16.totalorder %v4912, 0
        %vm4929 = vcmp.ne.s16.totalorder %v4913, 0
        %vm4930 = vcmp.ne.s16.totalorder %v4914, 0
        %v5027 = vunpack.c.l.b16 %v4643
        %v5028 = vunpack.c.h.b16 %v4643
        %v5029 = vunpack.c.l.b16 %v4644
        %v5030 = vunpack.c.h.b16 %v4644
        %v5031 = vunpack.c.l.b16 %v4645
        %v5032 = vunpack.c.h.b16 %v4645
        %v5033 = vunpack.c.l.b16 %v4646
        %v5034 = vunpack.c.h.b16 %v4646
        %v5035 = vunpack.c.l.b16 %v4647
        %v5036 = vunpack.c.h.b16 %v4647
        %v5037 = vunpack.c.l.b16 %v4648
        %v5038 = vunpack.c.h.b16 %v4648
        %v5039 = vunpack.c.l.b16 %v4649
        %v5040 = vunpack.c.h.b16 %v4649
        %v5041 = vunpack.c.l.b16 %v4650
        %v5042 = vunpack.c.h.b16 %v4650
        %v5043 = vunpack.c.l.b16 %v4651
        %v5044 = vunpack.c.h.b16 %v4651
        %v5045 = vunpack.c.l.b16 %v4652
        %v5046 = vunpack.c.h.b16 %v4652
        %v5047 = vunpack.c.l.b16 %v4653
        %v5048 = vunpack.c.h.b16 %v4653
        %v5049 = vunpack.c.l.b16 %v4654
        %v5050 = vunpack.c.h.b16 %v4654
        %v5051 = vunpack.c.l.b16 %v4655
        %v5052 = vunpack.c.h.b16 %v4655
        %v5053 = vunpack.c.l.b16 %v4656
        %v5054 = vunpack.c.h.b16 %v4656
        %v5055 = vunpack.c.l.b16 %v4657
        %v5056 = vunpack.c.h.b16 %v4657
        %v5057 = vunpack.c.l.b16 %v4658
        %v5058 = vunpack.c.h.b16 %v4658
        %v5059 = vunpack.c.l.b16 %v4659
        %v5060 = vunpack.c.h.b16 %v4659
        %v5061 = vunpack.c.l.b16 %v4660
        %v5062 = vunpack.c.h.b16 %v4660
        %v5063 = vunpack.c.l.b16 %v4661
        %v5064 = vunpack.c.h.b16 %v4661
        %v5065 = vunpack.c.l.b16 %v4662
        %v5066 = vunpack.c.h.b16 %v4662
        %v5067 = vunpack.c.l.b16 %v4663
        %v5068 = vunpack.c.h.b16 %v4663
        %v5069 = vunpack.c.l.b16 %v4664
        %v5070 = vunpack.c.h.b16 %v4664
        %v5071 = vunpack.c.l.b16 %v4665
        %v5072 = vunpack.c.h.b16 %v4665
        %v5073 = vunpack.c.l.b16 %v4666
        %v5074 = vunpack.c.h.b16 %v4666
        %v5075 = vunpack.c.l.b16 %v4667
        %v5076 = vunpack.c.h.b16 %v4667
        %v5077 = vunpack.c.l.b16 %v4668
        %v5078 = vunpack.c.h.b16 %v4668
        %v5079 = vunpack.c.l.b16 %v4669
        %v5080 = vunpack.c.h.b16 %v4669
        %v5081 = vunpack.c.l.b16 %v4670
        %v5082 = vunpack.c.h.b16 %v4670
        %v5083 = vunpack.c.l.b16 %v4671
        %v5084 = vunpack.c.h.b16 %v4671
        %v5085 = vunpack.c.l.b16 %v4672
        %v5086 = vunpack.c.h.b16 %v4672
        %v5087 = vunpack.c.l.b16 %v4673
        %v5088 = vunpack.c.h.b16 %v4673
        %v5089 = vunpack.c.l.b16 %v4674
        %v5090 = vunpack.c.h.b16 %v4674
        %v5091 = vunpack.c.l.b16 %v4675
        %v5092 = vunpack.c.h.b16 %v4675
        %v5093 = vunpack.c.l.b16 %v4676
        %v5094 = vunpack.c.h.b16 %v4676
        %v5095 = vunpack.c.l.b16 %v4677
        %v5096 = vunpack.c.h.b16 %v4677
        %v5097 = vunpack.c.l.b16 %v4678
        %v5098 = vunpack.c.h.b16 %v4678
        %v5099 = vunpack.c.l.b16 %v4679
        %v5100 = vunpack.c.h.b16 %v4679
        %v5101 = vunpack.c.l.b16 %v4680
        %v5102 = vunpack.c.h.b16 %v4680
        %v5103 = vunpack.c.l.b16 %v4681
        %v5104 = vunpack.c.h.b16 %v4681
        %v5105 = vunpack.c.l.b16 %v4682
        %v5106 = vunpack.c.h.b16 %v4682
        %v5107 = vunpack.c.l.b16 %v4683
        %v5108 = vunpack.c.h.b16 %v4683
        %v5109 = vunpack.c.l.b16 %v4684
        %v5110 = vunpack.c.h.b16 %v4684
        %v5111 = vunpack.c.l.b16 %v4685
        %v5112 = vunpack.c.h.b16 %v4685
        %v5113 = vunpack.c.l.b16 %v4686
        %v5114 = vunpack.c.h.b16 %v4686
        %v5115 = vunpack.c.l.b16 %v4687
        %v5116 = vunpack.c.h.b16 %v4687
        %v5117 = vunpack.c.l.b16 %v4688
        %v5118 = vunpack.c.h.b16 %v4688
        %v5119 = vunpack.c.l.b16 %v4689
        %v5120 = vunpack.c.h.b16 %v4689
        %v5121 = vunpack.c.l.b16 %v4690
        %v5122 = vunpack.c.h.b16 %v4690
        %v5123 = vunpack.c.l.b16 %v4691
        %v5124 = vunpack.c.h.b16 %v4691
        %v5125 = vunpack.c.l.b16 %v4692
        %v5126 = vunpack.c.h.b16 %v4692
        %v5127 = vunpack.c.l.b16 %v4693
        %v5128 = vunpack.c.h.b16 %v4693
        %v5129 = vunpack.c.l.b16 %v4694
        %v5130 = vunpack.c.h.b16 %v4694
        %v5131 = vunpack.c.l.b16 %v4695
        %v5132 = vunpack.c.h.b16 %v4695
        %v5133 = vunpack.c.l.b16 %v4696
        %v5134 = vunpack.c.h.b16 %v4696
        %v5135 = vunpack.c.l.b16 %v4697
        %v5136 = vunpack.c.h.b16 %v4697
        %v5137 = vunpack.c.l.b16 %v4698
        %v5138 = vunpack.c.h.b16 %v4698
        %v5139 = vunpack.c.l.b16 %v4699
        %v5140 = vunpack.c.h.b16 %v4699
        %v5141 = vunpack.c.l.b16 %v4700
        %v5142 = vunpack.c.h.b16 %v4700
        %v5143 = vunpack.c.l.b16 %v4701
        %v5144 = vunpack.c.h.b16 %v4701
        %v5145 = vunpack.c.l.b16 %v4702
        %v5146 = vunpack.c.h.b16 %v4702
        %v5147 = vunpack.c.l.b16 %v4703
        %v5148 = vunpack.c.h.b16 %v4703
        %v5149 = vunpack.c.l.b16 %v4704
        %v5150 = vunpack.c.h.b16 %v4704
        %v5151 = vunpack.c.l.b16 %v4705
        %v5152 = vunpack.c.h.b16 %v4705
        %v5153 = vunpack.c.l.b16 %v4706
        %v5154 = vunpack.c.h.b16 %v4706
        %v5155 = vunpack.c.l.b16 %v4707
        %v5156 = vunpack.c.h.b16 %v4707
        %v5157 = vunpack.c.l.b16 %v4708
        %v5158 = vunpack.c.h.b16 %v4708
        %v5159 = vunpack.c.l.b16 %v4709
        %v5160 = vunpack.c.h.b16 %v4709
        %v5161 = vunpack.c.l.b16 %v4710
        %v5162 = vunpack.c.h.b16 %v4710
        %v5163 = vunpack.c.l.b16 %v4711
        %v5164 = vunpack.c.h.b16 %v4711
        %v5165 = vunpack.c.l.b16 %v4712
        %v5166 = vunpack.c.h.b16 %v4712
        %v5167 = vunpack.c.l.b16 %v4713
        %v5168 = vunpack.c.h.b16 %v4713
        %v5169 = vunpack.c.l.b16 %v4714
        %v5170 = vunpack.c.h.b16 %v4714
        %v5171 = vunpack.c.l.b16 %v4715
        %v5172 = vunpack.c.h.b16 %v4715
        %v5173 = vunpack.c.l.b16 %v4716
        %v5174 = vunpack.c.h.b16 %v4716
        %v5175 = vunpack.c.l.b16 %v4717
        %v5176 = vunpack.c.h.b16 %v4717
        %v5177 = vunpack.c.l.b16 %v4718
        %v5178 = vunpack.c.h.b16 %v4718
        %v5179 = vunpack.c.l.b16 %v4719
        %v5180 = vunpack.c.h.b16 %v4719
        %v5181 = vunpack.c.l.b16 %v4720
        %v5182 = vunpack.c.h.b16 %v4720
        %v5183 = vunpack.c.l.b16 %v4721
        %v5184 = vunpack.c.h.b16 %v4721
        %v5185 = vunpack.c.l.b16 %v4722
        %v5186 = vunpack.c.h.b16 %v4722
        %v5187 = vunpack.c.l.b16 %v4723
        %v5188 = vunpack.c.h.b16 %v4723
        %v5189 = vunpack.c.l.b16 %v4724
        %v5190 = vunpack.c.h.b16 %v4724
        %v5191 = vunpack.c.l.b16 %v4725
        %v5192 = vunpack.c.h.b16 %v4725
        %v5193 = vunpack.c.l.b16 %v4726
        %v5194 = vunpack.c.h.b16 %v4726
        %v5195 = vunpack.c.l.b16 %v4727
        %v5196 = vunpack.c.h.b16 %v4727
        %v5197 = vunpack.c.l.b16 %v4728
        %v5198 = vunpack.c.h.b16 %v4728
        %v5199 = vunpack.c.l.b16 %v4729
        %v5200 = vunpack.c.h.b16 %v4729
        %v5201 = vunpack.c.l.b16 %v4730
        %v5202 = vunpack.c.h.b16 %v4730
        %v5203 = vunpack.c.l.b16 %v4731
        %v5204 = vunpack.c.h.b16 %v4731
        %v5205 = vunpack.c.l.b16 %v4732
        %v5206 = vunpack.c.h.b16 %v4732
        %v5207 = vunpack.c.l.b16 %v4733
        %v5208 = vunpack.c.h.b16 %v4733
        %v5209 = vunpack.c.l.b16 %v4734
        %v5210 = vunpack.c.h.b16 %v4734
        %v5211 = vunpack.c.l.b16 %v4735
        %v5212 = vunpack.c.h.b16 %v4735
        %v5213 = vunpack.c.l.b16 %v4736
        %v5214 = vunpack.c.h.b16 %v4736
        %v5215 = vunpack.c.l.b16 %v4737
        %v5216 = vunpack.c.h.b16 %v4737
        %v5217 = vunpack.c.l.b16 %v4738
        %v5218 = vunpack.c.h.b16 %v4738
        %v5219 = vpack.c.b16 %v5033, %v5027
        %v5220 = vpack.c.b16 %v5034, %v5028
        %v5221 = vpack.c.b16 %v5035, %v5029
        %v5222 = vpack.c.b16 %v5036, %v5030
        %v5223 = vpack.c.b16 %v5037, %v5031
        %v5224 = vpack.c.b16 %v5038, %v5032
        %v5225 = vpack.c.b16 %v5045, %v5039
        %v5226 = vpack.c.b16 %v5046, %v5040
        %v5227 = vpack.c.b16 %v5047, %v5041
        %v5228 = vpack.c.b16 %v5048, %v5042
        %v5229 = vpack.c.b16 %v5049, %v5043
        %v5230 = vpack.c.b16 %v5050, %v5044
        %v5231 = vpack.c.b16 %v5057, %v5051
        %v5232 = vpack.c.b16 %v5058, %v5052
        %v5233 = vpack.c.b16 %v5059, %v5053
        %v5234 = vpack.c.b16 %v5060, %v5054
        %v5235 = vpack.c.b16 %v5061, %v5055
        %v5236 = vpack.c.b16 %v5062, %v5056
        %v5237 = vpack.c.b16 %v5069, %v5063
        %v5238 = vpack.c.b16 %v5070, %v5064
        %v5239 = vpack.c.b16 %v5071, %v5065
        %v5240 = vpack.c.b16 %v5072, %v5066
        %v5241 = vpack.c.b16 %v5073, %v5067
        %v5242 = vpack.c.b16 %v5074, %v5068
        %v5243 = vpack.c.b16 %v5081, %v5075
        %v5244 = vpack.c.b16 %v5082, %v5076
        %v5245 = vpack.c.b16 %v5083, %v5077
        %v5246 = vpack.c.b16 %v5084, %v5078
        %v5247 = vpack.c.b16 %v5085, %v5079
        %v5248 = vpack.c.b16 %v5086, %v5080
        %v5249 = vpack.c.b16 %v5093, %v5087
        %v5250 = vpack.c.b16 %v5094, %v5088
        %v5251 = vpack.c.b16 %v5095, %v5089
        %v5252 = vpack.c.b16 %v5096, %v5090
        %v5253 = vpack.c.b16 %v5097, %v5091
        %v5254 = vpack.c.b16 %v5098, %v5092
        %v5255 = vpack.c.b16 %v5105, %v5099
        %v5256 = vpack.c.b16 %v5106, %v5100
        %v5257 = vpack.c.b16 %v5107, %v5101
        %v5258 = vpack.c.b16 %v5108, %v5102
        %v5259 = vpack.c.b16 %v5109, %v5103
        %v5260 = vpack.c.b16 %v5110, %v5104
        %v5261 = vpack.c.b16 %v5117, %v5111
        %v5262 = vpack.c.b16 %v5118, %v5112
        %v5263 = vpack.c.b16 %v5119, %v5113
        %v5264 = vpack.c.b16 %v5120, %v5114
        %v5265 = vpack.c.b16 %v5121, %v5115
        %v5266 = vpack.c.b16 %v5122, %v5116
        %v5267 = vpack.c.b16 %v5129, %v5123
        %v5268 = vpack.c.b16 %v5130, %v5124
        %v5269 = vpack.c.b16 %v5131, %v5125
        %v5270 = vpack.c.b16 %v5132, %v5126
        %v5271 = vpack.c.b16 %v5133, %v5127
        %v5272 = vpack.c.b16 %v5134, %v5128
        %v5273 = vpack.c.b16 %v5141, %v5135
        %v5274 = vpack.c.b16 %v5142, %v5136
        %v5275 = vpack.c.b16 %v5143, %v5137
        %v5276 = vpack.c.b16 %v5144, %v5138
        %v5277 = vpack.c.b16 %v5145, %v5139
        %v5278 = vpack.c.b16 %v5146, %v5140
        %v5279 = vpack.c.b16 %v5153, %v5147
        %v5280 = vpack.c.b16 %v5154, %v5148
        %v5281 = vpack.c.b16 %v5155, %v5149
        %v5282 = vpack.c.b16 %v5156, %v5150
        %v5283 = vpack.c.b16 %v5157, %v5151
        %v5284 = vpack.c.b16 %v5158, %v5152
        %v5285 = vpack.c.b16 %v5165, %v5159
        %v5286 = vpack.c.b16 %v5166, %v5160
        %v5287 = vpack.c.b16 %v5167, %v5161
        %v5288 = vpack.c.b16 %v5168, %v5162
        %v5289 = vpack.c.b16 %v5169, %v5163
        %v5290 = vpack.c.b16 %v5170, %v5164
        %v5291 = vpack.c.b16 %v5177, %v5171
        %v5292 = vpack.c.b16 %v5178, %v5172
        %v5293 = vpack.c.b16 %v5179, %v5173
        %v5294 = vpack.c.b16 %v5180, %v5174
        %v5295 = vpack.c.b16 %v5181, %v5175
        %v5296 = vpack.c.b16 %v5182, %v5176
        %v5297 = vpack.c.b16 %v5189, %v5183
        %v5298 = vpack.c.b16 %v5190, %v5184
        %v5299 = vpack.c.b16 %v5191, %v5185
        %v5300 = vpack.c.b16 %v5192, %v5186
        %v5301 = vpack.c.b16 %v5193, %v5187
        %v5302 = vpack.c.b16 %v5194, %v5188
        %v5303 = vpack.c.b16 %v5201, %v5195
        %v5304 = vpack.c.b16 %v5202, %v5196
        %v5305 = vpack.c.b16 %v5203, %v5197
        %v5306 = vpack.c.b16 %v5204, %v5198
        %v5307 = vpack.c.b16 %v5205, %v5199
        %v5308 = vpack.c.b16 %v5206, %v5200
        %v5309 = vpack.c.b16 %v5213, %v5207
        %v5310 = vpack.c.b16 %v5214, %v5208
        %v5311 = vpack.c.b16 %v5215, %v5209
        %v5312 = vpack.c.b16 %v5216, %v5210
        %v5313 = vpack.c.b16 %v5217, %v5211
        %v5314 = vpack.c.b16 %v5218, %v5212
        %v5411 = vsel %vm4915, %v4515, %v5219
        %v5412 = vsel %vm4915, %v4516, %v5220
        %v5413 = vsel %vm4915, %v4517, %v5221
        %v5414 = vsel %vm4915, %v4518, %v5222
        %v5415 = vsel %vm4915, %v4519, %v5223
        %v5416 = vsel %vm4915, %v4520, %v5224
        %v5417 = vsel %vm4916, %v4521, %v5225
        %v5418 = vsel %vm4916, %v4522, %v5226
        %v5419 = vsel %vm4916, %v4523, %v5227
        %v5420 = vsel %vm4916, %v4524, %v5228
        %v5421 = vsel %vm4916, %v4525, %v5229
        %v5422 = vsel %vm4916, %v4526, %v5230
        %v5423 = vsel %vm4917, %v4527, %v5231
        %v5424 = vsel %vm4917, %v4528, %v5232
        %v5425 = vsel %vm4917, %v4529, %v5233
        %v5426 = vsel %vm4917, %v4530, %v5234
        %v5427 = vsel %vm4917, %v4531, %v5235
        %v5428 = vsel %vm4917, %v4532, %v5236
        %v5429 = vsel %vm4918, %v4533, %v5237
        %v5430 = vsel %vm4918, %v4534, %v5238
        %v5431 = vsel %vm4918, %v4535, %v5239
        %v5432 = vsel %vm4918, %v4536, %v5240
        %v5433 = vsel %vm4918, %v4537, %v5241
        %v5434 = vsel %vm4918, %v4538, %v5242
        %v5435 = vsel %vm4919, %v4539, %v5243
        %v5436 = vsel %vm4919, %v4540, %v5244
        %v5437 = vsel %vm4919, %v4541, %v5245
        %v5438 = vsel %vm4919, %v4542, %v5246
        %v5439 = vsel %vm4919, %v4543, %v5247
        %v5440 = vsel %vm4919, %v4544, %v5248
        %v5441 = vsel %vm4920, %v4545, %v5249
        %v5442 = vsel %vm4920, %v4546, %v5250
        %v5443 = vsel %vm4920, %v4547, %v5251
        %v5444 = vsel %vm4920, %v4548, %v5252
        %v5445 = vsel %vm4920, %v4549, %v5253
        %v5446 = vsel %vm4920, %v4550, %v5254
        %v5447 = vsel %vm4921, %v4551, %v5255
        %v5448 = vsel %vm4921, %v4552, %v5256
        %v5449 = vsel %vm4921, %v4553, %v5257
        %v5450 = vsel %vm4921, %v4554, %v5258
        %v5451 = vsel %vm4921, %v4555, %v5259
        %v5452 = vsel %vm4921, %v4556, %v5260
        %v5453 = vsel %vm4922, %v4557, %v5261
        %v5454 = vsel %vm4922, %v4558, %v5262
        %v5455 = vsel %vm4922, %v4559, %v5263
        %v5456 = vsel %vm4922, %v4560, %v5264
        %v5457 = vsel %vm4922, %v4561, %v5265
        %v5458 = vsel %vm4922, %v4562, %v5266
        %v5459 = vsel %vm4923, %v4563, %v5267
        %v5460 = vsel %vm4923, %v4564, %v5268
        %v5461 = vsel %vm4923, %v4565, %v5269
        %v5462 = vsel %vm4923, %v4566, %v5270
        %v5463 = vsel %vm4923, %v4567, %v5271
        %v5464 = vsel %vm4923, %v4568, %v5272
        %v5465 = vsel %vm4924, %v4569, %v5273
        %v5466 = vsel %vm4924, %v4570, %v5274
        %v5467 = vsel %vm4924, %v4571, %v5275
        %v5468 = vsel %vm4924, %v4572, %v5276
        %v5469 = vsel %vm4924, %v4573, %v5277
        %v5470 = vsel %vm4924, %v4574, %v5278
        %v5471 = vsel %vm4925, %v4575, %v5279
        %v5472 = vsel %vm4925, %v4576, %v5280
        %v5473 = vsel %vm4925, %v4577, %v5281
        %v5474 = vsel %vm4925, %v4578, %v5282
        %v5475 = vsel %vm4925, %v4579, %v5283
        %v5476 = vsel %vm4925, %v4580, %v5284
        %v5477 = vsel %vm4926, %v4581, %v5285
        %v5478 = vsel %vm4926, %v4582, %v5286
        %v5479 = vsel %vm4926, %v4583, %v5287
        %v5480 = vsel %vm4926, %v4584, %v5288
        %v5481 = vsel %vm4926, %v4585, %v5289
        %v5482 = vsel %vm4926, %v4586, %v5290
        %v5483 = vsel %vm4927, %v4587, %v5291
        %v5484 = vsel %vm4927, %v4588, %v5292
        %v5485 = vsel %vm4927, %v4589, %v5293
        %v5486 = vsel %vm4927, %v4590, %v5294
        %v5487 = vsel %vm4927, %v4591, %v5295
        %v5488 = vsel %vm4927, %v4592, %v5296
        %v5489 = vsel %vm4928, %v4593, %v5297
        %v5490 = vsel %vm4928, %v4594, %v5298
        %v5491 = vsel %vm4928, %v4595, %v5299
        %v5492 = vsel %vm4928, %v4596, %v5300
        %v5493 = vsel %vm4928, %v4597, %v5301
        %v5494 = vsel %vm4928, %v4598, %v5302
        %v5495 = vsel %vm4929, %v4599, %v5303
        %v5496 = vsel %vm4929, %v4600, %v5304
        %v5497 = vsel %vm4929, %v4601, %v5305
        %v5498 = vsel %vm4929, %v4602, %v5306
        %v5499 = vsel %vm4929, %v4603, %v5307
        %v5500 = vsel %vm4929, %v4604, %v5308
        %v5501 = vsel %vm4930, %v4605, %v5309
        %v5502 = vsel %vm4930, %v4606, %v5310
        %v5503 = vsel %vm4930, %v4607, %v5311
        %v5504 = vsel %vm4930, %v4608, %v5312
        %v5505 = vsel %vm4930, %v4609, %v5313
        %v5506 = vsel %vm4930, %v4610, %v5314
        %v5603 = vunpack.c.l.b16 %v5411
        %v5604 = vunpack.c.l.b16 %v5412
        %v5605 = vunpack.c.l.b16 %v5413
        %v5606 = vunpack.c.l.b16 %v5414
        %v5607 = vunpack.c.l.b16 %v5415
        %v5608 = vunpack.c.l.b16 %v5416
        %v5609 = vunpack.c.h.b16 %v5411
        %v5610 = vunpack.c.h.b16 %v5412
        %v5611 = vunpack.c.h.b16 %v5413
        %v5612 = vunpack.c.h.b16 %v5414
        %v5613 = vunpack.c.h.b16 %v5415
        %v5614 = vunpack.c.h.b16 %v5416
        %v5615 = vunpack.c.l.b16 %v5417
        %v5616 = vunpack.c.l.b16 %v5418
        %v5617 = vunpack.c.l.b16 %v5419
        %v5618 = vunpack.c.l.b16 %v5420
        %v5619 = vunpack.c.l.b16 %v5421
        %v5620 = vunpack.c.l.b16 %v5422
        %v5621 = vunpack.c.h.b16 %v5417
        %v5622 = vunpack.c.h.b16 %v5418
        %v5623 = vunpack.c.h.b16 %v5419
        %v5624 = vunpack.c.h.b16 %v5420
        %v5625 = vunpack.c.h.b16 %v5421
        %v5626 = vunpack.c.h.b16 %v5422
        %v5627 = vunpack.c.l.b16 %v5423
        %v5628 = vunpack.c.l.b16 %v5424
        %v5629 = vunpack.c.l.b16 %v5425
        %v5630 = vunpack.c.l.b16 %v5426
        %v5631 = vunpack.c.l.b16 %v5427
        %v5632 = vunpack.c.l.b16 %v5428
        %v5633 = vunpack.c.h.b16 %v5423
        %v5634 = vunpack.c.h.b16 %v5424
        %v5635 = vunpack.c.h.b16 %v5425
        %v5636 = vunpack.c.h.b16 %v5426
        %v5637 = vunpack.c.h.b16 %v5427
        %v5638 = vunpack.c.h.b16 %v5428
        %v5639 = vunpack.c.l.b16 %v5429
        %v5640 = vunpack.c.l.b16 %v5430
        %v5641 = vunpack.c.l.b16 %v5431
        %v5642 = vunpack.c.l.b16 %v5432
        %v5643 = vunpack.c.l.b16 %v5433
        %v5644 = vunpack.c.l.b16 %v5434
        %v5645 = vunpack.c.h.b16 %v5429
        %v5646 = vunpack.c.h.b16 %v5430
        %v5647 = vunpack.c.h.b16 %v5431
        %v5648 = vunpack.c.h.b16 %v5432
        %v5649 = vunpack.c.h.b16 %v5433
        %v5650 = vunpack.c.h.b16 %v5434
        %v5651 = vunpack.c.l.b16 %v5435
        %v5652 = vunpack.c.l.b16 %v5436
        %v5653 = vunpack.c.l.b16 %v5437
        %v5654 = vunpack.c.l.b16 %v5438
        %v5655 = vunpack.c.l.b16 %v5439
        %v5656 = vunpack.c.l.b16 %v5440
        %v5657 = vunpack.c.h.b16 %v5435
        %v5658 = vunpack.c.h.b16 %v5436
        %v5659 = vunpack.c.h.b16 %v5437
        %v5660 = vunpack.c.h.b16 %v5438
        %v5661 = vunpack.c.h.b16 %v5439
        %v5662 = vunpack.c.h.b16 %v5440
        %v5663 = vunpack.c.l.b16 %v5441
        %v5664 = vunpack.c.l.b16 %v5442
        %v5665 = vunpack.c.l.b16 %v5443
        %v5666 = vunpack.c.l.b16 %v5444
        %v5667 = vunpack.c.l.b16 %v5445
        %v5668 = vunpack.c.l.b16 %v5446
        %v5669 = vunpack.c.h.b16 %v5441
        %v5670 = vunpack.c.h.b16 %v5442
        %v5671 = vunpack.c.h.b16 %v5443
        %v5672 = vunpack.c.h.b16 %v5444
        %v5673 = vunpack.c.h.b16 %v5445
        %v5674 = vunpack.c.h.b16 %v5446
        %v5675 = vunpack.c.l.b16 %v5447
        %v5676 = vunpack.c.l.b16 %v5448
        %v5677 = vunpack.c.l.b16 %v5449
        %v5678 = vunpack.c.l.b16 %v5450
        %v5679 = vunpack.c.l.b16 %v5451
        %v5680 = vunpack.c.l.b16 %v5452
        %v5681 = vunpack.c.h.b16 %v5447
        %v5682 = vunpack.c.h.b16 %v5448
        %v5683 = vunpack.c.h.b16 %v5449
        %v5684 = vunpack.c.h.b16 %v5450
        %v5685 = vunpack.c.h.b16 %v5451
        %v5686 = vunpack.c.h.b16 %v5452
        %v5687 = vunpack.c.l.b16 %v5453
        %v5688 = vunpack.c.l.b16 %v5454
        %v5689 = vunpack.c.l.b16 %v5455
        %v5690 = vunpack.c.l.b16 %v5456
        %v5691 = vunpack.c.l.b16 %v5457
        %v5692 = vunpack.c.l.b16 %v5458
        %v5693 = vunpack.c.h.b16 %v5453
        %v5694 = vunpack.c.h.b16 %v5454
        %v5695 = vunpack.c.h.b16 %v5455
        %v5696 = vunpack.c.h.b16 %v5456
        %v5697 = vunpack.c.h.b16 %v5457
        %v5698 = vunpack.c.h.b16 %v5458
        %v5699 = vunpack.c.l.b16 %v5459
        %v5700 = vunpack.c.l.b16 %v5460
        %v5701 = vunpack.c.l.b16 %v5461
        %v5702 = vunpack.c.l.b16 %v5462
        %v5703 = vunpack.c.l.b16 %v5463
        %v5704 = vunpack.c.l.b16 %v5464
        %v5705 = vunpack.c.h.b16 %v5459
        %v5706 = vunpack.c.h.b16 %v5460
        %v5707 = vunpack.c.h.b16 %v5461
        %v5708 = vunpack.c.h.b16 %v5462
        %v5709 = vunpack.c.h.b16 %v5463
        %v5710 = vunpack.c.h.b16 %v5464
        %v5711 = vunpack.c.l.b16 %v5465
        %v5712 = vunpack.c.l.b16 %v5466
        %v5713 = vunpack.c.l.b16 %v5467
        %v5714 = vunpack.c.l.b16 %v5468
        %v5715 = vunpack.c.l.b16 %v5469
        %v5716 = vunpack.c.l.b16 %v5470
        %v5717 = vunpack.c.h.b16 %v5465
        %v5718 = vunpack.c.h.b16 %v5466
        %v5719 = vunpack.c.h.b16 %v5467
        %v5720 = vunpack.c.h.b16 %v5468
        %v5721 = vunpack.c.h.b16 %v5469
        %v5722 = vunpack.c.h.b16 %v5470
        %v5723 = vunpack.c.l.b16 %v5471
        %v5724 = vunpack.c.l.b16 %v5472
        %v5725 = vunpack.c.l.b16 %v5473
        %v5726 = vunpack.c.l.b16 %v5474
        %v5727 = vunpack.c.l.b16 %v5475
        %v5728 = vunpack.c.l.b16 %v5476
        %v5729 = vunpack.c.h.b16 %v5471
        %v5730 = vunpack.c.h.b16 %v5472
        %v5731 = vunpack.c.h.b16 %v5473
        %v5732 = vunpack.c.h.b16 %v5474
        %v5733 = vunpack.c.h.b16 %v5475
        %v5734 = vunpack.c.h.b16 %v5476
        %v5735 = vunpack.c.l.b16 %v5477
        %v5736 = vunpack.c.l.b16 %v5478
        %v5737 = vunpack.c.l.b16 %v5479
        %v5738 = vunpack.c.l.b16 %v5480
        %v5739 = vunpack.c.l.b16 %v5481
        %v5740 = vunpack.c.l.b16 %v5482
        %v5741 = vunpack.c.h.b16 %v5477
        %v5742 = vunpack.c.h.b16 %v5478
        %v5743 = vunpack.c.h.b16 %v5479
        %v5744 = vunpack.c.h.b16 %v5480
        %v5745 = vunpack.c.h.b16 %v5481
        %v5746 = vunpack.c.h.b16 %v5482
        %v5747 = vunpack.c.l.b16 %v5483
        %v5748 = vunpack.c.l.b16 %v5484
        %v5749 = vunpack.c.l.b16 %v5485
        %v5750 = vunpack.c.l.b16 %v5486
        %v5751 = vunpack.c.l.b16 %v5487
        %v5752 = vunpack.c.l.b16 %v5488
        %v5753 = vunpack.c.h.b16 %v5483
        %v5754 = vunpack.c.h.b16 %v5484
        %v5755 = vunpack.c.h.b16 %v5485
        %v5756 = vunpack.c.h.b16 %v5486
        %v5757 = vunpack.c.h.b16 %v5487
        %v5758 = vunpack.c.h.b16 %v5488
        %v5759 = vunpack.c.l.b16 %v5489
        %v5760 = vunpack.c.l.b16 %v5490
        %v5761 = vunpack.c.l.b16 %v5491
        %v5762 = vunpack.c.l.b16 %v5492
        %v5763 = vunpack.c.l.b16 %v5493
        %v5764 = vunpack.c.l.b16 %v5494
        %v5765 = vunpack.c.h.b16 %v5489
        %v5766 = vunpack.c.h.b16 %v5490
        %v5767 = vunpack.c.h.b16 %v5491
        %v5768 = vunpack.c.h.b16 %v5492
        %v5769 = vunpack.c.h.b16 %v5493
        %v5770 = vunpack.c.h.b16 %v5494
        %v5771 = vunpack.c.l.b16 %v5495
        %v5772 = vunpack.c.l.b16 %v5496
        %v5773 = vunpack.c.l.b16 %v5497
        %v5774 = vunpack.c.l.b16 %v5498
        %v5775 = vunpack.c.l.b16 %v5499
        %v5776 = vunpack.c.l.b16 %v5500
        %v5777 = vunpack.c.h.b16 %v5495
        %v5778 = vunpack.c.h.b16 %v5496
        %v5779 = vunpack.c.h.b16 %v5497
        %v5780 = vunpack.c.h.b16 %v5498
        %v5781 = vunpack.c.h.b16 %v5499
        %v5782 = vunpack.c.h.b16 %v5500
        %v5783 = vunpack.c.l.b16 %v5501
        %v5784 = vunpack.c.l.b16 %v5502
        %v5785 = vunpack.c.l.b16 %v5503
        %v5786 = vunpack.c.l.b16 %v5504
        %v5787 = vunpack.c.l.b16 %v5505
        %v5788 = vunpack.c.l.b16 %v5506
        %v5789 = vunpack.c.h.b16 %v5501
        %v5790 = vunpack.c.h.b16 %v5502
        %v5791 = vunpack.c.h.b16 %v5503
        %v5792 = vunpack.c.h.b16 %v5504
        %v5793 = vunpack.c.h.b16 %v5505
        %v5794 = vunpack.c.h.b16 %v5506
        %v5795 = vpack.c.b16 %v5604, %v5603
        %v5796 = vpack.c.b16 %v5606, %v5605
        %v5797 = vpack.c.b16 %v5608, %v5607
        %v5798 = vpack.c.b16 %v5610, %v5609
        %v5799 = vpack.c.b16 %v5612, %v5611
        %v5800 = vpack.c.b16 %v5614, %v5613
        %v5801 = vpack.c.b16 %v5616, %v5615
        %v5802 = vpack.c.b16 %v5618, %v5617
        %v5803 = vpack.c.b16 %v5620, %v5619
        %v5804 = vpack.c.b16 %v5622, %v5621
        %v5805 = vpack.c.b16 %v5624, %v5623
        %v5806 = vpack.c.b16 %v5626, %v5625
        %v5807 = vpack.c.b16 %v5628, %v5627
        %v5808 = vpack.c.b16 %v5630, %v5629
        %v5809 = vpack.c.b16 %v5632, %v5631
        %v5810 = vpack.c.b16 %v5634, %v5633
        %v5811 = vpack.c.b16 %v5636, %v5635
        %v5812 = vpack.c.b16 %v5638, %v5637
        %v5813 = vpack.c.b16 %v5640, %v5639
        %v5814 = vpack.c.b16 %v5642, %v5641
        %v5815 = vpack.c.b16 %v5644, %v5643
        %v5816 = vpack.c.b16 %v5646, %v5645
        %v5817 = vpack.c.b16 %v5648, %v5647
        %v5818 = vpack.c.b16 %v5650, %v5649
        %v5819 = vpack.c.b16 %v5652, %v5651
        %v5820 = vpack.c.b16 %v5654, %v5653
        %v5821 = vpack.c.b16 %v5656, %v5655
        %v5822 = vpack.c.b16 %v5658, %v5657
        %v5823 = vpack.c.b16 %v5660, %v5659
        %v5824 = vpack.c.b16 %v5662, %v5661
        %v5825 = vpack.c.b16 %v5664, %v5663
        %v5826 = vpack.c.b16 %v5666, %v5665
        %v5827 = vpack.c.b16 %v5668, %v5667
        %v5828 = vpack.c.b16 %v5670, %v5669
        %v5829 = vpack.c.b16 %v5672, %v5671
        %v5830 = vpack.c.b16 %v5674, %v5673
        %v5831 = vpack.c.b16 %v5676, %v5675
        %v5832 = vpack.c.b16 %v5678, %v5677
        %v5833 = vpack.c.b16 %v5680, %v5679
        %v5834 = vpack.c.b16 %v5682, %v5681
        %v5835 = vpack.c.b16 %v5684, %v5683
        %v5836 = vpack.c.b16 %v5686, %v5685
        %v5837 = vpack.c.b16 %v5688, %v5687
        %v5838 = vpack.c.b16 %v5690, %v5689
        %v5839 = vpack.c.b16 %v5692, %v5691
        %v5840 = vpack.c.b16 %v5694, %v5693
        %v5841 = vpack.c.b16 %v5696, %v5695
        %v5842 = vpack.c.b16 %v5698, %v5697
        %v5843 = vpack.c.b16 %v5700, %v5699
        %v5844 = vpack.c.b16 %v5702, %v5701
        %v5845 = vpack.c.b16 %v5704, %v5703
        %v5846 = vpack.c.b16 %v5706, %v5705
        %v5847 = vpack.c.b16 %v5708, %v5707
        %v5848 = vpack.c.b16 %v5710, %v5709
        %v5849 = vpack.c.b16 %v5712, %v5711
        %v5850 = vpack.c.b16 %v5714, %v5713
        %v5851 = vpack.c.b16 %v5716, %v5715
        %v5852 = vpack.c.b16 %v5718, %v5717
        %v5853 = vpack.c.b16 %v5720, %v5719
        %v5854 = vpack.c.b16 %v5722, %v5721
        %v5855 = vpack.c.b16 %v5724, %v5723
        %v5856 = vpack.c.b16 %v5726, %v5725
        %v5857 = vpack.c.b16 %v5728, %v5727
        %v5858 = vpack.c.b16 %v5730, %v5729
        %v5859 = vpack.c.b16 %v5732, %v5731
        %v5860 = vpack.c.b16 %v5734, %v5733
        %v5861 = vpack.c.b16 %v5736, %v5735
        %v5862 = vpack.c.b16 %v5738, %v5737
        %v5863 = vpack.c.b16 %v5740, %v5739
        %v5864 = vpack.c.b16 %v5742, %v5741
        %v5865 = vpack.c.b16 %v5744, %v5743
        %v5866 = vpack.c.b16 %v5746, %v5745
        %v5867 = vpack.c.b16 %v5748, %v5747
        %v5868 = vpack.c.b16 %v5750, %v5749
        %v5869 = vpack.c.b16 %v5752, %v5751
        %v5870 = vpack.c.b16 %v5754, %v5753
        %v5871 = vpack.c.b16 %v5756, %v5755
        %v5872 = vpack.c.b16 %v5758, %v5757
        %v5873 = vpack.c.b16 %v5760, %v5759
        %v5874 = vpack.c.b16 %v5762, %v5761
        %v5875 = vpack.c.b16 %v5764, %v5763
        %v5876 = vpack.c.b16 %v5766, %v5765
        %v5877 = vpack.c.b16 %v5768, %v5767
        %v5878 = vpack.c.b16 %v5770, %v5769
        %v5879 = vpack.c.b16 %v5772, %v5771
        %v5880 = vpack.c.b16 %v5774, %v5773
        %v5881 = vpack.c.b16 %v5776, %v5775
        %v5882 = vpack.c.b16 %v5778, %v5777
        %v5883 = vpack.c.b16 %v5780, %v5779
        %v5884 = vpack.c.b16 %v5782, %v5781
        %v5885 = vpack.c.b16 %v5784, %v5783
        %v5886 = vpack.c.b16 %v5786, %v5785
        %v5887 = vpack.c.b16 %v5788, %v5787
        %v5888 = vpack.c.b16 %v5790, %v5789
        %v5889 = vpack.c.b16 %v5792, %v5791
        %v5890 = vpack.c.b16 %v5794, %v5793
        %5987 = vst [vmem:[%s327] sm:$0xff] %v5795
        %5988 = vst [vmem:[%s327 + $0x8] sm:$0xff] %v5796
        %5989 = vst [vmem:[%s327 + $0x10] sm:$0xff] %v5797
        %5990 = vst [vmem:[%s327 + $0x18] sm:$0xff] %v5798
        %5991 = vst [vmem:[%s327 + $0x20] sm:$0xff] %v5799
        %5992 = vst [vmem:[%s327 + $0x28] sm:$0xff] %v5800
        %5993 = vst [vmem:[%s327 + $0x30] sm:$0xff] %v5801
        %5994 = vst [vmem:[%s327 + $0x38] sm:$0xff] %v5802
        %5995 = vst [vmem:[%s327 + $0x40] sm:$0xff] %v5803
        %5996 = vst [vmem:[%s327 + $0x48] sm:$0xff] %v5804
        %5997 = vst [vmem:[%s327 + $0x50] sm:$0xff] %v5805
        %5998 = vst [vmem:[%s327 + $0x58] sm:$0xff] %v5806
        %5999 = vst [vmem:[%s327 + $0x60] sm:$0xff] %v5807
        %6000 = vst [vmem:[%s327 + $0x68] sm:$0xff] %v5808
        %6001 = vst [vmem:[%s327 + $0x70] sm:$0xff] %v5809
        %6002 = vst [vmem:[%s327 + $0x78] sm:$0xff] %v5810
        %6003 = vst [vmem:[%s327 + $0x80] sm:$0xff] %v5811
        %6004 = vst [vmem:[%s327 + $0x88] sm:$0xff] %v5812
        %6005 = vst [vmem:[%s327 + $0x90] sm:$0xff] %v5813
        %6006 = vst [vmem:[%s327 + $0x98] sm:$0xff] %v5814
        %6007 = vst [vmem:[%s327 + $0xa0] sm:$0xff] %v5815
        %6008 = vst [vmem:[%s327 + $0xa8] sm:$0xff] %v5816
        %6009 = vst [vmem:[%s327 + $0xb0] sm:$0xff] %v5817
        %6010 = vst [vmem:[%s327 + $0xb8] sm:$0xff] %v5818
        %6011 = vst [vmem:[%s327 + $0xc0] sm:$0xff] %v5819
        %6012 = vst [vmem:[%s327 + $0xc8] sm:$0xff] %v5820
        %6013 = vst [vmem:[%s327 + $0xd0] sm:$0xff] %v5821
        %6014 = vst [vmem:[%s327 + $0xd8] sm:$0xff] %v5822
        %6015 = vst [vmem:[%s327 + $0xe0] sm:$0xff] %v5823
        %6016 = vst [vmem:[%s327 + $0xe8] sm:$0xff] %v5824
        %6017 = vst [vmem:[%s327 + $0xf0] sm:$0xff] %v5825
        %6018 = vst [vmem:[%s327 + $0xf8] sm:$0xff] %v5826
        %6019 = vst [vmem:[%s327 + $0x100] sm:$0xff] %v5827
        %6020 = vst [vmem:[%s327 + $0x108] sm:$0xff] %v5828
        %6021 = vst [vmem:[%s327 + $0x110] sm:$0xff] %v5829
        %6022 = vst [vmem:[%s327 + $0x118] sm:$0xff] %v5830
        %6023 = vst [vmem:[%s327 + $0x120] sm:$0xff] %v5831
        %6024 = vst [vmem:[%s327 + $0x128] sm:$0xff] %v5832
        %6025 = vst [vmem:[%s327 + $0x130] sm:$0xff] %v5833
        %6026 = vst [vmem:[%s327 + $0x138] sm:$0xff] %v5834
        %6027 = vst [vmem:[%s327 + $0x140] sm:$0xff] %v5835
        %6028 = vst [vmem:[%s327 + $0x148] sm:$0xff] %v5836
        %6029 = vst [vmem:[%s327 + $0x150] sm:$0xff] %v5837
        %6030 = vst [vmem:[%s327 + $0x158] sm:$0xff] %v5838
        %6031 = vst [vmem:[%s327 + $0x160] sm:$0xff] %v5839
        %6032 = vst [vmem:[%s327 + $0x168] sm:$0xff] %v5840
        %6033 = vst [vmem:[%s327 + $0x170] sm:$0xff] %v5841
        %6034 = vst [vmem:[%s327 + $0x178] sm:$0xff] %v5842
        %6035 = vst [vmem:[%s327 + $0x180] sm:$0xff] %v5843
        %6036 = vst [vmem:[%s327 + $0x188] sm:$0xff] %v5844
        %6037 = vst [vmem:[%s327 + $0x190] sm:$0xff] %v5845
        %6038 = vst [vmem:[%s327 + $0x198] sm:$0xff] %v5846
        %6039 = vst [vmem:[%s327 + $0x1a0] sm:$0xff] %v5847
        %6040 = vst [vmem:[%s327 + $0x1a8] sm:$0xff] %v5848
        %6041 = vst [vmem:[%s327 + $0x1b0] sm:$0xff] %v5849
        %6042 = vst [vmem:[%s327 + $0x1b8] sm:$0xff] %v5850
        %6043 = vst [vmem:[%s327 + $0x1c0] sm:$0xff] %v5851
        %6044 = vst [vmem:[%s327 + $0x1c8] sm:$0xff] %v5852
        %6045 = vst [vmem:[%s327 + $0x1d0] sm:$0xff] %v5853
        %6046 = vst [vmem:[%s327 + $0x1d8] sm:$0xff] %v5854
        %6047 = vst [vmem:[%s327 + $0x1e0] sm:$0xff] %v5855
        %6048 = vst [vmem:[%s327 + $0x1e8] sm:$0xff] %v5856
        %6049 = vst [vmem:[%s327 + $0x1f0] sm:$0xff] %v5857
        %6050 = vst [vmem:[%s327 + $0x1f8] sm:$0xff] %v5858
        %6051 = vst [vmem:[%s327 + $0x200] sm:$0xff] %v5859
        %6052 = vst [vmem:[%s327 + $0x208] sm:$0xff] %v5860
        %6053 = vst [vmem:[%s327 + $0x210] sm:$0xff] %v5861
        %6054 = vst [vmem:[%s327 + $0x218] sm:$0xff] %v5862
        %6055 = vst [vmem:[%s327 + $0x220] sm:$0xff] %v5863
        %6056 = vst [vmem:[%s327 + $0x228] sm:$0xff] %v5864
        %6057 = vst [vmem:[%s327 + $0x230] sm:$0xff] %v5865
        %6058 = vst [vmem:[%s327 + $0x238] sm:$0xff] %v5866
        %6059 = vst [vmem:[%s327 + $0x240] sm:$0xff] %v5867
        %6060 = vst [vmem:[%s327 + $0x248] sm:$0xff] %v5868
        %6061 = vst [vmem:[%s327 + $0x250] sm:$0xff] %v5869
        %6062 = vst [vmem:[%s327 + $0x258] sm:$0xff] %v5870
        %6063 = vst [vmem:[%s327 + $0x260] sm:$0xff] %v5871
        %6064 = vst [vmem:[%s327 + $0x268] sm:$0xff] %v5872
        %6065 = vst [vmem:[%s327 + $0x270] sm:$0xff] %v5873
        %6066 = vst [vmem:[%s327 + $0x278] sm:$0xff] %v5874
        %6067 = vst [vmem:[%s327 + $0x280] sm:$0xff] %v5875
        %6068 = vst [vmem:[%s327 + $0x288] sm:$0xff] %v5876
        %6069 = vst [vmem:[%s327 + $0x290] sm:$0xff] %v5877
        %6070 = vst [vmem:[%s327 + $0x298] sm:$0xff] %v5878
        %6071 = vst [vmem:[%s327 + $0x2a0] sm:$0xff] %v5879
        %6072 = vst [vmem:[%s327 + $0x2a8] sm:$0xff] %v5880
        %6073 = vst [vmem:[%s327 + $0x2b0] sm:$0xff] %v5881
        %6074 = vst [vmem:[%s327 + $0x2b8] sm:$0xff] %v5882
        %6075 = vst [vmem:[%s327 + $0x2c0] sm:$0xff] %v5883
        %6076 = vst [vmem:[%s327 + $0x2c8] sm:$0xff] %v5884
        %6077 = vst [vmem:[%s327 + $0x2d0] sm:$0xff] %v5885
        %6078 = vst [vmem:[%s327 + $0x2d8] sm:$0xff] %v5886
        %6079 = vst [vmem:[%s327 + $0x2e0] sm:$0xff] %v5887
        %6080 = vst [vmem:[%s327 + $0x2e8] sm:$0xff] %v5888
        %6081 = vst [vmem:[%s327 + $0x2f0] sm:$0xff] %v5889
        %6082 = vst [vmem:[%s327 + $0x2f8] sm:$0xff] %v5890
        %s6083 = smul.u32 %s2040, 256
        %v6084 = vstv %s6083
        %v6085 = vadd.s32 %v2605, %v6084
        %v6086 = vadd.s32 %v2621, %v6084
        %v6087 = vadd.s32 %v2637, %v6084
        %v6088 = vadd.s32 %v2653, %v6084
        %v6089 = vadd.s32 %v2669, %v6084
        %v6090 = vadd.s32 %v2685, %v6084
        %v6091 = vadd.s32 %v2701, %v6084
        %v6092 = vadd.s32 %v2717, %v6084
        %v6093 = vadd.s32 %v2733, %v6084
        %v6094 = vadd.s32 %v2749, %v6084
        %v6095 = vadd.s32 %v2765, %v6084
        %v6096 = vadd.s32 %v2781, %v6084
        %v6097 = vadd.s32 %v2797, %v6084
        %v6098 = vadd.s32 %v2813, %v6084
        %v6099 = vadd.s32 %v2829, %v6084
        %v6100 = vadd.s32 %v2845, %v6084
        %v6101 = vadd.s32 %v2861, %v6084
        %v6102 = vadd.s32 %v2877, %v6084
        %v6103 = vadd.s32 %v2893, %v6084
        %v6104 = vadd.s32 %v2909, %v6084
        %v6105 = vadd.s32 %v2925, %v6084
        %v6106 = vadd.s32 %v2941, %v6084
        %v6107 = vadd.s32 %v2957, %v6084
        %v6108 = vadd.s32 %v2973, %v6084
        %v6109 = vadd.s32 %v2989, %v6084
        %v6110 = vadd.s32 %v3005, %v6084
        %v6111 = vadd.s32 %v3021, %v6084
        %v6112 = vadd.s32 %v3037, %v6084
        %v6113 = vadd.s32 %v3053, %v6084
        %v6114 = vadd.s32 %v3069, %v6084
        %v6115 = vadd.s32 %v3085, %v6084
        %v6116 = vadd.s32 %v3101, %v6084
        %v6117 = vsel %vm4611, %v6085, %v2077
        %v6118 = vsel %vm4612, %v6086, %v2078
        %v6119 = vsel %vm4613, %v6087, %v2079
        %v6120 = vsel %vm4614, %v6088, %v2080
        %v6121 = vsel %vm4615, %v6089, %v2081
        %v6122 = vsel %vm4616, %v6090, %v2082
        %v6123 = vsel %vm4617, %v6091, %v2083
        %v6124 = vsel %vm4618, %v6092, %v2084
        %v6125 = vsel %vm4619, %v6093, %v2085
        %v6126 = vsel %vm4620, %v6094, %v2086
        %v6127 = vsel %vm4621, %v6095, %v2087
        %v6128 = vsel %vm4622, %v6096, %v2088
        %v6129 = vsel %vm4623, %v6097, %v2089
        %v6130 = vsel %vm4624, %v6098, %v2090
        %v6131 = vsel %vm4625, %v6099, %v2091
        %v6132 = vsel %vm4626, %v6100, %v2092
        %v6133 = vsel %vm4627, %v6101, %v2093
        %v6134 = vsel %vm4628, %v6102, %v2094
        %v6135 = vsel %vm4629, %v6103, %v2095
        %v6136 = vsel %vm4630, %v6104, %v2096
        %v6137 = vsel %vm4631, %v6105, %v2097
        %v6138 = vsel %vm4632, %v6106, %v2098
        %v6139 = vsel %vm4633, %v6107, %v2099
        %v6140 = vsel %vm4634, %v6108, %v2100
        %v6141 = vsel %vm4635, %v6109, %v2101
        %v6142 = vsel %vm4636, %v6110, %v2102
        %v6143 = vsel %vm4637, %v6111, %v2103
        %v6144 = vsel %vm4638, %v6112, %v2104
        %v6145 = vsel %vm4639, %v6113, %v2105
        %v6146 = vsel %vm4640, %v6114, %v2106
        %v6147 = vsel %vm4641, %v6115, %v2107
        %v6148 = vsel %vm4642, %v6116, %v2108
        %v6149 = vmax.f32 %v2045, %v2368
        %v6150 = vmax.f32 %v2046, %v2371
        %v6151 = vmax.f32 %v2047, %v2374
        %v6152 = vmax.f32 %v2048, %v2377
        %v6153 = vmax.f32 %v2049, %v2380
        %v6154 = vmax.f32 %v2050, %v2383
        %v6155 = vmax.f32 %v2051, %v2386
        %v6156 = vmax.f32 %v2052, %v2389
        %v6157 = vmax.f32 %v2053, %v2392
        %v6158 = vmax.f32 %v2054, %v2395
        %v6159 = vmax.f32 %v2055, %v2398
        %v6160 = vmax.f32 %v2056, %v2401
        %v6161 = vmax.f32 %v2057, %v2404
        %v6162 = vmax.f32 %v2058, %v2407
        %v6163 = vmax.f32 %v2059, %v2410
        %v6164 = vmax.f32 %v2060, %v2413
        %v6165 = vmax.f32 %v2061, %v2416
        %v6166 = vmax.f32 %v2062, %v2419
        %v6167 = vmax.f32 %v2063, %v2422
        %v6168 = vmax.f32 %v2064, %v2425
        %v6169 = vmax.f32 %v2065, %v2428
        %v6170 = vmax.f32 %v2066, %v2431
        %v6171 = vmax.f32 %v2067, %v2434
        %v6172 = vmax.f32 %v2068, %v2437
        %v6173 = vmax.f32 %v2069, %v2440
        %v6174 = vmax.f32 %v2070, %v2443
        %v6175 = vmax.f32 %v2071, %v2446
        %v6176 = vmax.f32 %v2072, %v2449
        %v6177 = vmax.f32 %v2073, %v2452
        %v6178 = vmax.f32 %v2074, %v2455
        %v6179 = vmax.f32 %v2075, %v2458
        %v6180 = vmax.f32 %v2076, %v2461
      $region49: #{vq_model_forward.1} parent=43 // loop_footer
        %s2044 = sadd.s32 1, %s2040
      $region50: #{vq_model_forward.1} parent=43 // loop_footer_branch
        %2039 = sbr.rel target = $region46
      $region51: #{vq_model_forward.1} parent=43 // loop_exit
        _
      %vm6181 = vcmask 7168
      %6182 = vst.msk [vmem:[%s333] sm:$0xff] %vm6181, %v2077
      %6183 = vst.msk [vmem:[%s333 + $0x8] sm:$0xff] %vm6181, %v2078
      %6184 = vst.msk [vmem:[%s333 + $0x10] sm:$0xff] %vm6181, %v2079
      %6185 = vst.msk [vmem:[%s333 + $0x18] sm:$0xff] %vm6181, %v2080
      %6186 = vst.msk [vmem:[%s333 + $0x20] sm:$0xff] %vm6181, %v2081
      %6187 = vst.msk [vmem:[%s333 + $0x28] sm:$0xff] %vm6181, %v2082
      %6188 = vst.msk [vmem:[%s333 + $0x30] sm:$0xff] %vm6181, %v2083
      %6189 = vst.msk [vmem:[%s333 + $0x38] sm:$0xff] %vm6181, %v2084
      %6190 = vst.msk [vmem:[%s333 + $0x40] sm:$0xff] %vm6181, %v2085
      %6191 = vst.msk [vmem:[%s333 + $0x48] sm:$0xff] %vm6181, %v2086
      %6192 = vst.msk [vmem:[%s333 + $0x50] sm:$0xff] %vm6181, %v2087
      %6193 = vst.msk [vmem:[%s333 + $0x58] sm:$0xff] %vm6181, %v2088
      %6194 = vst.msk [vmem:[%s333 + $0x60] sm:$0xff] %vm6181, %v2089
      %6195 = vst.msk [vmem:[%s333 + $0x68] sm:$0xff] %vm6181, %v2090
      %6196 = vst.msk [vmem:[%s333 + $0x70] sm:$0xff] %vm6181, %v2091
      %6197 = vst.msk [vmem:[%s333 + $0x78] sm:$0xff] %vm6181, %v2092
      %6198 = vst.msk [vmem:[%s333 + $0x80] sm:$0xff] %vm6181, %v2093
      %6199 = vst.msk [vmem:[%s333 + $0x88] sm:$0xff] %vm6181, %v2094
      %6200 = vst.msk [vmem:[%s333 + $0x90] sm:$0xff] %vm6181, %v2095
      %6201 = vst.msk [vmem:[%s333 + $0x98] sm:$0xff] %vm6181, %v2096
      %6202 = vst.msk [vmem:[%s333 + $0xa0] sm:$0xff] %vm6181, %v2097
      %6203 = vst.msk [vmem:[%s333 + $0xa8] sm:$0xff] %vm6181, %v2098
      %6204 = vst.msk [vmem:[%s333 + $0xb0] sm:$0xff] %vm6181, %v2099
      %6205 = vst.msk [vmem:[%s333 + $0xb8] sm:$0xff] %vm6181, %v2100
      %6206 = vst.msk [vmem:[%s333 + $0xc0] sm:$0xff] %vm6181, %v2101
      %6207 = vst.msk [vmem:[%s333 + $0xc8] sm:$0xff] %vm6181, %v2102
      %6208 = vst.msk [vmem:[%s333 + $0xd0] sm:$0xff] %vm6181, %v2103
      %6209 = vst.msk [vmem:[%s333 + $0xd8] sm:$0xff] %vm6181, %v2104
      %6210 = vst.msk [vmem:[%s333 + $0xe0] sm:$0xff] %vm6181, %v2105
      %6211 = vst.msk [vmem:[%s333 + $0xe8] sm:$0xff] %vm6181, %v2106
      %6212 = vst.msk [vmem:[%s333 + $0xf0] sm:$0xff] %vm6181, %v2107
      %6213 = vst.msk [vmem:[%s333 + $0xf8] sm:$0xff] %vm6181, %v2108
      %v6214 = vmul.f32 %v2045, 2.0
      %v6215 = vmul.f32 %v2046, 2.0
      %v6216 = vmul.f32 %v2047, 2.0
      %v6217 = vmul.f32 %v2048, 2.0
      %v6218 = vmul.f32 %v2049, 2.0
      %v6219 = vmul.f32 %v2050, 2.0
      %v6220 = vmul.f32 %v2051, 2.0
      %v6221 = vmul.f32 %v2052, 2.0
      %v6222 = vmul.f32 %v2053, 2.0
      %v6223 = vmul.f32 %v2054, 2.0
      %v6224 = vmul.f32 %v2055, 2.0
      %v6225 = vmul.f32 %v2056, 2.0
      %v6226 = vmul.f32 %v2057, 2.0
      %v6227 = vmul.f32 %v2058, 2.0
      %v6228 = vmul.f32 %v2059, 2.0
      %v6229 = vmul.f32 %v2060, 2.0
      %v6230 = vmul.f32 %v2061, 2.0
      %v6231 = vmul.f32 %v2062, 2.0
      %v6232 = vmul.f32 %v2063, 2.0
      %v6233 = vmul.f32 %v2064, 2.0
      %v6234 = vmul.f32 %v2065, 2.0
      %v6235 = vmul.f32 %v2066, 2.0
      %v6236 = vmul.f32 %v2067, 2.0
      %v6237 = vmul.f32 %v2068, 2.0
      %v6238 = vmul.f32 %v2069, 2.0
      %v6239 = vmul.f32 %v2070, 2.0
      %v6240 = vmul.f32 %v2071, 2.0
      %v6241 = vmul.f32 %v2072, 2.0
      %v6242 = vmul.f32 %v2073, 2.0
      %v6243 = vmul.f32 %v2074, 2.0
      %v6244 = vmul.f32 %v2075, 2.0
      %v6245 = vmul.f32 %v2076, 2.0
      %v6246 = vsub.f32 2.0, %v6214
      %v6247 = vsub.f32 2.0, %v6215
      %v6248 = vsub.f32 2.0, %v6216
      %v6249 = vsub.f32 2.0, %v6217
      %v6250 = vsub.f32 2.0, %v6218
      %v6251 = vsub.f32 2.0, %v6219
      %v6252 = vsub.f32 2.0, %v6220
      %v6253 = vsub.f32 2.0, %v6221
      %v6254 = vsub.f32 2.0, %v6222
      %v6255 = vsub.f32 2.0, %v6223
      %v6256 = vsub.f32 2.0, %v6224
      %v6257 = vsub.f32 2.0, %v6225
      %v6258 = vsub.f32 2.0, %v6226
      %v6259 = vsub.f32 2.0, %v6227
      %v6260 = vsub.f32 2.0, %v6228
      %v6261 = vsub.f32 2.0, %v6229
      %v6262 = vsub.f32 2.0, %v6230
      %v6263 = vsub.f32 2.0, %v6231
      %v6264 = vsub.f32 2.0, %v6232
      %v6265 = vsub.f32 2.0, %v6233
      %v6266 = vsub.f32 2.0, %v6234
      %v6267 = vsub.f32 2.0, %v6235
      %v6268 = vsub.f32 2.0, %v6236
      %v6269 = vsub.f32 2.0, %v6237
      %v6270 = vsub.f32 2.0, %v6238
      %v6271 = vsub.f32 2.0, %v6239
      %v6272 = vsub.f32 2.0, %v6240
      %v6273 = vsub.f32 2.0, %v6241
      %v6274 = vsub.f32 2.0, %v6242
      %v6275 = vsub.f32 2.0, %v6243
      %v6276 = vsub.f32 2.0, %v6244
      %v6277 = vsub.f32 2.0, %v6245
      %v6278 = vmax.f32 %v6246, 0.0
      %v6279 = vmax.f32 %v6247, 0.0
      %v6280 = vmax.f32 %v6248, 0.0
      %v6281 = vmax.f32 %v6249, 0.0
      %v6282 = vmax.f32 %v6250, 0.0
      %v6283 = vmax.f32 %v6251, 0.0
      %v6284 = vmax.f32 %v6252, 0.0
      %v6285 = vmax.f32 %v6253, 0.0
      %v6286 = vmax.f32 %v6254, 0.0
      %v6287 = vmax.f32 %v6255, 0.0
      %v6288 = vmax.f32 %v6256, 0.0
      %v6289 = vmax.f32 %v6257, 0.0
      %v6290 = vmax.f32 %v6258, 0.0
      %v6291 = vmax.f32 %v6259, 0.0
      %v6292 = vmax.f32 %v6260, 0.0
      %v6293 = vmax.f32 %v6261, 0.0
      %v6294 = vmax.f32 %v6262, 0.0
      %v6295 = vmax.f32 %v6263, 0.0
      %v6296 = vmax.f32 %v6264, 0.0
      %v6297 = vmax.f32 %v6265, 0.0
      %v6298 = vmax.f32 %v6266, 0.0
      %v6299 = vmax.f32 %v6267, 0.0
      %v6300 = vmax.f32 %v6268, 0.0
      %v6301 = vmax.f32 %v6269, 0.0
      %v6302 = vmax.f32 %v6270, 0.0
      %v6303 = vmax.f32 %v6271, 0.0
      %v6304 = vmax.f32 %v6272, 0.0
      %v6305 = vmax.f32 %v6273, 0.0
      %v6306 = vmax.f32 %v6274, 0.0
      %v6307 = vmax.f32 %v6275, 0.0
      %v6308 = vmax.f32 %v6276, 0.0
      %v6309 = vmax.f32 %v6277, 0.0
      %6310 = vst.msk [vmem:[%s339] sm:$0xff] %vm6181, %v6278
      %6311 = vst.msk [vmem:[%s339 + $0x8] sm:$0xff] %vm6181, %v6279
      %6312 = vst.msk [vmem:[%s339 + $0x10] sm:$0xff] %vm6181, %v6280
      %6313 = vst.msk [vmem:[%s339 + $0x18] sm:$0xff] %vm6181, %v6281
      %6314 = vst.msk [vmem:[%s339 + $0x20] sm:$0xff] %vm6181, %v6282
      %6315 = vst.msk [vmem:[%s339 + $0x28] sm:$0xff] %vm6181, %v6283
      %6316 = vst.msk [vmem:[%s339 + $0x30] sm:$0xff] %vm6181, %v6284
      %6317 = vst.msk [vmem:[%s339 + $0x38] sm:$0xff] %vm6181, %v6285
      %6318 = vst.msk [vmem:[%s339 + $0x40] sm:$0xff] %vm6181, %v6286
      %6319 = vst.msk [vmem:[%s339 + $0x48] sm:$0xff] %vm6181, %v6287
      %6320 = vst.msk [vmem:[%s339 + $0x50] sm:$0xff] %vm6181, %v6288
      %6321 = vst.msk [vmem:[%s339 + $0x58] sm:$0xff] %vm6181, %v6289
      %6322 = vst.msk [vmem:[%s339 + $0x60] sm:$0xff] %vm6181, %v6290
      %6323 = vst.msk [vmem:[%s339 + $0x68] sm:$0xff] %vm6181, %v6291
      %6324 = vst.msk [vmem:[%s339 + $0x70] sm:$0xff] %vm6181, %v6292
      %6325 = vst.msk [vmem:[%s339 + $0x78] sm:$0xff] %vm6181, %v6293
      %6326 = vst.msk [vmem:[%s339 + $0x80] sm:$0xff] %vm6181, %v6294
      %6327 = vst.msk [vmem:[%s339 + $0x88] sm:$0xff] %vm6181, %v6295
      %6328 = vst.msk [vmem:[%s339 + $0x90] sm:$0xff] %vm6181, %v6296
      %6329 = vst.msk [vmem:[%s339 + $0x98] sm:$0xff] %vm6181, %v6297
      %6330 = vst.msk [vmem:[%s339 + $0xa0] sm:$0xff] %vm6181, %v6298
      %6331 = vst.msk [vmem:[%s339 + $0xa8] sm:$0xff] %vm6181, %v6299
      %6332 = vst.msk [vmem:[%s339 + $0xb0] sm:$0xff] %vm6181, %v6300
      %6333 = vst.msk [vmem:[%s339 + $0xb8] sm:$0xff] %vm6181, %v6301
      %6334 = vst.msk [vmem:[%s339 + $0xc0] sm:$0xff] %vm6181, %v6302
      %6335 = vst.msk [vmem:[%s339 + $0xc8] sm:$0xff] %vm6181, %v6303
      %6336 = vst.msk [vmem:[%s339 + $0xd0] sm:$0xff] %vm6181, %v6304
      %6337 = vst.msk [vmem:[%s339 + $0xd8] sm:$0xff] %vm6181, %v6305
      %6338 = vst.msk [vmem:[%s339 + $0xe0] sm:$0xff] %vm6181, %v6306
      %6339 = vst.msk [vmem:[%s339 + $0xe8] sm:$0xff] %vm6181, %v6307
      %6340 = vst.msk [vmem:[%s339 + $0xf0] sm:$0xff] %vm6181, %v6308
      %6341 = vst.msk [vmem:[%s339 + $0xf8] sm:$0xff] %vm6181, %v6309
      %s6342 = smul.u32 32, %s20
      %p6343 = scmp.lt.s32.totalorder %s6342, 63
      %s6344 = scalar_select %p6343, %s6342, 63
      %s6345 = smul.addr %s6344, 6
      %s6346 = smul.addr %s6345, 4
      %s6347 = scalar_lea.vmem %s6, %s6346
      %s6348 = smul.u32 32, %s20
      %p6349 = scmp.lt.s32.totalorder %s6348, 63
      %s6350 = scalar_select %p6349, %s6348, 63
      %s6351 = smul.addr %s6350, 8
      %s6352 = scalar_lea.vmem %s7, %s6351
      %s6353 = smul.u32 32, %s20
      %p6354 = scmp.lt.s32.totalorder %s6353, 63
      %s6355 = scalar_select %p6354, %s6353, 63
      %s6356 = smul.addr %s6355, 8
      %s6357 = scalar_lea.vmem %s8, %s6356
      // Predicated region
      $region52: #{vq_model_forward.1} parent=43 // pred_check
        %p6358 = pneg %p169
      $region53: #{vq_model_forward.1} parent=43 // pred_check_branch
        %6360 = sbr.rel (%p6358) target = $region55
      $region54: #{vq_model_forward.1} parent=43 // pred_region
        %s6361 = smul.u32 32, %s20
      $region55: #{vq_model_forward.1} parent=43 // pred_fallthru
        _
      // Predicated region
      $region56: #{vq_model_forward.1} parent=43 // pred_check
        %p6362 = pneg %p195
      $region57: #{vq_model_forward.1} parent=43 // pred_check_branch
        %6364 = sbr.rel (%p6362) target = $region59
      $region58: #{vq_model_forward.1} parent=43 // pred_region
        %s6365 = smul.u32 32, %s20
      $region59: #{vq_model_forward.1} parent=43 // pred_fallthru
        _
      // Predicated region
      $region60: #{vq_model_forward.1} parent=43 // pred_check
        %p6366 = pneg %p221
      $region61: #{vq_model_forward.1} parent=43 // pred_check_branch
        %6368 = sbr.rel (%p6366) target = $region63
      $region62: #{vq_model_forward.1} parent=43 // pred_region
        %s6369 = smul.u32 32, %s20
      $region63: #{vq_model_forward.1} parent=43 // pred_fallthru
        _
    $region44: #{vq_model_forward.1} parent=5 // pred_fallthru
      _
    %p6370 = scmp.le.s32.totalorder 2, %s15
    // Predicated region
    $region64: #{vq_model_forward.1} parent=5 // pred_check
      %p6371 = pneg %p6370
    $region65: #{vq_model_forward.1} parent=5 // pred_check_branch
      %6373 = sbr.rel (%p6371) target = $region67
    $region66: #{vq_model_forward.1} parent=5 // pred_region
      %s6374 = ssub.s32 %s15, 2
      // Predicated region
      $region68: #{vq_model_forward.1} parent=66 // pred_check
        %p6375 = pneg %p175
      $region69: #{vq_model_forward.1} parent=66 // pred_check_branch
        %6377 = sbr.rel (%p6375) target = $region71
      $region70: #{vq_model_forward.1} parent=66 // pred_region
        %s6378 = smul.u32 32, %s21
        %p6379 = scmp.lt.s32.totalorder %s6378, 63
        %s6380 = scalar_select %p6379, %s6378, 63
        %s6381 = smul.addr %s6380, 6
        %s6382 = smul.addr %s6381, 4
        %s6383 = scalar_lea.vmem %s6, %s6382
      $region71: #{vq_model_forward.1} parent=66 // pred_fallthru
        _
      // Predicated region
      $region72: #{vq_model_forward.1} parent=66 // pred_check
        %p6384 = pneg %p201
      $region73: #{vq_model_forward.1} parent=66 // pred_check_branch
        %6386 = sbr.rel (%p6384) target = $region75
      $region74: #{vq_model_forward.1} parent=66 // pred_region
        %s6387 = smul.u32 32, %s21
        %p6388 = scmp.lt.s32.totalorder %s6387, 63
        %s6389 = scalar_select %p6388, %s6387, 63
        %s6390 = smul.addr %s6389, 8
        %s6391 = scalar_lea.vmem %s7, %s6390
      $region75: #{vq_model_forward.1} parent=66 // pred_fallthru
        _
      // Predicated region
      $region76: #{vq_model_forward.1} parent=66 // pred_check
        %p6392 = pneg %p227
      $region77: #{vq_model_forward.1} parent=66 // pred_check_branch
        %6394 = sbr.rel (%p6392) target = $region79
      $region78: #{vq_model_forward.1} parent=66 // pred_region
        %s6395 = smul.u32 32, %s21
        %p6396 = scmp.lt.s32.totalorder %s6395, 63
        %s6397 = scalar_select %p6396, %s6395, 63
        %s6398 = smul.addr %s6397, 8
        %s6399 = scalar_lea.vmem %s8, %s6398
      $region79: #{vq_model_forward.1} parent=66 // pred_fallthru
        _
    $region67: #{vq_model_forward.1} parent=5 // pred_fallthru
      _
  $region6: #{vq_model_forward.1} parent=0 // loop_footer
    %s19 = sadd.s32 1, %s15
  $region7: #{vq_model_forward.1} parent=0 // loop_footer_branch
    %14 = sbr.rel target = $region3
  $region8: #{vq_model_forward.1} parent=0 // loop_exit
    _

</llo_original>
